<compile_context>
chip_gen: v7x
topology: tpu7x:2x2x1
jax: 0.10.0
libtpu: 0.0.40
codegen_flags: <defaults>
</compile_context>

<pallas_src>
import jax
import jax.numpy as jnp
from jax.experimental import pallas as pl
from jax.experimental.pallas import tpu as pltpu

FEATURE_DIM = 32   # stands in for args.feature_dim


def _cdiv(a, b):
    return (a + b - 1) // b


def _round_up(x, m):
    return _cdiv(x, m) * m


def _pick_tm(m):
    # Largest M-tile <= 512 rows while keeping >= 2 grid steps (v7x megacore),
    # rounded to the 8-row sublane granule.
    return min(512, _round_up(max(_cdiv(m, 2), 8), 8))


# ----------------------------------------------------------------------------
# Pallas kernel: fused  relu(A @ W + bias)   (BN scale pre-folded into W)
# ----------------------------------------------------------------------------
def _matmul_bias_relu_kernel(a_ref, w_ref, b_ref, o_ref):
    acc = jnp.dot(a_ref[...], w_ref[...], preferred_element_type=jnp.float32)
    o_ref[...] = jnp.maximum(acc + b_ref[...], 0.0).astype(o_ref.dtype)


def matmul_bias_relu(a, w, bias):
    """relu(a @ w + bias); a:(M,K) f32, w:(K,N) f32, bias:(N,). Returns (M,N) f32."""
    M, K = a.shape
    K2, N = w.shape
    assert K == K2
    tm = _pick_tm(M)
    Mp = _round_up(M, tm)
    if Mp != M:
        a = jnp.pad(a, ((0, Mp - M), (0, 0)))     # pad only M; K/N stay exact
    a = a.astype(jnp.bfloat16)                    # MXU-native operands,
    w = w.astype(jnp.bfloat16)                    # f32 accumulation below
    b = bias.reshape(1, N).astype(jnp.float32)

    out = pl.pallas_call(
        _matmul_bias_relu_kernel,
        out_shape=jax.ShapeDtypeStruct((Mp, N), jnp.float32),
        grid_spec=pltpu.PrefetchScalarGridSpec(
            num_scalar_prefetch=0,
            grid=(Mp // tm,),
            in_specs=[
                pl.BlockSpec((tm, K), lambda i: (i, 0)),   # A tiled along M
                pl.BlockSpec((K, N), lambda i: (0, 0)),    # W resident (full)
                pl.BlockSpec((1, N), lambda i: (0, 0)),    # bias (full)
            ],
            out_specs=pl.BlockSpec((tm, N), lambda i: (i, 0)),
        ),
        compiler_params=pltpu.CompilerParams(
            dimension_semantics=("parallel",),
        ),
    )(a, w, b)
    return out[:M]


# ----------------------------------------------------------------------------
# im2col helpers (channels-last glue; the GEMM hot path is the kernel above)
# TODO(synk): the im2col gather stays in XLA; an in-kernel pl.ds gather would
# need per-source shape handling across the batched multi-input GEMM.
# ----------------------------------------------------------------------------
def _im2col_3d(x):  # x: (B, D, H, W, C) -> (B*D*H*W, C*27), taps ordered kd,kh,kw
    B, D, H, W, C = x.shape
    xp = jnp.pad(x, ((0, 0), (1, 1), (1, 1), (1, 1), (0, 0)))
    taps = [xp[:, kd:kd + D, kh:kh + H, kw:kw + W, :]
            for kd in range(3) for kh in range(3) for kw in range(3)]
    p = jnp.stack(taps, axis=-1)                  # (B, D, H, W, C, 27)
    return p.reshape(B * D * H * W, C * 27)       # columns: (Cin, kd, kh, kw)


def _im2col_2d(x):  # x: (B, H, W, C) -> (B*H*W, C*9)
    B, H, W, C = x.shape
    xp = jnp.pad(x, ((0, 0), (1, 1), (1, 1), (0, 0)))
    taps = [xp[:, kh:kh + H, kw:kw + W, :]
            for kh in range(3) for kw in range(3)]
    p = jnp.stack(taps, axis=-1)                  # (B, H, W, C, 9)
    return p.reshape(B * H * W, C * 9)            # columns: (Cin, kh, kw)


def conv3x3x3_bn_relu_multi(xs, weight, scale, bias):
    """One 3x3x3 conv+BN+ReLU applied to several channels-last inputs with a
    SINGLE Pallas GEMM (im2col rows of all inputs concatenated along M)."""
    Cout = weight.shape[0]
    # weight: (Cout, Cin, 3,3,3) -> (Cin*27, Cout); fold BN scale per out-chan.
    wmat = weight.reshape(Cout, -1).T * scale[None, :]
    patches = [_im2col_3d(x) for x in xs]
    a = patches[0] if len(patches) == 1 else jnp.concatenate(patches, axis=0)
    out = matmul_bias_relu(a, wmat, bias)
    outs, off = [], 0
    for x, patch in zip(xs, patches):
        B, D, H, W, _ = x.shape
        m = patch.shape[0]
        outs.append(out[off:off + m].reshape(B, D, H, W, Cout))
        off += m
    return outs


def conv3x3_bn_relu(x, weight, scale, bias):
    # x: (B, H, W, Cin); weight: (Cout, Cin, 3, 3)
    B, H, W, _ = x.shape
    Cout = weight.shape[0]
    wmat = weight.reshape(Cout, -1).T * scale[None, :]
    out = matmul_bias_relu(_im2col_2d(x), wmat, bias)
    return out.reshape(B, H, W, Cout)


# ----------------------------------------------------------------------------
# Pooling / interpolation glue (channels-last, cheap data movement)
# ----------------------------------------------------------------------------
def avgpool_hw2(x):  # F.avg_pool3d(kernel=(1,2,2), stride=(1,2,2)), floor mode
    B, D, H, W, C = x.shape
    h2, w2 = H // 2, W // 2
    x = x[:, :, : h2 * 2, : w2 * 2, :]
    x = x.reshape(B, D, h2, 2, w2, 2, C)
    return x.mean(axis=(3, 5))


def avgpool_d3(x):  # F.avg_pool3d(kernel=(3,1,1), stride=(3,1,1)), floor mode
    B, D, H, W, C = x.shape
    d3 = D // 3
    x = x[:, : d3 * 3]
    return x.reshape(B, d3, 3, H, W, C).mean(axis=2)


def _linear_resize_axis(x, out_size, axis):
    # PyTorch linear interpolation, align_corners=False
    in_size = x.shape[axis]
    scale = in_size / out_size
    i = jnp.arange(out_size, dtype=jnp.float32)
    src = (i + 0.5) * scale - 0.5
    src = jnp.clip(src, 0.0, float(in_size - 1))
    lo = jnp.floor(src).astype(jnp.int32)
    hi = jnp.minimum(lo + 1, in_size - 1)
    frac = src - lo.astype(jnp.float32)
    x_lo = jnp.take(x, lo, axis=axis)
    x_hi = jnp.take(x, hi, axis=axis)
    bshape = [1] * x.ndim
    bshape[axis] = out_size
    frac = frac.reshape(bshape)
    return x_lo * (1.0 - frac) + x_hi * frac


def trilinear_resize(x, size):
    # x: (B, D, H, W, C) -> size (D_out, H_out, W_out).  Depth size is
    # unchanged in this model (align_corners=False, scale=1 -> identity).
    d_out, h_out, w_out = size
    assert d_out == x.shape[1]
    x = _linear_resize_axis(x, h_out, axis=2)
    x = _linear_resize_axis(x, w_out, axis=3)
    return x


# ----------------------------------------------------------------------------
# Parameters (deterministic synthetic init, BN in eval mode) and forward pass
# ----------------------------------------------------------------------------
def _fold_bn(gamma, beta, mean, var, eps=1e-5):
    scale = gamma / jnp.sqrt(var + eps)
    return scale, beta - mean * scale


def init_params(key, in_channel, c1, c2, conv4_in, feature_dim):
    ks = jax.random.split(key, 16)

    def conv_w(k, shape):
        fan_in = 1
        for s in shape[1:]:
            fan_in *= s
        return jax.random.normal(k, shape, jnp.float32) / jnp.sqrt(fan_in)

    def bn(k, c):
        k1, k2, k3, k4 = jax.random.split(k, 4)
        gamma = 1.0 + 0.1 * jax.random.normal(k1, (c,), jnp.float32)
        beta = 0.1 * jax.random.normal(k2, (c,), jnp.float32)
        mean = 0.1 * jax.random.normal(k3, (c,), jnp.float32)
        var = jax.random.uniform(k4, (c,), jnp.float32, 0.5, 1.5)
        return _fold_bn(gamma, beta, mean, var)

    p = {}
    p["w1"] = conv_w(ks[0], (c1, in_channel, 3, 3, 3))
    p["bn1"] = bn(ks[1], c1)
    p["w2"] = conv_w(ks[2], (c1, c1, 3, 3, 3))
    p["bn2"] = bn(ks[3], c1)
    p["w3"] = conv_w(ks[4], (c2, c1, 3, 3, 3))
    p["bn3"] = bn(ks[5], c2)
    p["w4"] = conv_w(ks[6], (feature_dim, conv4_in, 3, 3))
    p["bn4"] = bn(ks[7], feature_dim)
    return p


def octave_3d_cnn_forward(x, p):
    # x: (B, D, H, W)  hyperspectral cube (matches PyTorch pre-unsqueeze input)
    x = x[..., None]                                     # (B, D, H, W, 1) NDHWC

    # --- conv1 on {x, avgpool(x)}: one Pallas GEMM ---------------------------
    X_L_TMP = avgpool_hw2(x)
    X_H, X_L = conv3x3x3_bn_relu_multi([x, X_L_TMP], p["w1"], *p["bn1"])

    X_H = avgpool_d3(X_H)
    X_L = avgpool_d3(X_L)

    # --- conv2 on four tensors: one Pallas GEMM ------------------------------
    X_H_L_TMP = avgpool_hw2(X_H)
    X_L_H_TMP = trilinear_resize(
        X_L, (X_L.shape[1], 2 * X_L.shape[2] + 1, 2 * X_L.shape[3] + 1))
    X_H_H, X_H_L, X_L_H, X__L_L = conv3x3x3_bn_relu_multi(
        [X_H, X_H_L_TMP, X_L_H_TMP, X_L], p["w2"], *p["bn2"])

    Y_H = X_H_H + X_L_H
    Y_L = X_H_L + X__L_L

    # --- conv3 on two tensors: one Pallas GEMM -------------------------------
    Y_H_L_TMP = avgpool_hw2(Y_H)
    Y_H_L, Y_L_L = conv3x3x3_bn_relu_multi(
        [Y_H_L_TMP, Y_L], p["w3"], *p["bn3"])
    Y = Y_H_L + Y_L_L                                    # (B, D3, h2, w2, C2)

    # PyTorch: Y.reshape(B, C2*D3, h2, w2) merges (C2, D3) with C2-major order.
    B, D3, h2, w2, C2 = Y.shape
    Z_TMP = Y.transpose(0, 2, 3, 4, 1).reshape(B, h2, w2, C2 * D3)
    Z = conv3x3_bn_relu(Z_TMP, p["w4"], *p["bn4"])       # (B, h2, w2, F)

    # adaptive_avg_pool2d(Z, (1,1)) -> flatten
    return Z.mean(axis=(1, 2))                           # (B, F)


if __name__ == "__main__":
    # Small shapes consistent with the module: D=12 bands, 9x9 patch,
    # out_channel1=8, out_channel2=132 so that C2*(D//3) == 528 (conv4's
    # hard-coded input channel count in the original module).
    B, D, H, W = 2, 12, 9, 9
    IN_CH, C1, C2 = 1, 8, 132
    CONV4_IN = C2 * (D // 3)      # == 528
    assert CONV4_IN == 528

    key = jax.random.PRNGKey(0)
    kp, kx = jax.random.split(key)
    params = init_params(kp, IN_CH, C1, C2, CONV4_IN, FEATURE_DIM)
    x = jax.random.normal(kx, (B, D, H, W), jnp.float32)

    fwd = jax.jit(octave_3d_cnn_forward)
    out = fwd(x, params)
    jax.block_until_ready(out)
    assert out.shape == (B, FEATURE_DIM)
    assert bool(jnp.all(jnp.isfinite(out)))
    print("KERNEL_OK")
</pallas_src>

<mosaic_0001>
module attributes {stable_mosaic.version = 11 : i64} {
  func.func @_matmul_bias_relu_kernel(%arg0: i32, %arg1: memref<512x27xbf16, #tpu.memory_space<vmem>>, %arg2: memref<27x8xbf16, #tpu.memory_space<vmem>>, %arg3: memref<1x8xf32, #tpu.memory_space<vmem>>, %arg4: memref<512x8xf32, #tpu.memory_space<vmem>>) attributes {dimension_semantics = [#tpu.dimension_semantics<parallel>], iteration_bounds = array<i64: 5>, scalar_prefetch = 0 : i64, scratch_operands = 0 : i64, tpu.core_type = #tpu.core_type<tc>, window_params = [{transform_indices = @transform_0, window_bounds = array<i64: 512, 27>}, {pipeline_mode = #tpu.pipeline_mode<synchronous>, transform_indices = @transform_1, window_bounds = array<i64: 27, 8>}, {pipeline_mode = #tpu.pipeline_mode<synchronous>, transform_indices = @transform_2, window_bounds = array<i64: 1, 8>}, {transform_indices = @transform_3, window_bounds = array<i64: 512, 8>}]} {
    %c0 = arith.constant 0 : index
    %c0_0 = arith.constant 0 : index
    %0 = vector.load %arg1[%c0, %c0_0] : memref<512x27xbf16, #tpu.memory_space<vmem>>, vector<512x27xbf16>
    %c0_1 = arith.constant 0 : index
    %c0_2 = arith.constant 0 : index
    %1 = vector.load %arg2[%c0_1, %c0_2] : memref<27x8xbf16, #tpu.memory_space<vmem>>, vector<27x8xbf16>
    %cst = arith.constant dense<0.000000e+00> : vector<512x8xf32>
    %2 = tpu.matmul %0, %1, %cst {dimension_numbers = #tpu.dot_dimension_numbers<[1], [0], [0], [1], [0, 0, 1, 1], [], []>} : vector<512x27xbf16>, vector<27x8xbf16>, vector<512x8xf32> -> vector<512x8xf32>
    %c0_3 = arith.constant 0 : index
    %c0_4 = arith.constant 0 : index
    %3 = vector.load %arg3[%c0_3, %c0_4] : memref<1x8xf32, #tpu.memory_space<vmem>>, vector<1x8xf32>
    %4 = vector.broadcast %3 : vector<1x8xf32> to vector<512x8xf32>
    %5 = arith.addf %2, %4 : vector<512x8xf32>
    %cst_5 = arith.constant 0.000000e+00 : f32
    %6 = vector.broadcast %cst_5 : f32 to vector<512x8xf32>
    %7 = arith.maximumf %5, %6 : vector<512x8xf32>
    %c0_6 = arith.constant 0 : index
    %c0_7 = arith.constant 0 : index
    %8 = vector.load %arg4[%c0_6, %c0_7] : memref<512x8xf32, #tpu.memory_space<vmem>>, vector<512x8xf32>
    tpu.vector_store %arg4[%c0_6, %c0_7], %7 {strides = array<i32>} : memref<512x8xf32, #tpu.memory_space<vmem>>, vector<512x8xf32>,
    return
  }
  func.func @transform_0(%arg0: i32) -> (i32, i32) {
    %c0_i32 = arith.constant 0 : i32
    %c0_i32_0 = arith.constant 0 : i32
    return %arg0, %c0_i32 : i32, i32
  }
  func.func @transform_1(%arg0: i32) -> (i32, i32) {
    %c0_i32 = arith.constant 0 : i32
    %c0_i32_0 = arith.constant 0 : i32
    %c0_i32_1 = arith.constant 0 : i32
    return %c0_i32, %c0_i32_0 : i32, i32
  }
  func.func @transform_2(%arg0: i32) -> (i32, i32) {
    %c0_i32 = arith.constant 0 : i32
    %c0_i32_0 = arith.constant 0 : i32
    %c0_i32_1 = arith.constant 0 : i32
    return %c0_i32, %c0_i32_0 : i32, i32
  }
  func.func @transform_3(%arg0: i32) -> (i32, i32) {
    %c0_i32 = arith.constant 0 : i32
    %c0_i32_0 = arith.constant 0 : i32
    return %arg0, %c0_i32 : i32, i32
  }
}

module attributes {stable_mosaic.version = 11 : i64} {
  func.func @_matmul_bias_relu_kernel(%arg0: i32, %arg1: memref<512x216xbf16, #tpu.memory_space<vmem>>, %arg2: memref<216x8xbf16, #tpu.memory_space<vmem>>, %arg3: memref<1x8xf32, #tpu.memory_space<vmem>>, %arg4: memref<512x8xf32, #tpu.memory_space<vmem>>) attributes {dimension_semantics = [#tpu.dimension_semantics<parallel>], iteration_bounds = array<i64: 4>, scalar_prefetch = 0 : i64, scratch_operands = 0 : i64, tpu.core_type = #tpu.core_type<tc>, window_params = [{transform_indices = @transform_0, window_bounds = array<i64: 512, 216>}, {pipeline_mode = #tpu.pipeline_mode<synchronous>, transform_indices = @transform_1, window_bounds = array<i64: 216, 8>}, {pipeline_mode = #tpu.pipeline_mode<synchronous>, transform_indices = @transform_2, window_bounds = array<i64: 1, 8>}, {transform_indices = @transform_3, window_bounds = array<i64: 512, 8>}]} {
    %c0 = arith.constant 0 : index
    %c0_0 = arith.constant 0 : index
    %0 = vector.load %arg1[%c0, %c0_0] : memref<512x216xbf16, #tpu.memory_space<vmem>>, vector<512x216xbf16>
    %c0_1 = arith.constant 0 : index
    %c0_2 = arith.constant 0 : index
    %1 = vector.load %arg2[%c0_1, %c0_2] : memref<216x8xbf16, #tpu.memory_space<vmem>>, vector<216x8xbf16>
    %cst = arith.constant dense<0.000000e+00> : vector<512x8xf32>
    %2 = tpu.matmul %0, %1, %cst {dimension_numbers = #tpu.dot_dimension_numbers<[1], [0], [0], [1], [0, 0, 1, 1], [], []>} : vector<512x216xbf16>, vector<216x8xbf16>, vector<512x8xf32> -> vector<512x8xf32>
    %c0_3 = arith.constant 0 : index
    %c0_4 = arith.constant 0 : index
    %3 = vector.load %arg3[%c0_3, %c0_4] : memref<1x8xf32, #tpu.memory_space<vmem>>, vector<1x8xf32>
    %4 = vector.broadcast %3 : vector<1x8xf32> to vector<512x8xf32>
    %5 = arith.addf %2, %4 : vector<512x8xf32>
    %cst_5 = arith.constant 0.000000e+00 : f32
    %6 = vector.broadcast %cst_5 : f32 to vector<512x8xf32>
    %7 = arith.maximumf %5, %6 : vector<512x8xf32>
    %c0_6 = arith.constant 0 : index
    %c0_7 = arith.constant 0 : index
    %8 = vector.load %arg4[%c0_6, %c0_7] : memref<512x8xf32, #tpu.memory_space<vmem>>, vector<512x8xf32>
    tpu.vector_store %arg4[%c0_6, %c0_7], %7 {strides = array<i32>} : memref<512x8xf32, #tpu.memory_space<vmem>>, vector<512x8xf32>,
    return
  }
  func.func @transform_0(%arg0: i32) -> (i32, i32) {
    %c0_i32 = arith.constant 0 : i32
    %c0_i32_0 = arith.constant 0 : i32
    return %arg0, %c0_i32 : i32, i32
  }
  func.func @transform_1(%arg0: i32) -> (i32, i32) {
    %c0_i32 = arith.constant 0 : i32
    %c0_i32_0 = arith.constant 0 : i32
    %c0_i32_1 = arith.constant 0 : i32
    return %c0_i32, %c0_i32_0 : i32, i32
  }
  func.func @transform_2(%arg0: i32) -> (i32, i32) {
    %c0_i32 = arith.constant 0 : i32
    %c0_i32_0 = arith.constant 0 : i32
    %c0_i32_1 = arith.constant 0 : i32
    return %c0_i32, %c0_i32_0 : i32, i32
  }
  func.func @transform_3(%arg0: i32) -> (i32, i32) {
    %c0_i32 = arith.constant 0 : i32
    %c0_i32_0 = arith.constant 0 : i32
    return %arg0, %c0_i32 : i32, i32
  }
}

module attributes {stable_mosaic.version = 11 : i64} {
  func.func @_matmul_bias_relu_kernel(%arg0: i32, %arg1: memref<128x216xbf16, #tpu.memory_space<vmem>>, %arg2: memref<216x132xbf16, #tpu.memory_space<vmem>>, %arg3: memref<1x132xf32, #tpu.memory_space<vmem>>, %arg4: memref<128x132xf32, #tpu.memory_space<vmem>>) attributes {dimension_semantics = [#tpu.dimension_semantics<parallel>], iteration_bounds = array<i64: 2>, scalar_prefetch = 0 : i64, scratch_operands = 0 : i64, tpu.core_type = #tpu.core_type<tc>, window_params = [{transform_indices = @transform_0, window_bounds = array<i64: 128, 216>}, {pipeline_mode = #tpu.pipeline_mode<synchronous>, transform_indices = @transform_1, window_bounds = array<i64: 216, 132>}, {pipeline_mode = #tpu.pipeline_mode<synchronous>, transform_indices = @transform_2, window_bounds = array<i64: 1, 132>}, {transform_indices = @transform_3, window_bounds = array<i64: 128, 132>}]} {
    %c0 = arith.constant 0 : index
    %c0_0 = arith.constant 0 : index
    %0 = vector.load %arg1[%c0, %c0_0] : memref<128x216xbf16, #tpu.memory_space<vmem>>, vector<128x216xbf16>
    %c0_1 = arith.constant 0 : index
    %c0_2 = arith.constant 0 : index
    %1 = vector.load %arg2[%c0_1, %c0_2] : memref<216x132xbf16, #tpu.memory_space<vmem>>, vector<216x132xbf16>
    %cst = arith.constant dense<0.000000e+00> : vector<128x132xf32>
    %2 = tpu.matmul %0, %1, %cst {dimension_numbers = #tpu.dot_dimension_numbers<[1], [0], [0], [1], [0, 0, 1, 1], [], []>} : vector<128x216xbf16>, vector<216x132xbf16>, vector<128x132xf32> -> vector<128x132xf32>
    %c0_3 = arith.constant 0 : index
    %c0_4 = arith.constant 0 : index
    %3 = vector.load %arg3[%c0_3, %c0_4] : memref<1x132xf32, #tpu.memory_space<vmem>>, vector<1x132xf32>
    %4 = vector.broadcast %3 : vector<1x132xf32> to vector<128x132xf32>
    %5 = arith.addf %2, %4 : vector<128x132xf32>
    %cst_5 = arith.constant 0.000000e+00 : f32
    %6 = vector.broadcast %cst_5 : f32 to vector<128x132xf32>
    %7 = arith.maximumf %5, %6 : vector<128x132xf32>
    %c0_6 = arith.constant 0 : index
    %c0_7 = arith.constant 0 : index
    %8 = vector.load %arg4[%c0_6, %c0_7] : memref<128x132xf32, #tpu.memory_space<vmem>>, vector<128x132xf32>
    tpu.vector_store %arg4[%c0_6, %c0_7], %7 {strides = array<i32>} : memref<128x132xf32, #tpu.memory_space<vmem>>, vector<128x132xf32>,
    return
  }
  func.func @transform_0(%arg0: i32) -> (i32, i32) {
    %c0_i32 = arith.constant 0 : i32
    %c0_i32_0 = arith.constant 0 : i32
    return %arg0, %c0_i32 : i32, i32
  }
  func.func @transform_1(%arg0: i32) -> (i32, i32) {
    %c0_i32 = arith.constant 0 : i32
    %c0_i32_0 = arith.constant 0 : i32
    %c0_i32_1 = arith.constant 0 : i32
    return %c0_i32, %c0_i32_0 : i32, i32
  }
  func.func @transform_2(%arg0: i32) -> (i32, i32) {
    %c0_i32 = arith.constant 0 : i32
    %c0_i32_0 = arith.constant 0 : i32
    %c0_i32_1 = arith.constant 0 : i32
    return %c0_i32, %c0_i32_0 : i32, i32
  }
  func.func @transform_3(%arg0: i32) -> (i32, i32) {
    %c0_i32 = arith.constant 0 : i32
    %c0_i32_0 = arith.constant 0 : i32
    return %arg0, %c0_i32 : i32, i32
  }
}

module attributes {stable_mosaic.version = 11 : i64} {
  func.func @_matmul_bias_relu_kernel(%arg0: i32, %arg1: memref<16x4752xbf16, #tpu.memory_space<vmem>>, %arg2: memref<4752x32xbf16, #tpu.memory_space<vmem>>, %arg3: memref<1x32xf32, #tpu.memory_space<vmem>>, %arg4: memref<16x32xf32, #tpu.memory_space<vmem>>) attributes {dimension_semantics = [#tpu.dimension_semantics<parallel>], iteration_bounds = array<i64: 2>, scalar_prefetch = 0 : i64, scratch_operands = 0 : i64, tpu.core_type = #tpu.core_type<tc>, window_params = [{transform_indices = @transform_0, window_bounds = array<i64: 16, 4752>}, {pipeline_mode = #tpu.pipeline_mode<synchronous>, transform_indices = @transform_1, window_bounds = array<i64: 4752, 32>}, {pipeline_mode = #tpu.pipeline_mode<synchronous>, transform_indices = @transform_2, window_bounds = array<i64: 1, 32>}, {transform_indices = @transform_3, window_bounds = array<i64: 16, 32>}]} {
    %c0 = arith.constant 0 : index
    %c0_0 = arith.constant 0 : index
    %0 = vector.load %arg1[%c0, %c0_0] : memref<16x4752xbf16, #tpu.memory_space<vmem>>, vector<16x4752xbf16>
    %c0_1 = arith.constant 0 : index
    %c0_2 = arith.constant 0 : index
    %1 = vector.load %arg2[%c0_1, %c0_2] : memref<4752x32xbf16, #tpu.memory_space<vmem>>, vector<4752x32xbf16>
    %cst = arith.constant dense<0.000000e+00> : vector<16x32xf32>
    %2 = tpu.matmul %0, %1, %cst {dimension_numbers = #tpu.dot_dimension_numbers<[1], [0], [0], [1], [0, 0, 1, 1], [], []>} : vector<16x4752xbf16>, vector<4752x32xbf16>, vector<16x32xf32> -> vector<16x32xf32>
    %c0_3 = arith.constant 0 : index
    %c0_4 = arith.constant 0 : index
    %3 = vector.load %arg3[%c0_3, %c0_4] : memref<1x32xf32, #tpu.memory_space<vmem>>, vector<1x32xf32>
    %4 = vector.broadcast %3 : vector<1x32xf32> to vector<16x32xf32>
    %5 = arith.addf %2, %4 : vector<16x32xf32>
    %cst_5 = arith.constant 0.000000e+00 : f32
    %6 = vector.broadcast %cst_5 : f32 to vector<16x32xf32>
    %7 = arith.maximumf %5, %6 : vector<16x32xf32>
    %c0_6 = arith.constant 0 : index
    %c0_7 = arith.constant 0 : index
    %8 = vector.load %arg4[%c0_6, %c0_7] : memref<16x32xf32, #tpu.memory_space<vmem>>, vector<16x32xf32>
    tpu.vector_store %arg4[%c0_6, %c0_7], %7 {strides = array<i32>} : memref<16x32xf32, #tpu.memory_space<vmem>>, vector<16x32xf32>,
    return
  }
  func.func @transform_0(%arg0: i32) -> (i32, i32) {
    %c0_i32 = arith.constant 0 : i32
    %c0_i32_0 = arith.constant 0 : i32
    return %arg0, %c0_i32 : i32, i32
  }
  func.func @transform_1(%arg0: i32) -> (i32, i32) {
    %c0_i32 = arith.constant 0 : i32
    %c0_i32_0 = arith.constant 0 : i32
    %c0_i32_1 = arith.constant 0 : i32
    return %c0_i32, %c0_i32_0 : i32, i32
  }
  func.func @transform_2(%arg0: i32) -> (i32, i32) {
    %c0_i32 = arith.constant 0 : i32
    %c0_i32_0 = arith.constant 0 : i32
    %c0_i32_1 = arith.constant 0 : i32
    return %c0_i32, %c0_i32_0 : i32, i32
  }
  func.func @transform_3(%arg0: i32) -> (i32, i32) {
    %c0_i32 = arith.constant 0 : i32
    %c0_i32_0 = arith.constant 0 : i32
    return %arg0, %c0_i32 : i32, i32
  }
}

</mosaic_0001>

<llo_original>
// kernel: octave_3d_cnn_forward.4
$region0: #{octave_3d_cnn_forward.4}
  #allocation0 [shape = 'u32[]', space=smem, size = 0x4, offset = 0x4, fixed_abs, tag = 'smem constant byte address 0x4 - core index']
  #allocation1 [shape = 'u32[144,128]{1,0:T(1,128)}', space=vmem, size = 0x12000, scoped, tag = 'internal scratch']
  %s0 = inlined_call_operand.vmem [shape: bf16[2560,27], index: 0, kind: input, shape index: {}]
  %s1 = inlined_call_operand.vmem [shape: bf16[27,8], index: 1, kind: input, shape index: {}]
  %s2 = inlined_call_operand.vmem [shape: f32[1,8], index: 2, kind: input, shape index: {}]
  %s3 = inlined_call_operand.vmem [shape: f32[2560,8], index: 3, kind: output, shape index: {}]
  %s4 = sld [smem:[#allocation0]]
  $region45: #{octave_3d_cnn_forward.4} parent=0
    _
  %s6 = ssub.s32 1, %s4
  %s7 = scalar_select 0, %s6, %s4
  loop: start=0, step=1, limit=7
  $region2: #{octave_3d_cnn_forward.4} parent=0 // loop_pre_header
    _
  $region3: #{octave_3d_cnn_forward.4} parent=0 // loop_header
    %s9 = sphi 0, %s13
    %p10 = scmp.ge.s32.totalorder %s9, 7
    %s19 = sphi 0, %s21
    %s22 = sphi 0, %s19
    %s23 = sphi 0, %s22
    %s39 = sphi 0, %s23
    %s43 = sphi 0, %s43
    %s45 = sphi 0, %s43
    %s46 = sphi 0, %s45
    %s60 = sphi 0, %s46
    %s64 = sphi 0, %s64
    %s66 = sphi 0, %s64
    %s67 = sphi 0, %s66
    %s81 = sphi 0, %s67
    %s87 = sphi 0, %s89
    %s90 = sphi 0, %s87
    %s91 = sphi 0, %s90
    %s107 = sphi 0, %s91
  $region4: #{octave_3d_cnn_forward.4} parent=0 // loop_header_branch
    %12 = sbr.rel (%p10) target = $region8
  $region5: #{octave_3d_cnn_forward.4} parent=0 // loop_body
    %s14 = ssub.s32 %s9, 1
    %s15 = ssub.s32 %s9, 2
    %s16 = sadd.s32 %s9, 1
    %s17 = ssub.s32 %s9, %s16
    %p18 = scmp.eq.s32.totalorder %s17, 0
    %s20 = sadd.s32 %s19, 1
    %s21 = scalar_select %p18, %s19, %s20
    %p24 = pneg %p18
    %p25 = scmp.eq.s32.totalorder %s9, 4
    %p26 = por %p24, %p25
    %p27 = scmp.ne.s32.totalorder %s19, %s22
    %p28 = scmp.eq.s32.totalorder %s9, 0
    %p29 = por %p27, %p28
    %p30 = scmp.ne.s32.totalorder %s19, %s22
    %p31 = scmp.eq.s32.totalorder %s14, 4
    %p32 = por %p30, %p31
    %p33 = scmp.ne.s32.totalorder %s22, %s23
    %p34 = scmp.eq.s32.totalorder %s14, 0
    %p35 = por %p33, %p34
    %p36 = scmp.ne.s32.totalorder %s22, %s23
    %p37 = scmp.eq.s32.totalorder %s15, 4
    %p38 = por %p36, %p37
    %p40 = scmp.ne.s32.totalorder %s23, %s39
    %p41 = scmp.eq.s32.totalorder %s15, 0
    %p42 = por %p40, %p41
    %s44 = sadd.s32 %s43, 1
    %p47 = scmp.eq.s32.totalorder %s9, 4
    %p48 = scmp.ne.s32.totalorder %s43, %s45
    %p49 = scmp.eq.s32.totalorder %s9, 0
    %p50 = por %p48, %p49
    %p51 = scmp.ne.s32.totalorder %s43, %s45
    %p52 = scmp.eq.s32.totalorder %s14, 4
    %p53 = por %p51, %p52
    %p54 = scmp.ne.s32.totalorder %s45, %s46
    %p55 = scmp.eq.s32.totalorder %s14, 0
    %p56 = por %p54, %p55
    %p57 = scmp.ne.s32.totalorder %s45, %s46
    %p58 = scmp.eq.s32.totalorder %s15, 4
    %p59 = por %p57, %p58
    %p61 = scmp.ne.s32.totalorder %s46, %s60
    %p62 = scmp.eq.s32.totalorder %s15, 0
    %p63 = por %p61, %p62
    %s65 = sadd.s32 %s64, 1
    %p68 = scmp.eq.s32.totalorder %s9, 4
    %p69 = scmp.ne.s32.totalorder %s64, %s66
    %p70 = scmp.eq.s32.totalorder %s9, 0
    %p71 = por %p69, %p70
    %p72 = scmp.ne.s32.totalorder %s64, %s66
    %p73 = scmp.eq.s32.totalorder %s14, 4
    %p74 = por %p72, %p73
    %p75 = scmp.ne.s32.totalorder %s66, %s67
    %p76 = scmp.eq.s32.totalorder %s14, 0
    %p77 = por %p75, %p76
    %p78 = scmp.ne.s32.totalorder %s66, %s67
    %p79 = scmp.eq.s32.totalorder %s15, 4
    %p80 = por %p78, %p79
    %p82 = scmp.ne.s32.totalorder %s67, %s81
    %p83 = scmp.eq.s32.totalorder %s15, 0
    %p84 = por %p82, %p83
    %s85 = ssub.s32 %s9, %s16
    %p86 = scmp.eq.s32.totalorder %s85, 0
    %s88 = sadd.s32 %s87, 1
    %s89 = scalar_select %p86, %s87, %s88
    %p92 = pneg %p86
    %p93 = scmp.eq.s32.totalorder %s9, 4
    %p94 = por %p92, %p93
    %p95 = scmp.ne.s32.totalorder %s87, %s90
    %p96 = scmp.eq.s32.totalorder %s9, 0
    %p97 = por %p95, %p96
    %p98 = scmp.ne.s32.totalorder %s87, %s90
    %p99 = scmp.eq.s32.totalorder %s14, 4
    %p100 = por %p98, %p99
    %p101 = scmp.ne.s32.totalorder %s90, %s91
    %p102 = scmp.eq.s32.totalorder %s14, 0
    %p103 = por %p101, %p102
    %p104 = scmp.ne.s32.totalorder %s90, %s91
    %p105 = scmp.eq.s32.totalorder %s15, 4
    %p106 = por %p104, %p105
    %p108 = scmp.ne.s32.totalorder %s91, %s107
    %p109 = scmp.eq.s32.totalorder %s15, 0
    %p110 = por %p108, %p109
    %p111 = scmp.le.s32.totalorder 1, %s9
    %p112 = scmp.lt.s32.totalorder %s9, 6
    %p113 = pnand %p111, %p112
    %p114 = pneg %p113
    // Predicated region
    $region9: #{octave_3d_cnn_forward.4} parent=5 // pred_check
      _
    $region10: #{octave_3d_cnn_forward.4} parent=5 // pred_check_branch
      %116 = sbr.rel (%p113) target = $region12
    $region11: #{octave_3d_cnn_forward.4} parent=5 // pred_region
      %s117 = ssub.s32 %s9, 1
      // Predicated region
      $region13: #{octave_3d_cnn_forward.4} parent=11 // pred_check
        %p118 = pneg %p56
      $region14: #{octave_3d_cnn_forward.4} parent=11 // pred_check_branch
        %120 = sbr.rel (%p118) target = $region16
      $region15: #{octave_3d_cnn_forward.4} parent=11 // pred_region
        _
      $region16: #{octave_3d_cnn_forward.4} parent=11 // pred_fallthru
        _
      // Predicated region
      $region17: #{octave_3d_cnn_forward.4} parent=11 // pred_check
        %p121 = pneg %p77
      $region18: #{octave_3d_cnn_forward.4} parent=11 // pred_check_branch
        %123 = sbr.rel (%p121) target = $region20
      $region19: #{octave_3d_cnn_forward.4} parent=11 // pred_region
        _
      $region20: #{octave_3d_cnn_forward.4} parent=11 // pred_fallthru
        _
    $region12: #{octave_3d_cnn_forward.4} parent=5 // pred_fallthru
      _
    %p124 = scmp.lt.s32.totalorder %s9, 5
    // Predicated region
    $region21: #{octave_3d_cnn_forward.4} parent=5 // pred_check
      %p125 = pneg %p124
    $region22: #{octave_3d_cnn_forward.4} parent=5 // pred_check_branch
      %127 = sbr.rel (%p125) target = $region24
    $region23: #{octave_3d_cnn_forward.4} parent=5 // pred_region
      // Predicated region
      $region25: #{octave_3d_cnn_forward.4} parent=23 // pred_check
        %p128 = pneg %p29
      $region26: #{octave_3d_cnn_forward.4} parent=23 // pred_check_branch
        %130 = sbr.rel (%p128) target = $region28
      $region27: #{octave_3d_cnn_forward.4} parent=23 // pred_region
        %s131 = smul.u32 64, %s9
        %p132 = scmp.lt.s32.totalorder %s131, 319
        %s133 = scalar_select %p132, %s131, 319
        %s134 = smul.addr %s133, 4
        %s135 = scalar_lea.vmem %s0, %s134
        %s136 = smul.u32 64, %s9
      $region28: #{octave_3d_cnn_forward.4} parent=23 // pred_fallthru
        _
    $region24: #{octave_3d_cnn_forward.4} parent=5 // pred_fallthru
      _
    %p137 = scmp.le.s32.totalorder 1, %s9
    %p138 = scmp.lt.s32.totalorder %s9, 6
    %p139 = pnand %p137, %p138
    %p140 = pneg %p139
    // Predicated region
    $region29: #{octave_3d_cnn_forward.4} parent=5 // pred_check
      _
    $region30: #{octave_3d_cnn_forward.4} parent=5 // pred_check_branch
      %142 = sbr.rel (%p139) target = $region32
    $region31: #{octave_3d_cnn_forward.4} parent=5 // pred_region
      %s143 = ssub.s32 %s9, 1
      %s144 = smul.u32 64, %s14
      %p145 = scmp.lt.s32.totalorder %s144, 319
      %s146 = scalar_select %p145, %s144, 319
      %s147 = smul.addr %s146, 4
      %s148 = scalar_lea.vmem %s0, %s147
      %p149 = pneg %p35
      %p150 = pneg %p32
      %p151 = pneg %p56
      %p152 = pneg %p53
      %p153 = pneg %p77
      %p154 = pneg %p74
      %p155 = pneg %p103
      %p156 = pneg %p100
      %s157 = smul.u32 64, %s14
      %p158 = scmp.lt.s32.totalorder %s157, 319
      %s159 = scalar_select %p158, %s157, 319
      %s160 = smul.addr %s159, 8
      %s161 = scalar_lea.vmem %s3, %s160
      %s162 = smul.u32 64, %s14
      %p163 = scmp.lt.s32.totalorder %s162, 319
      %s164 = scalar_select %p163, %s162, 319
      %s165 = smul.addr %s164, 4
      %s166 = scalar_lea.vmem %s0, %s165
      %s167 = smul.u32 64, %s14
      %s168 = smul.u32 64, %s14
      %p169 = scmp.lt.s32.totalorder %s168, 319
      %s170 = scalar_select %p169, %s168, 319
      %s171 = smul.addr %s170, 8
      %s172 = scalar_lea.vmem %s3, %s171
      %s173 = smul.u32 64, %s14
      %v175 = vld [vmem:[%s166] sm:$0xf]
      %v176 = vld [vmem:[%s166 + $0x4] sm:$0xf]
      %v177 = vld [vmem:[%s166 + $0x8] sm:$0xf]
      %v178 = vld [vmem:[%s166 + $0xc] sm:$0xf]
      %v179 = vld [vmem:[%s166 + $0x10] sm:$0xf]
      %v180 = vld [vmem:[%s166 + $0x14] sm:$0xf]
      %v181 = vld [vmem:[%s166 + $0x18] sm:$0xf]
      %v182 = vld [vmem:[%s166 + $0x1c] sm:$0xf]
      %v183 = vld [vmem:[%s166 + $0x20] sm:$0xf]
      %v184 = vld [vmem:[%s166 + $0x24] sm:$0xf]
      %v185 = vld [vmem:[%s166 + $0x28] sm:$0xf]
      %v186 = vld [vmem:[%s166 + $0x2c] sm:$0xf]
      %v187 = vld [vmem:[%s166 + $0x30] sm:$0xf]
      %v188 = vld [vmem:[%s166 + $0x34] sm:$0xf]
      %v189 = vld [vmem:[%s166 + $0x38] sm:$0xf]
      %v190 = vld [vmem:[%s166 + $0x3c] sm:$0xf]
      %v191 = vld [vmem:[%s166 + $0x40] sm:$0xf]
      %v192 = vld [vmem:[%s166 + $0x44] sm:$0xf]
      %v193 = vld [vmem:[%s166 + $0x48] sm:$0xf]
      %v194 = vld [vmem:[%s166 + $0x4c] sm:$0xf]
      %v195 = vld [vmem:[%s166 + $0x50] sm:$0xf]
      %v196 = vld [vmem:[%s166 + $0x54] sm:$0xf]
      %v197 = vld [vmem:[%s166 + $0x58] sm:$0xf]
      %v198 = vld [vmem:[%s166 + $0x5c] sm:$0xf]
      %v199 = vld [vmem:[%s166 + $0x60] sm:$0xf]
      %v200 = vld [vmem:[%s166 + $0x64] sm:$0xf]
      %v201 = vld [vmem:[%s166 + $0x68] sm:$0xf]
      %v202 = vld [vmem:[%s166 + $0x6c] sm:$0xf]
      %v203 = vld [vmem:[%s166 + $0x70] sm:$0xf]
      %v204 = vld [vmem:[%s166 + $0x74] sm:$0xf]
      %v205 = vld [vmem:[%s166 + $0x78] sm:$0xf]
      %v206 = vld [vmem:[%s166 + $0x7c] sm:$0xf]
      %v207 = vld [vmem:[%s166 + $0x80] sm:$0xf]
      %v208 = vld [vmem:[%s166 + $0x84] sm:$0xf]
      %v209 = vld [vmem:[%s166 + $0x88] sm:$0xf]
      %v210 = vld [vmem:[%s166 + $0x8c] sm:$0xf]
      %v211 = vld [vmem:[%s166 + $0x90] sm:$0xf]
      %v212 = vld [vmem:[%s166 + $0x94] sm:$0xf]
      %v213 = vld [vmem:[%s166 + $0x98] sm:$0xf]
      %v214 = vld [vmem:[%s166 + $0x9c] sm:$0xf]
      %v215 = vld [vmem:[%s166 + $0xa0] sm:$0xf]
      %v216 = vld [vmem:[%s166 + $0xa4] sm:$0xf]
      %v217 = vld [vmem:[%s166 + $0xa8] sm:$0xf]
      %v218 = vld [vmem:[%s166 + $0xac] sm:$0xf]
      %v219 = vld [vmem:[%s166 + $0xb0] sm:$0xf]
      %v220 = vld [vmem:[%s166 + $0xb4] sm:$0xf]
      %v221 = vld [vmem:[%s166 + $0xb8] sm:$0xf]
      %v222 = vld [vmem:[%s166 + $0xbc] sm:$0xf]
      %v223 = vld [vmem:[%s166 + $0xc0] sm:$0xf]
      %v224 = vld [vmem:[%s166 + $0xc4] sm:$0xf]
      %v225 = vld [vmem:[%s166 + $0xc8] sm:$0xf]
      %v226 = vld [vmem:[%s166 + $0xcc] sm:$0xf]
      %v227 = vld [vmem:[%s166 + $0xd0] sm:$0xf]
      %v228 = vld [vmem:[%s166 + $0xd4] sm:$0xf]
      %v229 = vld [vmem:[%s166 + $0xd8] sm:$0xf]
      %v230 = vld [vmem:[%s166 + $0xdc] sm:$0xf]
      %v231 = vld [vmem:[%s166 + $0xe0] sm:$0xf]
      %v232 = vld [vmem:[%s166 + $0xe4] sm:$0xf]
      %v233 = vld [vmem:[%s166 + $0xe8] sm:$0xf]
      %v234 = vld [vmem:[%s166 + $0xec] sm:$0xf]
      %v235 = vld [vmem:[%s166 + $0xf0] sm:$0xf]
      %v236 = vld [vmem:[%s166 + $0xf4] sm:$0xf]
      %v237 = vld [vmem:[%s166 + $0xf8] sm:$0xf]
      %v238 = vld [vmem:[%s166 + $0xfc] sm:$0xf]
      %v239 = vld [vmem:[%s1] sm:$0xf]
      %v240 = vld [vmem:[%s1 + $0x4] sm:$0xf]
      %v241 = vld [vmem:[%s1 + $0x8] sm:$0xf]
      %v242 = vld [vmem:[%s1 + $0xc] sm:$0x3]
      %v243 = vld [vmem:[%s2] sm:$0x1]
      %v245 = vlaneseq
      %v246 = vshrl.u32 %v245, 7
      %v247 = vsub.s32 0, %v246
      %v248 = vrot.slane %v243, %v247
      %v314 = vunpack.c.l.b16 %v175
      %v315 = vunpack.c.l.b16 %v176
      %v316 = vunpack.c.l.b16 %v177
      %v317 = vunpack.c.l.b16 %v178
      %v318 = vunpack.c.l.b16 %v179
      %v319 = vunpack.c.l.b16 %v180
      %v320 = vunpack.c.l.b16 %v181
      %v321 = vunpack.c.l.b16 %v182
      %v322 = vunpack.c.l.b16 %v183
      %v323 = vunpack.c.l.b16 %v184
      %v324 = vunpack.c.l.b16 %v185
      %v325 = vunpack.c.l.b16 %v186
      %v326 = vunpack.c.l.b16 %v187
      %v327 = vunpack.c.l.b16 %v188
      %v328 = vunpack.c.l.b16 %v189
      %v329 = vunpack.c.l.b16 %v190
      %v330 = vunpack.c.l.b16 %v191
      %v331 = vunpack.c.l.b16 %v192
      %v332 = vunpack.c.l.b16 %v193
      %v333 = vunpack.c.l.b16 %v194
      %v334 = vunpack.c.l.b16 %v195
      %v335 = vunpack.c.l.b16 %v196
      %v336 = vunpack.c.l.b16 %v197
      %v337 = vunpack.c.l.b16 %v198
      %v338 = vunpack.c.l.b16 %v199
      %v339 = vunpack.c.l.b16 %v200
      %v340 = vunpack.c.l.b16 %v201
      %v341 = vunpack.c.l.b16 %v202
      %v342 = vunpack.c.l.b16 %v203
      %v343 = vunpack.c.l.b16 %v204
      %v344 = vunpack.c.l.b16 %v205
      %v345 = vunpack.c.l.b16 %v206
      %v346 = vunpack.c.l.b16 %v207
      %v347 = vunpack.c.l.b16 %v208
      %v348 = vunpack.c.l.b16 %v209
      %v349 = vunpack.c.l.b16 %v210
      %v350 = vunpack.c.l.b16 %v211
      %v351 = vunpack.c.l.b16 %v212
      %v352 = vunpack.c.l.b16 %v213
      %v353 = vunpack.c.l.b16 %v214
      %v354 = vunpack.c.l.b16 %v215
      %v355 = vunpack.c.l.b16 %v216
      %v356 = vunpack.c.l.b16 %v217
      %v357 = vunpack.c.l.b16 %v218
      %v358 = vunpack.c.l.b16 %v219
      %v359 = vunpack.c.l.b16 %v220
      %v360 = vunpack.c.l.b16 %v221
      %v361 = vunpack.c.l.b16 %v222
      %v362 = vunpack.c.l.b16 %v223
      %v363 = vunpack.c.l.b16 %v224
      %v364 = vunpack.c.l.b16 %v225
      %v365 = vunpack.c.l.b16 %v226
      %v366 = vunpack.c.l.b16 %v227
      %v367 = vunpack.c.l.b16 %v228
      %v368 = vunpack.c.l.b16 %v229
      %v369 = vunpack.c.l.b16 %v230
      %v370 = vunpack.c.l.b16 %v231
      %v371 = vunpack.c.l.b16 %v232
      %v372 = vunpack.c.l.b16 %v233
      %v373 = vunpack.c.l.b16 %v234
      %v374 = vunpack.c.l.b16 %v235
      %v375 = vunpack.c.l.b16 %v236
      %v376 = vunpack.c.l.b16 %v237
      %v377 = vunpack.c.l.b16 %v238
      %v378 = vpack.c.b16 %v315, %v314
      %v379 = vpack.c.b16 %v317, %v316
      %v380 = vpack.c.b16 %v319, %v318
      %v381 = vpack.c.b16 %v321, %v320
      %v382 = vpack.c.b16 %v323, %v322
      %v383 = vpack.c.b16 %v325, %v324
      %v384 = vpack.c.b16 %v327, %v326
      %v385 = vpack.c.b16 %v329, %v328
      %v386 = vpack.c.b16 %v331, %v330
      %v387 = vpack.c.b16 %v333, %v332
      %v388 = vpack.c.b16 %v335, %v334
      %v389 = vpack.c.b16 %v337, %v336
      %v390 = vpack.c.b16 %v339, %v338
      %v391 = vpack.c.b16 %v341, %v340
      %v392 = vpack.c.b16 %v343, %v342
      %v393 = vpack.c.b16 %v345, %v344
      %v394 = vpack.c.b16 %v347, %v346
      %v395 = vpack.c.b16 %v349, %v348
      %v396 = vpack.c.b16 %v351, %v350
      %v397 = vpack.c.b16 %v353, %v352
      %v398 = vpack.c.b16 %v355, %v354
      %v399 = vpack.c.b16 %v357, %v356
      %v400 = vpack.c.b16 %v359, %v358
      %v401 = vpack.c.b16 %v361, %v360
      %v402 = vpack.c.b16 %v363, %v362
      %v403 = vpack.c.b16 %v365, %v364
      %v404 = vpack.c.b16 %v367, %v366
      %v405 = vpack.c.b16 %v369, %v368
      %v406 = vpack.c.b16 %v371, %v370
      %v407 = vpack.c.b16 %v373, %v372
      %v408 = vpack.c.b16 %v375, %v374
      %v409 = vpack.c.b16 %v377, %v376
      %v414 = vunpack.c.l.b16 %v239
      %v415 = vunpack.c.l.b16 %v240
      %v416 = vunpack.c.l.b16 %v241
      %v417 = vunpack.c.l.b16 %v242
      %v418 = vpack.c.b16 %v415, %v414
      %v419 = vpack.c.b16 %v417, %v416
      %vm421 = vcmask 220160
      %v423 = vsel %vm421, %v378, 0
      %v426 = vsel %vm421, %v379, 0
      %v429 = vsel %vm421, %v380, 0
      %v432 = vsel %vm421, %v381, 0
      %v435 = vsel %vm421, %v382, 0
      %v438 = vsel %vm421, %v383, 0
      %v441 = vsel %vm421, %v384, 0
      %v444 = vsel %vm421, %v385, 0
      %v447 = vsel %vm421, %v386, 0
      %v450 = vsel %vm421, %v387, 0
      %v453 = vsel %vm421, %v388, 0
      %v456 = vsel %vm421, %v389, 0
      %v459 = vsel %vm421, %v390, 0
      %v462 = vsel %vm421, %v391, 0
      %v465 = vsel %vm421, %v392, 0
      %v468 = vsel %vm421, %v393, 0
      %v471 = vsel %vm421, %v394, 0
      %v474 = vsel %vm421, %v395, 0
      %v477 = vsel %vm421, %v396, 0
      %v480 = vsel %vm421, %v397, 0
      %v483 = vsel %vm421, %v398, 0
      %v486 = vsel %vm421, %v399, 0
      %v489 = vsel %vm421, %v400, 0
      %v492 = vsel %vm421, %v401, 0
      %v495 = vsel %vm421, %v402, 0
      %v498 = vsel %vm421, %v403, 0
      %v501 = vsel %vm421, %v404, 0
      %v504 = vsel %vm421, %v405, 0
      %v507 = vsel %vm421, %v406, 0
      %v510 = vsel %vm421, %v407, 0
      %v513 = vsel %vm421, %v408, 0
      %v516 = vsel %vm421, %v409, 0
      %vm518 = vcmask 1044480
      %vm519 = vcmask 1045504
      %v520 = vsel %vm518, 4294967295, 65535
      %v521 = vsel %vm519, %v520, 0
      %v523 = vand.u32 %v419, %v521
      %525 = vmatprep.subr.bf16.mxu0 0
      %526 = vmatpush1.bf16.msra.mxu0 %v418
      %527 = vmatprep.subr.bf16.mxu0 0
      %528 = vmatpush1.bf16.msra.mxu0 %v523
      %529 = vmatprep.subr.bf16.mxu0 0
      %530 = vmatpush1.bf16.msra.mxu0 0
      %531 = vmatprep.subr.bf16.mxu0 0
      %532 = vmatpush1.bf16.msra.mxu0 0
      %533 = vmatprep.subr.bf16.mxu0 0
      %534 = vmatpush1.bf16.msra.mxu0 0
      %535 = vmatprep.subr.bf16.mxu0 0
      %536 = vmatpush1.bf16.msra.mxu0 0
      %537 = vmatprep.subr.bf16.mxu0 0
      %538 = vmatpush1.bf16.msra.mxu0 0
      %539 = vmatprep.subr.bf16.mxu0 0
      %540 = vmatpush1.bf16.msra.mxu0 0
      %541 = vmatprep.subr.bf16.mxu0 0
      %542 = vmatpush1.bf16.msra.mxu0 0
      %543 = vmatprep.subr.bf16.mxu0 0
      %544 = vmatpush1.bf16.msra.mxu0 0
      %545 = vmatprep.subr.bf16.mxu0 0
      %546 = vmatpush1.bf16.msra.mxu0 0
      %547 = vmatprep.subr.bf16.mxu0 0
      %548 = vmatpush1.bf16.msra.mxu0 0
      %549 = vmatprep.subr.bf16.mxu0 0
      %550 = vmatpush1.bf16.msra.mxu0 0
      %551 = vmatprep.subr.bf16.mxu0 0
      %552 = vmatpush1.bf16.msra.mxu0 0
      %553 = vmatprep.subr.bf16.mxu0 0
      %554 = vmatpush1.bf16.msra.mxu0 0
      %555 = vmatprep.subr.bf16.mxu0 0
      %556 = vmatpush1.bf16.msra.mxu0 0
      %557 = vmatprep.mubr.bf16.mxu0 0
      %558 = vmatmul.mubr.bf16.gmra.mrb[0].mxu0 %v423
      %v559 = vpop.f32.mrb[0].mxu0
      %v560 = vadd.f32 %v248, %v559
      %v561 = vpop.f32.mrb[0].mxu0
      %v562 = vpop.f32.mrb[0].mxu0
      %v563 = vadd.f32 %v248, %v562
      %v564 = vpop.f32.mrb[0].mxu0
      %565 = vmatprep.mubr.bf16.mxu0 0
      %566 = vmatmul.mubr.bf16.gmra.mrb[0].mxu0 %v426
      %v567 = vpop.f32.mrb[0].mxu0
      %v568 = vadd.f32 %v248, %v567
      %v569 = vpop.f32.mrb[0].mxu0
      %v570 = vpop.f32.mrb[0].mxu0
      %v571 = vadd.f32 %v248, %v570
      %v572 = vpop.f32.mrb[0].mxu0
      %573 = vmatprep.mubr.bf16.mxu0 0
      %574 = vmatmul.mubr.bf16.gmra.mrb[0].mxu0 %v429
      %v575 = vpop.f32.mrb[0].mxu0
      %v576 = vadd.f32 %v248, %v575
      %v577 = vpop.f32.mrb[0].mxu0
      %v578 = vpop.f32.mrb[0].mxu0
      %v579 = vadd.f32 %v248, %v578
      %v580 = vpop.f32.mrb[0].mxu0
      %581 = vmatprep.mubr.bf16.mxu0 0
      %582 = vmatmul.mubr.bf16.gmra.mrb[0].mxu0 %v432
      %v583 = vpop.f32.mrb[0].mxu0
      %v584 = vadd.f32 %v248, %v583
      %v585 = vpop.f32.mrb[0].mxu0
      %v586 = vpop.f32.mrb[0].mxu0
      %v587 = vadd.f32 %v248, %v586
      %v588 = vpop.f32.mrb[0].mxu0
      %589 = vmatprep.mubr.bf16.mxu0 0
      %590 = vmatmul.mubr.bf16.gmra.mrb[0].mxu0 %v435
      %v591 = vpop.f32.mrb[0].mxu0
      %v592 = vadd.f32 %v248, %v591
      %v593 = vpop.f32.mrb[0].mxu0
      %v594 = vpop.f32.mrb[0].mxu0
      %v595 = vadd.f32 %v248, %v594
      %v596 = vpop.f32.mrb[0].mxu0
      %597 = vmatprep.mubr.bf16.mxu0 0
      %598 = vmatmul.mubr.bf16.gmra.mrb[0].mxu0 %v438
      %v599 = vpop.f32.mrb[0].mxu0
      %v600 = vadd.f32 %v248, %v599
      %v601 = vpop.f32.mrb[0].mxu0
      %v602 = vpop.f32.mrb[0].mxu0
      %v603 = vadd.f32 %v248, %v602
      %v604 = vpop.f32.mrb[0].mxu0
      %605 = vmatprep.mubr.bf16.mxu0 0
      %606 = vmatmul.mubr.bf16.gmra.mrb[0].mxu0 %v441
      %v607 = vpop.f32.mrb[0].mxu0
      %v608 = vadd.f32 %v248, %v607
      %v609 = vpop.f32.mrb[0].mxu0
      %v610 = vpop.f32.mrb[0].mxu0
      %v611 = vadd.f32 %v248, %v610
      %v612 = vpop.f32.mrb[0].mxu0
      %613 = vmatprep.mubr.bf16.mxu0 0
      %614 = vmatmul.mubr.bf16.gmra.mrb[0].mxu0 %v444
      %v615 = vpop.f32.mrb[0].mxu0
      %v616 = vadd.f32 %v248, %v615
      %v617 = vpop.f32.mrb[0].mxu0
      %v618 = vpop.f32.mrb[0].mxu0
      %v619 = vadd.f32 %v248, %v618
      %v620 = vpop.f32.mrb[0].mxu0
      %621 = vmatprep.mubr.bf16.mxu0 0
      %622 = vmatmul.mubr.bf16.gmra.mrb[0].mxu0 %v447
      %v623 = vpop.f32.mrb[0].mxu0
      %v624 = vadd.f32 %v248, %v623
      %v625 = vpop.f32.mrb[0].mxu0
      %v626 = vpop.f32.mrb[0].mxu0
      %v627 = vadd.f32 %v248, %v626
      %v628 = vpop.f32.mrb[0].mxu0
      %629 = vmatprep.mubr.bf16.mxu0 0
      %630 = vmatmul.mubr.bf16.gmra.mrb[0].mxu0 %v450
      %v631 = vpop.f32.mrb[0].mxu0
      %v632 = vadd.f32 %v248, %v631
      %v633 = vpop.f32.mrb[0].mxu0
      %v634 = vpop.f32.mrb[0].mxu0
      %v635 = vadd.f32 %v248, %v634
      %v636 = vpop.f32.mrb[0].mxu0
      %637 = vmatprep.mubr.bf16.mxu0 0
      %638 = vmatmul.mubr.bf16.gmra.mrb[0].mxu0 %v453
      %v639 = vpop.f32.mrb[0].mxu0
      %v640 = vadd.f32 %v248, %v639
      %v641 = vpop.f32.mrb[0].mxu0
      %v642 = vpop.f32.mrb[0].mxu0
      %v643 = vadd.f32 %v248, %v642
      %v644 = vpop.f32.mrb[0].mxu0
      %645 = vmatprep.mubr.bf16.mxu0 0
      %646 = vmatmul.mubr.bf16.gmra.mrb[0].mxu0 %v456
      %v647 = vpop.f32.mrb[0].mxu0
      %v648 = vadd.f32 %v248, %v647
      %v649 = vpop.f32.mrb[0].mxu0
      %v650 = vpop.f32.mrb[0].mxu0
      %v651 = vadd.f32 %v248, %v650
      %v652 = vpop.f32.mrb[0].mxu0
      %653 = vmatprep.mubr.bf16.mxu0 0
      %654 = vmatmul.mubr.bf16.gmra.mrb[0].mxu0 %v459
      %v655 = vpop.f32.mrb[0].mxu0
      %v656 = vadd.f32 %v248, %v655
      %v657 = vpop.f32.mrb[0].mxu0
      %v658 = vpop.f32.mrb[0].mxu0
      %v659 = vadd.f32 %v248, %v658
      %v660 = vpop.f32.mrb[0].mxu0
      %661 = vmatprep.mubr.bf16.mxu0 0
      %662 = vmatmul.mubr.bf16.gmra.mrb[0].mxu0 %v462
      %v663 = vpop.f32.mrb[0].mxu0
      %v664 = vadd.f32 %v248, %v663
      %v665 = vpop.f32.mrb[0].mxu0
      %v666 = vpop.f32.mrb[0].mxu0
      %v667 = vadd.f32 %v248, %v666
      %v668 = vpop.f32.mrb[0].mxu0
      %669 = vmatprep.mubr.bf16.mxu0 0
      %670 = vmatmul.mubr.bf16.gmra.mrb[0].mxu0 %v465
      %v671 = vpop.f32.mrb[0].mxu0
      %v672 = vadd.f32 %v248, %v671
      %v673 = vpop.f32.mrb[0].mxu0
      %v674 = vpop.f32.mrb[0].mxu0
      %v675 = vadd.f32 %v248, %v674
      %v676 = vpop.f32.mrb[0].mxu0
      %677 = vmatprep.mubr.bf16.mxu0 0
      %678 = vmatmul.mubr.bf16.gmra.mrb[0].mxu0 %v468
      %v679 = vpop.f32.mrb[0].mxu0
      %v680 = vadd.f32 %v248, %v679
      %v681 = vpop.f32.mrb[0].mxu0
      %v682 = vpop.f32.mrb[0].mxu0
      %v683 = vadd.f32 %v248, %v682
      %v684 = vpop.f32.mrb[0].mxu0
      %685 = vmatprep.mubr.bf16.mxu0 0
      %686 = vmatmul.mubr.bf16.gmra.mrb[0].mxu0 %v471
      %v687 = vpop.f32.mrb[0].mxu0
      %v688 = vadd.f32 %v248, %v687
      %v689 = vpop.f32.mrb[0].mxu0
      %v690 = vpop.f32.mrb[0].mxu0
      %v691 = vadd.f32 %v248, %v690
      %v692 = vpop.f32.mrb[0].mxu0
      %693 = vmatprep.mubr.bf16.mxu0 0
      %694 = vmatmul.mubr.bf16.gmra.mrb[0].mxu0 %v474
      %v695 = vpop.f32.mrb[0].mxu0
      %v696 = vadd.f32 %v248, %v695
      %v697 = vpop.f32.mrb[0].mxu0
      %v698 = vpop.f32.mrb[0].mxu0
      %v699 = vadd.f32 %v248, %v698
      %v700 = vpop.f32.mrb[0].mxu0
      %701 = vmatprep.mubr.bf16.mxu0 0
      %702 = vmatmul.mubr.bf16.gmra.mrb[0].mxu0 %v477
      %v703 = vpop.f32.mrb[0].mxu0
      %v704 = vadd.f32 %v248, %v703
      %v705 = vpop.f32.mrb[0].mxu0
      %v706 = vpop.f32.mrb[0].mxu0
      %v707 = vadd.f32 %v248, %v706
      %v708 = vpop.f32.mrb[0].mxu0
      %709 = vmatprep.mubr.bf16.mxu0 0
      %710 = vmatmul.mubr.bf16.gmra.mrb[0].mxu0 %v480
      %v711 = vpop.f32.mrb[0].mxu0
      %v712 = vadd.f32 %v248, %v711
      %v713 = vpop.f32.mrb[0].mxu0
      %v714 = vpop.f32.mrb[0].mxu0
      %v715 = vadd.f32 %v248, %v714
      %v716 = vpop.f32.mrb[0].mxu0
      %717 = vmatprep.mubr.bf16.mxu0 0
      %718 = vmatmul.mubr.bf16.gmra.mrb[0].mxu0 %v483
      %v719 = vpop.f32.mrb[0].mxu0
      %v720 = vadd.f32 %v248, %v719
      %v721 = vpop.f32.mrb[0].mxu0
      %v722 = vpop.f32.mrb[0].mxu0
      %v723 = vadd.f32 %v248, %v722
      %v724 = vpop.f32.mrb[0].mxu0
      %725 = vmatprep.mubr.bf16.mxu0 0
      %726 = vmatmul.mubr.bf16.gmra.mrb[0].mxu0 %v486
      %v727 = vpop.f32.mrb[0].mxu0
      %v728 = vadd.f32 %v248, %v727
      %v729 = vpop.f32.mrb[0].mxu0
      %v730 = vpop.f32.mrb[0].mxu0
      %v731 = vadd.f32 %v248, %v730
      %v732 = vpop.f32.mrb[0].mxu0
      %733 = vmatprep.mubr.bf16.mxu0 0
      %734 = vmatmul.mubr.bf16.gmra.mrb[0].mxu0 %v489
      %v735 = vpop.f32.mrb[0].mxu0
      %v736 = vadd.f32 %v248, %v735
      %v737 = vpop.f32.mrb[0].mxu0
      %v738 = vpop.f32.mrb[0].mxu0
      %v739 = vadd.f32 %v248, %v738
      %v740 = vpop.f32.mrb[0].mxu0
      %741 = vmatprep.mubr.bf16.mxu0 0
      %742 = vmatmul.mubr.bf16.gmra.mrb[0].mxu0 %v492
      %v743 = vpop.f32.mrb[0].mxu0
      %v744 = vadd.f32 %v248, %v743
      %v745 = vpop.f32.mrb[0].mxu0
      %v746 = vpop.f32.mrb[0].mxu0
      %v747 = vadd.f32 %v248, %v746
      %v748 = vpop.f32.mrb[0].mxu0
      %749 = vmatprep.mubr.bf16.mxu0 0
      %750 = vmatmul.mubr.bf16.gmra.mrb[0].mxu0 %v495
      %v751 = vpop.f32.mrb[0].mxu0
      %v752 = vadd.f32 %v248, %v751
      %v753 = vpop.f32.mrb[0].mxu0
      %v754 = vpop.f32.mrb[0].mxu0
      %v755 = vadd.f32 %v248, %v754
      %v756 = vpop.f32.mrb[0].mxu0
      %757 = vmatprep.mubr.bf16.mxu0 0
      %758 = vmatmul.mubr.bf16.gmra.mrb[0].mxu0 %v498
      %v759 = vpop.f32.mrb[0].mxu0
      %v760 = vadd.f32 %v248, %v759
      %v761 = vpop.f32.mrb[0].mxu0
      %v762 = vpop.f32.mrb[0].mxu0
      %v763 = vadd.f32 %v248, %v762
      %v764 = vpop.f32.mrb[0].mxu0
      %765 = vmatprep.mubr.bf16.mxu0 0
      %766 = vmatmul.mubr.bf16.gmra.mrb[0].mxu0 %v501
      %v767 = vpop.f32.mrb[0].mxu0
      %v768 = vadd.f32 %v248, %v767
      %v769 = vpop.f32.mrb[0].mxu0
      %v770 = vpop.f32.mrb[0].mxu0
      %v771 = vadd.f32 %v248, %v770
      %v772 = vpop.f32.mrb[0].mxu0
      %773 = vmatprep.mubr.bf16.mxu0 0
      %774 = vmatmul.mubr.bf16.gmra.mrb[0].mxu0 %v504
      %v775 = vpop.f32.mrb[0].mxu0
      %v776 = vadd.f32 %v248, %v775
      %v777 = vpop.f32.mrb[0].mxu0
      %v778 = vpop.f32.mrb[0].mxu0
      %v779 = vadd.f32 %v248, %v778
      %v780 = vpop.f32.mrb[0].mxu0
      %781 = vmatprep.mubr.bf16.mxu0 0
      %782 = vmatmul.mubr.bf16.gmra.mrb[0].mxu0 %v507
      %v783 = vpop.f32.mrb[0].mxu0
      %v784 = vadd.f32 %v248, %v783
      %v785 = vpop.f32.mrb[0].mxu0
      %v786 = vpop.f32.mrb[0].mxu0
      %v787 = vadd.f32 %v248, %v786
      %v788 = vpop.f32.mrb[0].mxu0
      %789 = vmatprep.mubr.bf16.mxu0 0
      %790 = vmatmul.mubr.bf16.gmra.mrb[0].mxu0 %v510
      %v791 = vpop.f32.mrb[0].mxu0
      %v792 = vadd.f32 %v248, %v791
      %v793 = vpop.f32.mrb[0].mxu0
      %v794 = vpop.f32.mrb[0].mxu0
      %v795 = vadd.f32 %v248, %v794
      %v796 = vpop.f32.mrb[0].mxu0
      %797 = vmatprep.mubr.bf16.mxu0 0
      %798 = vmatmul.mubr.bf16.gmra.mrb[0].mxu0 %v513
      %v799 = vpop.f32.mrb[0].mxu0
      %v800 = vadd.f32 %v248, %v799
      %v801 = vpop.f32.mrb[0].mxu0
      %v802 = vpop.f32.mrb[0].mxu0
      %v803 = vadd.f32 %v248, %v802
      %v804 = vpop.f32.mrb[0].mxu0
      %805 = vmatprep.mubr.bf16.mxu0 0
      %806 = vmatmul.mubr.bf16.gmra.mrb[0].mxu0 %v516
      %v807 = vpop.f32.mrb[0].mxu0
      %v808 = vadd.f32 %v248, %v807
      %v809 = vpop.f32.mrb[0].mxu0
      %v810 = vpop.f32.mrb[0].mxu0
      %v811 = vadd.f32 %v248, %v810
      %v812 = vpop.f32.mrb[0].mxu0
      %813 = vdwg.mxu0
      %v814 = vmax.f32 %v560, 0.0
      %v815 = vmax.f32 %v563, 0.0
      %v816 = vmax.f32 %v568, 0.0
      %v817 = vmax.f32 %v571, 0.0
      %v818 = vmax.f32 %v576, 0.0
      %v819 = vmax.f32 %v579, 0.0
      %v820 = vmax.f32 %v584, 0.0
      %v821 = vmax.f32 %v587, 0.0
      %v822 = vmax.f32 %v592, 0.0
      %v823 = vmax.f32 %v595, 0.0
      %v824 = vmax.f32 %v600, 0.0
      %v825 = vmax.f32 %v603, 0.0
      %v826 = vmax.f32 %v608, 0.0
      %v827 = vmax.f32 %v611, 0.0
      %v828 = vmax.f32 %v616, 0.0
      %v829 = vmax.f32 %v619, 0.0
      %v830 = vmax.f32 %v624, 0.0
      %v831 = vmax.f32 %v627, 0.0
      %v832 = vmax.f32 %v632, 0.0
      %v833 = vmax.f32 %v635, 0.0
      %v834 = vmax.f32 %v640, 0.0
      %v835 = vmax.f32 %v643, 0.0
      %v836 = vmax.f32 %v648, 0.0
      %v837 = vmax.f32 %v651, 0.0
      %v838 = vmax.f32 %v656, 0.0
      %v839 = vmax.f32 %v659, 0.0
      %v840 = vmax.f32 %v664, 0.0
      %v841 = vmax.f32 %v667, 0.0
      %v842 = vmax.f32 %v672, 0.0
      %v843 = vmax.f32 %v675, 0.0
      %v844 = vmax.f32 %v680, 0.0
      %v845 = vmax.f32 %v683, 0.0
      %v846 = vmax.f32 %v688, 0.0
      %v847 = vmax.f32 %v691, 0.0
      %v848 = vmax.f32 %v696, 0.0
      %v849 = vmax.f32 %v699, 0.0
      %v850 = vmax.f32 %v704, 0.0
      %v851 = vmax.f32 %v707, 0.0
      %v852 = vmax.f32 %v712, 0.0
      %v853 = vmax.f32 %v715, 0.0
      %v854 = vmax.f32 %v720, 0.0
      %v855 = vmax.f32 %v723, 0.0
      %v856 = vmax.f32 %v728, 0.0
      %v857 = vmax.f32 %v731, 0.0
      %v858 = vmax.f32 %v736, 0.0
      %v859 = vmax.f32 %v739, 0.0
      %v860 = vmax.f32 %v744, 0.0
      %v861 = vmax.f32 %v747, 0.0
      %v862 = vmax.f32 %v752, 0.0
      %v863 = vmax.f32 %v755, 0.0
      %v864 = vmax.f32 %v760, 0.0
      %v865 = vmax.f32 %v763, 0.0
      %v866 = vmax.f32 %v768, 0.0
      %v867 = vmax.f32 %v771, 0.0
      %v868 = vmax.f32 %v776, 0.0
      %v869 = vmax.f32 %v779, 0.0
      %v870 = vmax.f32 %v784, 0.0
      %v871 = vmax.f32 %v787, 0.0
      %v872 = vmax.f32 %v792, 0.0
      %v873 = vmax.f32 %v795, 0.0
      %v874 = vmax.f32 %v800, 0.0
      %v875 = vmax.f32 %v803, 0.0
      %v876 = vmax.f32 %v808, 0.0
      %v877 = vmax.f32 %v811, 0.0
      %vm878 = vcmask 64512
      %879 = vst.msk [vmem:[%s172] sm:$0xff] %vm878, %v814
      %880 = vst.msk [vmem:[%s172 + $0x8] sm:$0xff] %vm878, %v815
      %881 = vst.msk [vmem:[%s172 + $0x10] sm:$0xff] %vm878, %v816
      %882 = vst.msk [vmem:[%s172 + $0x18] sm:$0xff] %vm878, %v817
      %883 = vst.msk [vmem:[%s172 + $0x20] sm:$0xff] %vm878, %v818
      %884 = vst.msk [vmem:[%s172 + $0x28] sm:$0xff] %vm878, %v819
      %885 = vst.msk [vmem:[%s172 + $0x30] sm:$0xff] %vm878, %v820
      %886 = vst.msk [vmem:[%s172 + $0x38] sm:$0xff] %vm878, %v821
      %887 = vst.msk [vmem:[%s172 + $0x40] sm:$0xff] %vm878, %v822
      %888 = vst.msk [vmem:[%s172 + $0x48] sm:$0xff] %vm878, %v823
      %889 = vst.msk [vmem:[%s172 + $0x50] sm:$0xff] %vm878, %v824
      %890 = vst.msk [vmem:[%s172 + $0x58] sm:$0xff] %vm878, %v825
      %891 = vst.msk [vmem:[%s172 + $0x60] sm:$0xff] %vm878, %v826
      %892 = vst.msk [vmem:[%s172 + $0x68] sm:$0xff] %vm878, %v827
      %893 = vst.msk [vmem:[%s172 + $0x70] sm:$0xff] %vm878, %v828
      %894 = vst.msk [vmem:[%s172 + $0x78] sm:$0xff] %vm878, %v829
      %895 = vst.msk [vmem:[%s172 + $0x80] sm:$0xff] %vm878, %v830
      %896 = vst.msk [vmem:[%s172 + $0x88] sm:$0xff] %vm878, %v831
      %897 = vst.msk [vmem:[%s172 + $0x90] sm:$0xff] %vm878, %v832
      %898 = vst.msk [vmem:[%s172 + $0x98] sm:$0xff] %vm878, %v833
      %899 = vst.msk [vmem:[%s172 + $0xa0] sm:$0xff] %vm878, %v834
      %900 = vst.msk [vmem:[%s172 + $0xa8] sm:$0xff] %vm878, %v835
      %901 = vst.msk [vmem:[%s172 + $0xb0] sm:$0xff] %vm878, %v836
      %902 = vst.msk [vmem:[%s172 + $0xb8] sm:$0xff] %vm878, %v837
      %903 = vst.msk [vmem:[%s172 + $0xc0] sm:$0xff] %vm878, %v838
      %904 = vst.msk [vmem:[%s172 + $0xc8] sm:$0xff] %vm878, %v839
      %905 = vst.msk [vmem:[%s172 + $0xd0] sm:$0xff] %vm878, %v840
      %906 = vst.msk [vmem:[%s172 + $0xd8] sm:$0xff] %vm878, %v841
      %907 = vst.msk [vmem:[%s172 + $0xe0] sm:$0xff] %vm878, %v842
      %908 = vst.msk [vmem:[%s172 + $0xe8] sm:$0xff] %vm878, %v843
      %909 = vst.msk [vmem:[%s172 + $0xf0] sm:$0xff] %vm878, %v844
      %910 = vst.msk [vmem:[%s172 + $0xf8] sm:$0xff] %vm878, %v845
      %911 = vst.msk [vmem:[%s172 + $0x100] sm:$0xff] %vm878, %v846
      %912 = vst.msk [vmem:[%s172 + $0x108] sm:$0xff] %vm878, %v847
      %913 = vst.msk [vmem:[%s172 + $0x110] sm:$0xff] %vm878, %v848
      %914 = vst.msk [vmem:[%s172 + $0x118] sm:$0xff] %vm878, %v849
      %915 = vst.msk [vmem:[%s172 + $0x120] sm:$0xff] %vm878, %v850
      %916 = vst.msk [vmem:[%s172 + $0x128] sm:$0xff] %vm878, %v851
      %917 = vst.msk [vmem:[%s172 + $0x130] sm:$0xff] %vm878, %v852
      %918 = vst.msk [vmem:[%s172 + $0x138] sm:$0xff] %vm878, %v853
      %919 = vst.msk [vmem:[%s172 + $0x140] sm:$0xff] %vm878, %v854
      %920 = vst.msk [vmem:[%s172 + $0x148] sm:$0xff] %vm878, %v855
      %921 = vst.msk [vmem:[%s172 + $0x150] sm:$0xff] %vm878, %v856
      %922 = vst.msk [vmem:[%s172 + $0x158] sm:$0xff] %vm878, %v857
      %923 = vst.msk [vmem:[%s172 + $0x160] sm:$0xff] %vm878, %v858
      %924 = vst.msk [vmem:[%s172 + $0x168] sm:$0xff] %vm878, %v859
      %925 = vst.msk [vmem:[%s172 + $0x170] sm:$0xff] %vm878, %v860
      %926 = vst.msk [vmem:[%s172 + $0x178] sm:$0xff] %vm878, %v861
      %927 = vst.msk [vmem:[%s172 + $0x180] sm:$0xff] %vm878, %v862
      %928 = vst.msk [vmem:[%s172 + $0x188] sm:$0xff] %vm878, %v863
      %929 = vst.msk [vmem:[%s172 + $0x190] sm:$0xff] %vm878, %v864
      %930 = vst.msk [vmem:[%s172 + $0x198] sm:$0xff] %vm878, %v865
      %931 = vst.msk [vmem:[%s172 + $0x1a0] sm:$0xff] %vm878, %v866
      %932 = vst.msk [vmem:[%s172 + $0x1a8] sm:$0xff] %vm878, %v867
      %933 = vst.msk [vmem:[%s172 + $0x1b0] sm:$0xff] %vm878, %v868
      %934 = vst.msk [vmem:[%s172 + $0x1b8] sm:$0xff] %vm878, %v869
      %935 = vst.msk [vmem:[%s172 + $0x1c0] sm:$0xff] %vm878, %v870
      %936 = vst.msk [vmem:[%s172 + $0x1c8] sm:$0xff] %vm878, %v871
      %937 = vst.msk [vmem:[%s172 + $0x1d0] sm:$0xff] %vm878, %v872
      %938 = vst.msk [vmem:[%s172 + $0x1d8] sm:$0xff] %vm878, %v873
      %939 = vst.msk [vmem:[%s172 + $0x1e0] sm:$0xff] %vm878, %v874
      %940 = vst.msk [vmem:[%s172 + $0x1e8] sm:$0xff] %vm878, %v875
      %941 = vst.msk [vmem:[%s172 + $0x1f0] sm:$0xff] %vm878, %v876
      %942 = vst.msk [vmem:[%s172 + $0x1f8] sm:$0xff] %vm878, %v877
      %s943 = smul.u32 64, %s14
      %p944 = scmp.lt.s32.totalorder %s943, 319
      %s945 = scalar_select %p944, %s943, 319
      %s946 = smul.addr %s945, 8
      %s947 = scalar_lea.vmem %s3, %s946
      // Predicated region
      $region33: #{octave_3d_cnn_forward.4} parent=31 // pred_check
        %p948 = pneg %p100
      $region34: #{octave_3d_cnn_forward.4} parent=31 // pred_check_branch
        %950 = sbr.rel (%p948) target = $region36
      $region35: #{octave_3d_cnn_forward.4} parent=31 // pred_region
        %s951 = smul.u32 64, %s14
      $region36: #{octave_3d_cnn_forward.4} parent=31 // pred_fallthru
        _
    $region32: #{octave_3d_cnn_forward.4} parent=5 // pred_fallthru
      _
    %p952 = scmp.le.s32.totalorder 2, %s9
    // Predicated region
    $region37: #{octave_3d_cnn_forward.4} parent=5 // pred_check
      %p953 = pneg %p952
    $region38: #{octave_3d_cnn_forward.4} parent=5 // pred_check_branch
      %955 = sbr.rel (%p953) target = $region40
    $region39: #{octave_3d_cnn_forward.4} parent=5 // pred_region
      %s956 = ssub.s32 %s9, 2
      // Predicated region
      $region41: #{octave_3d_cnn_forward.4} parent=39 // pred_check
        %p957 = pneg %p106
      $region42: #{octave_3d_cnn_forward.4} parent=39 // pred_check_branch
        %959 = sbr.rel (%p957) target = $region44
      $region43: #{octave_3d_cnn_forward.4} parent=39 // pred_region
        %s960 = smul.u32 64, %s15
        %p961 = scmp.lt.s32.totalorder %s960, 319
        %s962 = scalar_select %p961, %s960, 319
        %s963 = smul.addr %s962, 8
        %s964 = scalar_lea.vmem %s3, %s963
      $region44: #{octave_3d_cnn_forward.4} parent=39 // pred_fallthru
        _
    $region40: #{octave_3d_cnn_forward.4} parent=5 // pred_fallthru
      _
  $region6: #{octave_3d_cnn_forward.4} parent=0 // loop_footer
    %s13 = sadd.s32 1, %s9
  $region7: #{octave_3d_cnn_forward.4} parent=0 // loop_footer_branch
    %8 = sbr.rel target = $region3
  $region8: #{octave_3d_cnn_forward.4} parent=0 // loop_exit
    _

// kernel: octave_3d_cnn_forward.5
$region0: #{octave_3d_cnn_forward.5}
  #allocation0 [shape = 'u32[]', space=smem, size = 0x4, offset = 0x4, fixed_abs, tag = 'smem constant byte address 0x4 - core index']
  #allocation1 [shape = 'u32[144,128]{1,0:T(1,128)}', space=vmem, size = 0x12000, scoped, tag = 'internal scratch']
  %s0 = inlined_call_operand.vmem [shape: bf16[2048,216], index: 0, kind: input, shape index: {}]
  %s1 = inlined_call_operand.vmem [shape: bf16[216,8], index: 1, kind: input, shape index: {}]
  %s2 = inlined_call_operand.vmem [shape: f32[1,8], index: 2, kind: input, shape index: {}]
  %s3 = inlined_call_operand.vmem [shape: f32[2048,8], index: 3, kind: output, shape index: {}]
  %s4 = sld [smem:[#allocation0]]
  $region45: #{octave_3d_cnn_forward.5} parent=0
    _
  %s6 = ssub.s32 1, %s4
  %s7 = scalar_select 0, %s6, %s4
  loop: start=0, step=1, limit=6
  $region2: #{octave_3d_cnn_forward.5} parent=0 // loop_pre_header
    _
  $region3: #{octave_3d_cnn_forward.5} parent=0 // loop_header
    %s9 = sphi 0, %s13
    %p10 = scmp.ge.s32.totalorder %s9, 6
    %s19 = sphi 0, %s21
    %s22 = sphi 0, %s19
    %s23 = sphi 0, %s22
    %s39 = sphi 0, %s23
    %s43 = sphi 0, %s43
    %s45 = sphi 0, %s43
    %s46 = sphi 0, %s45
    %s60 = sphi 0, %s46
    %s64 = sphi 0, %s64
    %s66 = sphi 0, %s64
    %s67 = sphi 0, %s66
    %s81 = sphi 0, %s67
    %s87 = sphi 0, %s89
    %s90 = sphi 0, %s87
    %s91 = sphi 0, %s90
    %s107 = sphi 0, %s91
  $region4: #{octave_3d_cnn_forward.5} parent=0 // loop_header_branch
    %12 = sbr.rel (%p10) target = $region8
  $region5: #{octave_3d_cnn_forward.5} parent=0 // loop_body
    %s14 = ssub.s32 %s9, 1
    %s15 = ssub.s32 %s9, 2
    %s16 = sadd.s32 %s9, 1
    %s17 = ssub.s32 %s9, %s16
    %p18 = scmp.eq.s32.totalorder %s17, 0
    %s20 = sadd.s32 %s19, 1
    %s21 = scalar_select %p18, %s19, %s20
    %p24 = pneg %p18
    %p25 = scmp.eq.s32.totalorder %s9, 3
    %p26 = por %p24, %p25
    %p27 = scmp.ne.s32.totalorder %s19, %s22
    %p28 = scmp.eq.s32.totalorder %s9, 0
    %p29 = por %p27, %p28
    %p30 = scmp.ne.s32.totalorder %s19, %s22
    %p31 = scmp.eq.s32.totalorder %s14, 3
    %p32 = por %p30, %p31
    %p33 = scmp.ne.s32.totalorder %s22, %s23
    %p34 = scmp.eq.s32.totalorder %s14, 0
    %p35 = por %p33, %p34
    %p36 = scmp.ne.s32.totalorder %s22, %s23
    %p37 = scmp.eq.s32.totalorder %s15, 3
    %p38 = por %p36, %p37
    %p40 = scmp.ne.s32.totalorder %s23, %s39
    %p41 = scmp.eq.s32.totalorder %s15, 0
    %p42 = por %p40, %p41
    %s44 = sadd.s32 %s43, 1
    %p47 = scmp.eq.s32.totalorder %s9, 3
    %p48 = scmp.ne.s32.totalorder %s43, %s45
    %p49 = scmp.eq.s32.totalorder %s9, 0
    %p50 = por %p48, %p49
    %p51 = scmp.ne.s32.totalorder %s43, %s45
    %p52 = scmp.eq.s32.totalorder %s14, 3
    %p53 = por %p51, %p52
    %p54 = scmp.ne.s32.totalorder %s45, %s46
    %p55 = scmp.eq.s32.totalorder %s14, 0
    %p56 = por %p54, %p55
    %p57 = scmp.ne.s32.totalorder %s45, %s46
    %p58 = scmp.eq.s32.totalorder %s15, 3
    %p59 = por %p57, %p58
    %p61 = scmp.ne.s32.totalorder %s46, %s60
    %p62 = scmp.eq.s32.totalorder %s15, 0
    %p63 = por %p61, %p62
    %s65 = sadd.s32 %s64, 1
    %p68 = scmp.eq.s32.totalorder %s9, 3
    %p69 = scmp.ne.s32.totalorder %s64, %s66
    %p70 = scmp.eq.s32.totalorder %s9, 0
    %p71 = por %p69, %p70
    %p72 = scmp.ne.s32.totalorder %s64, %s66
    %p73 = scmp.eq.s32.totalorder %s14, 3
    %p74 = por %p72, %p73
    %p75 = scmp.ne.s32.totalorder %s66, %s67
    %p76 = scmp.eq.s32.totalorder %s14, 0
    %p77 = por %p75, %p76
    %p78 = scmp.ne.s32.totalorder %s66, %s67
    %p79 = scmp.eq.s32.totalorder %s15, 3
    %p80 = por %p78, %p79
    %p82 = scmp.ne.s32.totalorder %s67, %s81
    %p83 = scmp.eq.s32.totalorder %s15, 0
    %p84 = por %p82, %p83
    %s85 = ssub.s32 %s9, %s16
    %p86 = scmp.eq.s32.totalorder %s85, 0
    %s88 = sadd.s32 %s87, 1
    %s89 = scalar_select %p86, %s87, %s88
    %p92 = pneg %p86
    %p93 = scmp.eq.s32.totalorder %s9, 3
    %p94 = por %p92, %p93
    %p95 = scmp.ne.s32.totalorder %s87, %s90
    %p96 = scmp.eq.s32.totalorder %s9, 0
    %p97 = por %p95, %p96
    %p98 = scmp.ne.s32.totalorder %s87, %s90
    %p99 = scmp.eq.s32.totalorder %s14, 3
    %p100 = por %p98, %p99
    %p101 = scmp.ne.s32.totalorder %s90, %s91
    %p102 = scmp.eq.s32.totalorder %s14, 0
    %p103 = por %p101, %p102
    %p104 = scmp.ne.s32.totalorder %s90, %s91
    %p105 = scmp.eq.s32.totalorder %s15, 3
    %p106 = por %p104, %p105
    %p108 = scmp.ne.s32.totalorder %s91, %s107
    %p109 = scmp.eq.s32.totalorder %s15, 0
    %p110 = por %p108, %p109
    %p111 = scmp.le.s32.totalorder 1, %s9
    %p112 = scmp.lt.s32.totalorder %s9, 5
    %p113 = pnand %p111, %p112
    %p114 = pneg %p113
    // Predicated region
    $region9: #{octave_3d_cnn_forward.5} parent=5 // pred_check
      _
    $region10: #{octave_3d_cnn_forward.5} parent=5 // pred_check_branch
      %116 = sbr.rel (%p113) target = $region12
    $region11: #{octave_3d_cnn_forward.5} parent=5 // pred_region
      %s117 = ssub.s32 %s9, 1
      // Predicated region
      $region13: #{octave_3d_cnn_forward.5} parent=11 // pred_check
        %p118 = pneg %p56
      $region14: #{octave_3d_cnn_forward.5} parent=11 // pred_check_branch
        %120 = sbr.rel (%p118) target = $region16
      $region15: #{octave_3d_cnn_forward.5} parent=11 // pred_region
        _
      $region16: #{octave_3d_cnn_forward.5} parent=11 // pred_fallthru
        _
      // Predicated region
      $region17: #{octave_3d_cnn_forward.5} parent=11 // pred_check
        %p121 = pneg %p77
      $region18: #{octave_3d_cnn_forward.5} parent=11 // pred_check_branch
        %123 = sbr.rel (%p121) target = $region20
      $region19: #{octave_3d_cnn_forward.5} parent=11 // pred_region
        _
      $region20: #{octave_3d_cnn_forward.5} parent=11 // pred_fallthru
        _
    $region12: #{octave_3d_cnn_forward.5} parent=5 // pred_fallthru
      _
    %p124 = scmp.lt.s32.totalorder %s9, 4
    // Predicated region
    $region21: #{octave_3d_cnn_forward.5} parent=5 // pred_check
      %p125 = pneg %p124
    $region22: #{octave_3d_cnn_forward.5} parent=5 // pred_check_branch
      %127 = sbr.rel (%p125) target = $region24
    $region23: #{octave_3d_cnn_forward.5} parent=5 // pred_region
      // Predicated region
      $region25: #{octave_3d_cnn_forward.5} parent=23 // pred_check
        %p128 = pneg %p29
      $region26: #{octave_3d_cnn_forward.5} parent=23 // pred_check_branch
        %130 = sbr.rel (%p128) target = $region28
      $region27: #{octave_3d_cnn_forward.5} parent=23 // pred_region
        %s131 = smul.u32 64, %s9
        %p132 = scmp.lt.s32.totalorder %s131, 255
        %s133 = scalar_select %p132, %s131, 255
        %s134 = smul.addr %s133, 2
        %s135 = smul.addr %s134, 4
        %s136 = scalar_lea.vmem %s0, %s135
        %s137 = smul.u32 64, %s9
      $region28: #{octave_3d_cnn_forward.5} parent=23 // pred_fallthru
        _
    $region24: #{octave_3d_cnn_forward.5} parent=5 // pred_fallthru
      _
    %p138 = scmp.le.s32.totalorder 1, %s9
    %p139 = scmp.lt.s32.totalorder %s9, 5
    %p140 = pnand %p138, %p139
    %p141 = pneg %p140
    // Predicated region
    $region29: #{octave_3d_cnn_forward.5} parent=5 // pred_check
      _
    $region30: #{octave_3d_cnn_forward.5} parent=5 // pred_check_branch
      %143 = sbr.rel (%p140) target = $region32
    $region31: #{octave_3d_cnn_forward.5} parent=5 // pred_region
      %s144 = ssub.s32 %s9, 1
      %s145 = smul.u32 64, %s14
      %p146 = scmp.lt.s32.totalorder %s145, 255
      %s147 = scalar_select %p146, %s145, 255
      %s148 = smul.addr %s147, 2
      %s149 = smul.addr %s148, 4
      %s150 = scalar_lea.vmem %s0, %s149
      %p151 = pneg %p35
      %p152 = pneg %p32
      %p153 = pneg %p56
      %p154 = pneg %p53
      %p155 = pneg %p77
      %p156 = pneg %p74
      %p157 = pneg %p103
      %p158 = pneg %p100
      %s159 = smul.u32 64, %s14
      %p160 = scmp.lt.s32.totalorder %s159, 255
      %s161 = scalar_select %p160, %s159, 255
      %s162 = smul.addr %s161, 8
      %s163 = scalar_lea.vmem %s3, %s162
      %s164 = smul.u32 64, %s14
      %p165 = scmp.lt.s32.totalorder %s164, 255
      %s166 = scalar_select %p165, %s164, 255
      %s167 = smul.addr %s166, 2
      %s168 = smul.addr %s167, 4
      %s169 = scalar_lea.vmem %s0, %s168
      %s170 = smul.u32 64, %s14
      %s171 = smul.u32 64, %s14
      %p172 = scmp.lt.s32.totalorder %s171, 255
      %s173 = scalar_select %p172, %s171, 255
      %s174 = smul.addr %s173, 8
      %s175 = scalar_lea.vmem %s3, %s174
      %s176 = smul.u32 64, %s14
      %v178 = vld [vmem:[%s169] sm:$0xff]
      %v179 = vld [vmem:[%s169 + $0x8] sm:$0xff]
      %v180 = vld [vmem:[%s169 + $0x10] sm:$0xff]
      %v181 = vld [vmem:[%s169 + $0x18] sm:$0xff]
      %v182 = vld [vmem:[%s169 + $0x20] sm:$0xff]
      %v183 = vld [vmem:[%s169 + $0x28] sm:$0xff]
      %v184 = vld [vmem:[%s169 + $0x30] sm:$0xff]
      %v185 = vld [vmem:[%s169 + $0x38] sm:$0xff]
      %v186 = vld [vmem:[%s169 + $0x40] sm:$0xff]
      %v187 = vld [vmem:[%s169 + $0x48] sm:$0xff]
      %v188 = vld [vmem:[%s169 + $0x50] sm:$0xff]
      %v189 = vld [vmem:[%s169 + $0x58] sm:$0xff]
      %v190 = vld [vmem:[%s169 + $0x60] sm:$0xff]
      %v191 = vld [vmem:[%s169 + $0x68] sm:$0xff]
      %v192 = vld [vmem:[%s169 + $0x70] sm:$0xff]
      %v193 = vld [vmem:[%s169 + $0x78] sm:$0xff]
      %v194 = vld [vmem:[%s169 + $0x80] sm:$0xff]
      %v195 = vld [vmem:[%s169 + $0x88] sm:$0xff]
      %v196 = vld [vmem:[%s169 + $0x90] sm:$0xff]
      %v197 = vld [vmem:[%s169 + $0x98] sm:$0xff]
      %v198 = vld [vmem:[%s169 + $0xa0] sm:$0xff]
      %v199 = vld [vmem:[%s169 + $0xa8] sm:$0xff]
      %v200 = vld [vmem:[%s169 + $0xb0] sm:$0xff]
      %v201 = vld [vmem:[%s169 + $0xb8] sm:$0xff]
      %v202 = vld [vmem:[%s169 + $0xc0] sm:$0xff]
      %v203 = vld [vmem:[%s169 + $0xc8] sm:$0xff]
      %v204 = vld [vmem:[%s169 + $0xd0] sm:$0xff]
      %v205 = vld [vmem:[%s169 + $0xd8] sm:$0xff]
      %v206 = vld [vmem:[%s169 + $0xe0] sm:$0xff]
      %v207 = vld [vmem:[%s169 + $0xe8] sm:$0xff]
      %v208 = vld [vmem:[%s169 + $0xf0] sm:$0xff]
      %v209 = vld [vmem:[%s169 + $0xf8] sm:$0xff]
      %v210 = vld [vmem:[%s169 + $0x100] sm:$0xff]
      %v211 = vld [vmem:[%s169 + $0x108] sm:$0xff]
      %v212 = vld [vmem:[%s169 + $0x110] sm:$0xff]
      %v213 = vld [vmem:[%s169 + $0x118] sm:$0xff]
      %v214 = vld [vmem:[%s169 + $0x120] sm:$0xff]
      %v215 = vld [vmem:[%s169 + $0x128] sm:$0xff]
      %v216 = vld [vmem:[%s169 + $0x130] sm:$0xff]
      %v217 = vld [vmem:[%s169 + $0x138] sm:$0xff]
      %v218 = vld [vmem:[%s169 + $0x140] sm:$0xff]
      %v219 = vld [vmem:[%s169 + $0x148] sm:$0xff]
      %v220 = vld [vmem:[%s169 + $0x150] sm:$0xff]
      %v221 = vld [vmem:[%s169 + $0x158] sm:$0xff]
      %v222 = vld [vmem:[%s169 + $0x160] sm:$0xff]
      %v223 = vld [vmem:[%s169 + $0x168] sm:$0xff]
      %v224 = vld [vmem:[%s169 + $0x170] sm:$0xff]
      %v225 = vld [vmem:[%s169 + $0x178] sm:$0xff]
      %v226 = vld [vmem:[%s169 + $0x180] sm:$0xff]
      %v227 = vld [vmem:[%s169 + $0x188] sm:$0xff]
      %v228 = vld [vmem:[%s169 + $0x190] sm:$0xff]
      %v229 = vld [vmem:[%s169 + $0x198] sm:$0xff]
      %v230 = vld [vmem:[%s169 + $0x1a0] sm:$0xff]
      %v231 = vld [vmem:[%s169 + $0x1a8] sm:$0xff]
      %v232 = vld [vmem:[%s169 + $0x1b0] sm:$0xff]
      %v233 = vld [vmem:[%s169 + $0x1b8] sm:$0xff]
      %v234 = vld [vmem:[%s169 + $0x1c0] sm:$0xff]
      %v235 = vld [vmem:[%s169 + $0x1c8] sm:$0xff]
      %v236 = vld [vmem:[%s169 + $0x1d0] sm:$0xff]
      %v237 = vld [vmem:[%s169 + $0x1d8] sm:$0xff]
      %v238 = vld [vmem:[%s169 + $0x1e0] sm:$0xff]
      %v239 = vld [vmem:[%s169 + $0x1e8] sm:$0xff]
      %v240 = vld [vmem:[%s169 + $0x1f0] sm:$0xff]
      %v241 = vld [vmem:[%s169 + $0x1f8] sm:$0xff]
      %v242 = vld [vmem:[%s1] sm:$0xf]
      %v243 = vld [vmem:[%s1 + $0x4] sm:$0xf]
      %v244 = vld [vmem:[%s1 + $0x8] sm:$0xf]
      %v245 = vld [vmem:[%s1 + $0xc] sm:$0xf]
      %v246 = vld [vmem:[%s1 + $0x10] sm:$0xf]
      %v247 = vld [vmem:[%s1 + $0x14] sm:$0xf]
      %v248 = vld [vmem:[%s1 + $0x18] sm:$0xf]
      %v249 = vld [vmem:[%s1 + $0x1c] sm:$0xf]
      %v250 = vld [vmem:[%s1 + $0x20] sm:$0xf]
      %v251 = vld [vmem:[%s1 + $0x24] sm:$0xf]
      %v252 = vld [vmem:[%s1 + $0x28] sm:$0xf]
      %v253 = vld [vmem:[%s1 + $0x2c] sm:$0xf]
      %v254 = vld [vmem:[%s1 + $0x30] sm:$0xf]
      %v255 = vld [vmem:[%s1 + $0x34] sm:$0xf]
      %v256 = vld [vmem:[%s1 + $0x38] sm:$0xf]
      %v257 = vld [vmem:[%s1 + $0x3c] sm:$0xf]
      %v258 = vld [vmem:[%s1 + $0x40] sm:$0xf]
      %v259 = vld [vmem:[%s1 + $0x44] sm:$0xf]
      %v260 = vld [vmem:[%s1 + $0x48] sm:$0xf]
      %v261 = vld [vmem:[%s1 + $0x4c] sm:$0xf]
      %v262 = vld [vmem:[%s1 + $0x50] sm:$0xf]
      %v263 = vld [vmem:[%s1 + $0x54] sm:$0xf]
      %v264 = vld [vmem:[%s1 + $0x58] sm:$0xf]
      %v265 = vld [vmem:[%s1 + $0x5c] sm:$0xf]
      %v266 = vld [vmem:[%s1 + $0x60] sm:$0xf]
      %v267 = vld [vmem:[%s1 + $0x64] sm:$0xf]
      %v268 = vld [vmem:[%s1 + $0x68] sm:$0xf]
      %v269 = vld [vmem:[%s2] sm:$0x1]
      %v271 = vlaneseq
      %v272 = vshrl.u32 %v271, 7
      %v273 = vsub.s32 0, %v272
      %v274 = vrot.slane %v269, %v273
      %v340 = vunpack.c.l.b16 %v178
      %v341 = vunpack.c.h.b16 %v178
      %v342 = vunpack.c.l.b16 %v179
      %v343 = vunpack.c.h.b16 %v179
      %v344 = vunpack.c.l.b16 %v180
      %v345 = vunpack.c.h.b16 %v180
      %v346 = vunpack.c.l.b16 %v181
      %v347 = vunpack.c.h.b16 %v181
      %v348 = vunpack.c.l.b16 %v182
      %v349 = vunpack.c.h.b16 %v182
      %v350 = vunpack.c.l.b16 %v183
      %v351 = vunpack.c.h.b16 %v183
      %v352 = vunpack.c.l.b16 %v184
      %v353 = vunpack.c.h.b16 %v184
      %v354 = vunpack.c.l.b16 %v185
      %v355 = vunpack.c.h.b16 %v185
      %v356 = vunpack.c.l.b16 %v186
      %v357 = vunpack.c.h.b16 %v186
      %v358 = vunpack.c.l.b16 %v187
      %v359 = vunpack.c.h.b16 %v187
      %v360 = vunpack.c.l.b16 %v188
      %v361 = vunpack.c.h.b16 %v188
      %v362 = vunpack.c.l.b16 %v189
      %v363 = vunpack.c.h.b16 %v189
      %v364 = vunpack.c.l.b16 %v190
      %v365 = vunpack.c.h.b16 %v190
      %v366 = vunpack.c.l.b16 %v191
      %v367 = vunpack.c.h.b16 %v191
      %v368 = vunpack.c.l.b16 %v192
      %v369 = vunpack.c.h.b16 %v192
      %v370 = vunpack.c.l.b16 %v193
      %v371 = vunpack.c.h.b16 %v193
      %v372 = vunpack.c.l.b16 %v194
      %v373 = vunpack.c.h.b16 %v194
      %v374 = vunpack.c.l.b16 %v195
      %v375 = vunpack.c.h.b16 %v195
      %v376 = vunpack.c.l.b16 %v196
      %v377 = vunpack.c.h.b16 %v196
      %v378 = vunpack.c.l.b16 %v197
      %v379 = vunpack.c.h.b16 %v197
      %v380 = vunpack.c.l.b16 %v198
      %v381 = vunpack.c.h.b16 %v198
      %v382 = vunpack.c.l.b16 %v199
      %v383 = vunpack.c.h.b16 %v199
      %v384 = vunpack.c.l.b16 %v200
      %v385 = vunpack.c.h.b16 %v200
      %v386 = vunpack.c.l.b16 %v201
      %v387 = vunpack.c.h.b16 %v201
      %v388 = vunpack.c.l.b16 %v202
      %v389 = vunpack.c.h.b16 %v202
      %v390 = vunpack.c.l.b16 %v203
      %v391 = vunpack.c.h.b16 %v203
      %v392 = vunpack.c.l.b16 %v204
      %v393 = vunpack.c.h.b16 %v204
      %v394 = vunpack.c.l.b16 %v205
      %v395 = vunpack.c.h.b16 %v205
      %v396 = vunpack.c.l.b16 %v206
      %v397 = vunpack.c.h.b16 %v206
      %v398 = vunpack.c.l.b16 %v207
      %v399 = vunpack.c.h.b16 %v207
      %v400 = vunpack.c.l.b16 %v208
      %v401 = vunpack.c.h.b16 %v208
      %v402 = vunpack.c.l.b16 %v209
      %v403 = vunpack.c.h.b16 %v209
      %v404 = vunpack.c.l.b16 %v210
      %v405 = vunpack.c.h.b16 %v210
      %v406 = vunpack.c.l.b16 %v211
      %v407 = vunpack.c.h.b16 %v211
      %v408 = vunpack.c.l.b16 %v212
      %v409 = vunpack.c.h.b16 %v212
      %v410 = vunpack.c.l.b16 %v213
      %v411 = vunpack.c.h.b16 %v213
      %v412 = vunpack.c.l.b16 %v214
      %v413 = vunpack.c.h.b16 %v214
      %v414 = vunpack.c.l.b16 %v215
      %v415 = vunpack.c.h.b16 %v215
      %v416 = vunpack.c.l.b16 %v216
      %v417 = vunpack.c.h.b16 %v216
      %v418 = vunpack.c.l.b16 %v217
      %v419 = vunpack.c.h.b16 %v217
      %v420 = vunpack.c.l.b16 %v218
      %v421 = vunpack.c.h.b16 %v218
      %v422 = vunpack.c.l.b16 %v219
      %v423 = vunpack.c.h.b16 %v219
      %v424 = vunpack.c.l.b16 %v220
      %v425 = vunpack.c.h.b16 %v220
      %v426 = vunpack.c.l.b16 %v221
      %v427 = vunpack.c.h.b16 %v221
      %v428 = vunpack.c.l.b16 %v222
      %v429 = vunpack.c.h.b16 %v222
      %v430 = vunpack.c.l.b16 %v223
      %v431 = vunpack.c.h.b16 %v223
      %v432 = vunpack.c.l.b16 %v224
      %v433 = vunpack.c.h.b16 %v224
      %v434 = vunpack.c.l.b16 %v225
      %v435 = vunpack.c.h.b16 %v225
      %v436 = vunpack.c.l.b16 %v226
      %v437 = vunpack.c.h.b16 %v226
      %v438 = vunpack.c.l.b16 %v227
      %v439 = vunpack.c.h.b16 %v227
      %v440 = vunpack.c.l.b16 %v228
      %v441 = vunpack.c.h.b16 %v228
      %v442 = vunpack.c.l.b16 %v229
      %v443 = vunpack.c.h.b16 %v229
      %v444 = vunpack.c.l.b16 %v230
      %v445 = vunpack.c.h.b16 %v230
      %v446 = vunpack.c.l.b16 %v231
      %v447 = vunpack.c.h.b16 %v231
      %v448 = vunpack.c.l.b16 %v232
      %v449 = vunpack.c.h.b16 %v232
      %v450 = vunpack.c.l.b16 %v233
      %v451 = vunpack.c.h.b16 %v233
      %v452 = vunpack.c.l.b16 %v234
      %v453 = vunpack.c.h.b16 %v234
      %v454 = vunpack.c.l.b16 %v235
      %v455 = vunpack.c.h.b16 %v235
      %v456 = vunpack.c.l.b16 %v236
      %v457 = vunpack.c.h.b16 %v236
      %v458 = vunpack.c.l.b16 %v237
      %v459 = vunpack.c.h.b16 %v237
      %v460 = vunpack.c.l.b16 %v238
      %v461 = vunpack.c.h.b16 %v238
      %v462 = vunpack.c.l.b16 %v239
      %v463 = vunpack.c.h.b16 %v239
      %v464 = vunpack.c.l.b16 %v240
      %v465 = vunpack.c.h.b16 %v240
      %v466 = vunpack.c.l.b16 %v241
      %v467 = vunpack.c.h.b16 %v241
      %v468 = vpack.c.b16 %v342, %v340
      %v469 = vpack.c.b16 %v343, %v341
      %v470 = vpack.c.b16 %v346, %v344
      %v471 = vpack.c.b16 %v347, %v345
      %v472 = vpack.c.b16 %v350, %v348
      %v473 = vpack.c.b16 %v351, %v349
      %v474 = vpack.c.b16 %v354, %v352
      %v475 = vpack.c.b16 %v355, %v353
      %v476 = vpack.c.b16 %v358, %v356
      %v477 = vpack.c.b16 %v359, %v357
      %v478 = vpack.c.b16 %v362, %v360
      %v479 = vpack.c.b16 %v363, %v361
      %v480 = vpack.c.b16 %v366, %v364
      %v481 = vpack.c.b16 %v367, %v365
      %v482 = vpack.c.b16 %v370, %v368
      %v483 = vpack.c.b16 %v371, %v369
      %v484 = vpack.c.b16 %v374, %v372
      %v485 = vpack.c.b16 %v375, %v373
      %v486 = vpack.c.b16 %v378, %v376
      %v487 = vpack.c.b16 %v379, %v377
      %v488 = vpack.c.b16 %v382, %v380
      %v489 = vpack.c.b16 %v383, %v381
      %v490 = vpack.c.b16 %v386, %v384
      %v491 = vpack.c.b16 %v387, %v385
      %v492 = vpack.c.b16 %v390, %v388
      %v493 = vpack.c.b16 %v391, %v389
      %v494 = vpack.c.b16 %v394, %v392
      %v495 = vpack.c.b16 %v395, %v393
      %v496 = vpack.c.b16 %v398, %v396
      %v497 = vpack.c.b16 %v399, %v397
      %v498 = vpack.c.b16 %v402, %v400
      %v499 = vpack.c.b16 %v403, %v401
      %v500 = vpack.c.b16 %v406, %v404
      %v501 = vpack.c.b16 %v407, %v405
      %v502 = vpack.c.b16 %v410, %v408
      %v503 = vpack.c.b16 %v411, %v409
      %v504 = vpack.c.b16 %v414, %v412
      %v505 = vpack.c.b16 %v415, %v413
      %v506 = vpack.c.b16 %v418, %v416
      %v507 = vpack.c.b16 %v419, %v417
      %v508 = vpack.c.b16 %v422, %v420
      %v509 = vpack.c.b16 %v423, %v421
      %v510 = vpack.c.b16 %v426, %v424
      %v511 = vpack.c.b16 %v427, %v425
      %v512 = vpack.c.b16 %v430, %v428
      %v513 = vpack.c.b16 %v431, %v429
      %v514 = vpack.c.b16 %v434, %v432
      %v515 = vpack.c.b16 %v435, %v433
      %v516 = vpack.c.b16 %v438, %v436
      %v517 = vpack.c.b16 %v439, %v437
      %v518 = vpack.c.b16 %v442, %v440
      %v519 = vpack.c.b16 %v443, %v441
      %v520 = vpack.c.b16 %v446, %v444
      %v521 = vpack.c.b16 %v447, %v445
      %v522 = vpack.c.b16 %v450, %v448
      %v523 = vpack.c.b16 %v451, %v449
      %v524 = vpack.c.b16 %v454, %v452
      %v525 = vpack.c.b16 %v455, %v453
      %v526 = vpack.c.b16 %v458, %v456
      %v527 = vpack.c.b16 %v459, %v457
      %v528 = vpack.c.b16 %v462, %v460
      %v529 = vpack.c.b16 %v463, %v461
      %v530 = vpack.c.b16 %v466, %v464
      %v531 = vpack.c.b16 %v467, %v465
      %v591 = vunpack.c.l.b16 %v242
      %v592 = vunpack.c.l.b16 %v243
      %v593 = vunpack.c.l.b16 %v244
      %v594 = vunpack.c.l.b16 %v245
      %v595 = vunpack.c.l.b16 %v246
      %v596 = vunpack.c.l.b16 %v247
      %v597 = vunpack.c.l.b16 %v248
      %v598 = vunpack.c.l.b16 %v249
      %v599 = vunpack.c.l.b16 %v250
      %v600 = vunpack.c.l.b16 %v251
      %v601 = vunpack.c.l.b16 %v252
      %v602 = vunpack.c.l.b16 %v253
      %v603 = vunpack.c.l.b16 %v254
      %v604 = vunpack.c.l.b16 %v255
      %v605 = vunpack.c.l.b16 %v256
      %v606 = vunpack.c.l.b16 %v257
      %v607 = vunpack.c.l.b16 %v258
      %v608 = vunpack.c.l.b16 %v259
      %v609 = vunpack.c.l.b16 %v260
      %v610 = vunpack.c.l.b16 %v261
      %v611 = vunpack.c.l.b16 %v262
      %v612 = vunpack.c.l.b16 %v263
      %v613 = vunpack.c.l.b16 %v264
      %v614 = vunpack.c.l.b16 %v265
      %v615 = vunpack.c.l.b16 %v266
      %v616 = vunpack.c.l.b16 %v267
      %v617 = vunpack.c.l.b16 %v268
      %v618 = vpack.c.b16 %v592, %v591
      %v619 = vpack.c.b16 %v594, %v593
      %v620 = vpack.c.b16 %v596, %v595
      %v621 = vpack.c.b16 %v598, %v597
      %v622 = vpack.c.b16 %v600, %v599
      %v623 = vpack.c.b16 %v602, %v601
      %v624 = vpack.c.b16 %v604, %v603
      %v625 = vpack.c.b16 %v606, %v605
      %v626 = vpack.c.b16 %v608, %v607
      %v627 = vpack.c.b16 %v610, %v609
      %v628 = vpack.c.b16 %v612, %v611
      %v629 = vpack.c.b16 %v614, %v613
      %v630 = vpack.c.b16 %v616, %v615
      %v631 = vpack.c.b16 %v617, %v617
      %vm645 = vcmask 719872
      %v647 = vsel %vm645, %v469, 0
      %v650 = vsel %vm645, %v471, 0
      %v653 = vsel %vm645, %v473, 0
      %v656 = vsel %vm645, %v475, 0
      %v659 = vsel %vm645, %v477, 0
      %v662 = vsel %vm645, %v479, 0
      %v665 = vsel %vm645, %v481, 0
      %v668 = vsel %vm645, %v483, 0
      %v671 = vsel %vm645, %v485, 0
      %v674 = vsel %vm645, %v487, 0
      %v677 = vsel %vm645, %v489, 0
      %v680 = vsel %vm645, %v491, 0
      %v683 = vsel %vm645, %v493, 0
      %v686 = vsel %vm645, %v495, 0
      %v689 = vsel %vm645, %v497, 0
      %v692 = vsel %vm645, %v499, 0
      %v695 = vsel %vm645, %v501, 0
      %v698 = vsel %vm645, %v503, 0
      %v701 = vsel %vm645, %v505, 0
      %v704 = vsel %vm645, %v507, 0
      %v707 = vsel %vm645, %v509, 0
      %v710 = vsel %vm645, %v511, 0
      %v713 = vsel %vm645, %v513, 0
      %v716 = vsel %vm645, %v515, 0
      %v719 = vsel %vm645, %v517, 0
      %v722 = vsel %vm645, %v519, 0
      %v725 = vsel %vm645, %v521, 0
      %v728 = vsel %vm645, %v523, 0
      %v731 = vsel %vm645, %v525, 0
      %v734 = vsel %vm645, %v527, 0
      %v737 = vsel %vm645, %v529, 0
      %v740 = vsel %vm645, %v531, 0
      %vm742 = vcmask 1043456
      %v744 = vsel %vm742, %v631, 0
      %746 = vmatprep.subr.bf16.mxu0 0
      %747 = vmatpush1.bf16.msra.mxu0 %v618
      %748 = vmatprep.subr.bf16.mxu0 0
      %749 = vmatpush1.bf16.msra.mxu0 %v619
      %750 = vmatprep.subr.bf16.mxu0 0
      %751 = vmatpush1.bf16.msra.mxu0 %v620
      %752 = vmatprep.subr.bf16.mxu0 0
      %753 = vmatpush1.bf16.msra.mxu0 %v621
      %754 = vmatprep.subr.bf16.mxu0 0
      %755 = vmatpush1.bf16.msra.mxu0 %v622
      %756 = vmatprep.subr.bf16.mxu0 0
      %757 = vmatpush1.bf16.msra.mxu0 %v623
      %758 = vmatprep.subr.bf16.mxu0 0
      %759 = vmatpush1.bf16.msra.mxu0 %v624
      %760 = vmatprep.subr.bf16.mxu0 0
      %761 = vmatpush1.bf16.msra.mxu0 %v625
      %762 = vmatprep.subr.bf16.mxu0 0
      %763 = vmatpush1.bf16.msra.mxu0 %v626
      %764 = vmatprep.subr.bf16.mxu0 0
      %765 = vmatpush1.bf16.msra.mxu0 %v627
      %766 = vmatprep.subr.bf16.mxu0 0
      %767 = vmatpush1.bf16.msra.mxu0 %v628
      %768 = vmatprep.subr.bf16.mxu0 0
      %769 = vmatpush1.bf16.msra.mxu0 %v629
      %770 = vmatprep.subr.bf16.mxu0 0
      %771 = vmatpush1.bf16.msra.mxu0 %v630
      %772 = vmatprep.subr.bf16.mxu0 0
      %773 = vmatpush1.bf16.msra.mxu0 %v744
      %774 = vmatprep.subr.bf16.mxu0 0
      %775 = vmatpush1.bf16.msra.mxu0 0
      %776 = vmatprep.subr.bf16.mxu0 0
      %777 = vmatpush1.bf16.msra.mxu0 0
      %778 = vmatprep.mubr.bf16.mxu0 %v647
      %779 = vmatmul.mubr.bf16.gmra.mrb[0].mxu0 %v468
      %v780 = vpop.f32.mrb[0].mxu0
      %v781 = vadd.f32 %v274, %v780
      %v782 = vpop.f32.mrb[0].mxu0
      %v783 = vpop.f32.mrb[0].mxu0
      %v784 = vadd.f32 %v274, %v783
      %v785 = vpop.f32.mrb[0].mxu0
      %786 = vmatprep.mubr.bf16.mxu0 %v650
      %787 = vmatmul.mubr.bf16.gmra.mrb[0].mxu0 %v470
      %v788 = vpop.f32.mrb[0].mxu0
      %v789 = vadd.f32 %v274, %v788
      %v790 = vpop.f32.mrb[0].mxu0
      %v791 = vpop.f32.mrb[0].mxu0
      %v792 = vadd.f32 %v274, %v791
      %v793 = vpop.f32.mrb[0].mxu0
      %794 = vmatprep.mubr.bf16.mxu0 %v653
      %795 = vmatmul.mubr.bf16.gmra.mrb[0].mxu0 %v472
      %v796 = vpop.f32.mrb[0].mxu0
      %v797 = vadd.f32 %v274, %v796
      %v798 = vpop.f32.mrb[0].mxu0
      %v799 = vpop.f32.mrb[0].mxu0
      %v800 = vadd.f32 %v274, %v799
      %v801 = vpop.f32.mrb[0].mxu0
      %802 = vmatprep.mubr.bf16.mxu0 %v656
      %803 = vmatmul.mubr.bf16.gmra.mrb[0].mxu0 %v474
      %v804 = vpop.f32.mrb[0].mxu0
      %v805 = vadd.f32 %v274, %v804
      %v806 = vpop.f32.mrb[0].mxu0
      %v807 = vpop.f32.mrb[0].mxu0
      %v808 = vadd.f32 %v274, %v807
      %v809 = vpop.f32.mrb[0].mxu0
      %810 = vmatprep.mubr.bf16.mxu0 %v659
      %811 = vmatmul.mubr.bf16.gmra.mrb[0].mxu0 %v476
      %v812 = vpop.f32.mrb[0].mxu0
      %v813 = vadd.f32 %v274, %v812
      %v814 = vpop.f32.mrb[0].mxu0
      %v815 = vpop.f32.mrb[0].mxu0
      %v816 = vadd.f32 %v274, %v815
      %v817 = vpop.f32.mrb[0].mxu0
      %818 = vmatprep.mubr.bf16.mxu0 %v662
      %819 = vmatmul.mubr.bf16.gmra.mrb[0].mxu0 %v478
      %v820 = vpop.f32.mrb[0].mxu0
      %v821 = vadd.f32 %v274, %v820
      %v822 = vpop.f32.mrb[0].mxu0
      %v823 = vpop.f32.mrb[0].mxu0
      %v824 = vadd.f32 %v274, %v823
      %v825 = vpop.f32.mrb[0].mxu0
      %826 = vmatprep.mubr.bf16.mxu0 %v665
      %827 = vmatmul.mubr.bf16.gmra.mrb[0].mxu0 %v480
      %v828 = vpop.f32.mrb[0].mxu0
      %v829 = vadd.f32 %v274, %v828
      %v830 = vpop.f32.mrb[0].mxu0
      %v831 = vpop.f32.mrb[0].mxu0
      %v832 = vadd.f32 %v274, %v831
      %v833 = vpop.f32.mrb[0].mxu0
      %834 = vmatprep.mubr.bf16.mxu0 %v668
      %835 = vmatmul.mubr.bf16.gmra.mrb[0].mxu0 %v482
      %v836 = vpop.f32.mrb[0].mxu0
      %v837 = vadd.f32 %v274, %v836
      %v838 = vpop.f32.mrb[0].mxu0
      %v839 = vpop.f32.mrb[0].mxu0
      %v840 = vadd.f32 %v274, %v839
      %v841 = vpop.f32.mrb[0].mxu0
      %842 = vmatprep.mubr.bf16.mxu0 %v671
      %843 = vmatmul.mubr.bf16.gmra.mrb[0].mxu0 %v484
      %v844 = vpop.f32.mrb[0].mxu0
      %v845 = vadd.f32 %v274, %v844
      %v846 = vpop.f32.mrb[0].mxu0
      %v847 = vpop.f32.mrb[0].mxu0
      %v848 = vadd.f32 %v274, %v847
      %v849 = vpop.f32.mrb[0].mxu0
      %850 = vmatprep.mubr.bf16.mxu0 %v674
      %851 = vmatmul.mubr.bf16.gmra.mrb[0].mxu0 %v486
      %v852 = vpop.f32.mrb[0].mxu0
      %v853 = vadd.f32 %v274, %v852
      %v854 = vpop.f32.mrb[0].mxu0
      %v855 = vpop.f32.mrb[0].mxu0
      %v856 = vadd.f32 %v274, %v855
      %v857 = vpop.f32.mrb[0].mxu0
      %858 = vmatprep.mubr.bf16.mxu0 %v677
      %859 = vmatmul.mubr.bf16.gmra.mrb[0].mxu0 %v488
      %v860 = vpop.f32.mrb[0].mxu0
      %v861 = vadd.f32 %v274, %v860
      %v862 = vpop.f32.mrb[0].mxu0
      %v863 = vpop.f32.mrb[0].mxu0
      %v864 = vadd.f32 %v274, %v863
      %v865 = vpop.f32.mrb[0].mxu0
      %866 = vmatprep.mubr.bf16.mxu0 %v680
      %867 = vmatmul.mubr.bf16.gmra.mrb[0].mxu0 %v490
      %v868 = vpop.f32.mrb[0].mxu0
      %v869 = vadd.f32 %v274, %v868
      %v870 = vpop.f32.mrb[0].mxu0
      %v871 = vpop.f32.mrb[0].mxu0
      %v872 = vadd.f32 %v274, %v871
      %v873 = vpop.f32.mrb[0].mxu0
      %874 = vmatprep.mubr.bf16.mxu0 %v683
      %875 = vmatmul.mubr.bf16.gmra.mrb[0].mxu0 %v492
      %v876 = vpop.f32.mrb[0].mxu0
      %v877 = vadd.f32 %v274, %v876
      %v878 = vpop.f32.mrb[0].mxu0
      %v879 = vpop.f32.mrb[0].mxu0
      %v880 = vadd.f32 %v274, %v879
      %v881 = vpop.f32.mrb[0].mxu0
      %882 = vmatprep.mubr.bf16.mxu0 %v686
      %883 = vmatmul.mubr.bf16.gmra.mrb[0].mxu0 %v494
      %v884 = vpop.f32.mrb[0].mxu0
      %v885 = vadd.f32 %v274, %v884
      %v886 = vpop.f32.mrb[0].mxu0
      %v887 = vpop.f32.mrb[0].mxu0
      %v888 = vadd.f32 %v274, %v887
      %v889 = vpop.f32.mrb[0].mxu0
      %890 = vmatprep.mubr.bf16.mxu0 %v689
      %891 = vmatmul.mubr.bf16.gmra.mrb[0].mxu0 %v496
      %v892 = vpop.f32.mrb[0].mxu0
      %v893 = vadd.f32 %v274, %v892
      %v894 = vpop.f32.mrb[0].mxu0
      %v895 = vpop.f32.mrb[0].mxu0
      %v896 = vadd.f32 %v274, %v895
      %v897 = vpop.f32.mrb[0].mxu0
      %898 = vmatprep.mubr.bf16.mxu0 %v692
      %899 = vmatmul.mubr.bf16.gmra.mrb[0].mxu0 %v498
      %v900 = vpop.f32.mrb[0].mxu0
      %v901 = vadd.f32 %v274, %v900
      %v902 = vpop.f32.mrb[0].mxu0
      %v903 = vpop.f32.mrb[0].mxu0
      %v904 = vadd.f32 %v274, %v903
      %v905 = vpop.f32.mrb[0].mxu0
      %906 = vmatprep.mubr.bf16.mxu0 %v695
      %907 = vmatmul.mubr.bf16.gmra.mrb[0].mxu0 %v500
      %v908 = vpop.f32.mrb[0].mxu0
      %v909 = vadd.f32 %v274, %v908
      %v910 = vpop.f32.mrb[0].mxu0
      %v911 = vpop.f32.mrb[0].mxu0
      %v912 = vadd.f32 %v274, %v911
      %v913 = vpop.f32.mrb[0].mxu0
      %914 = vmatprep.mubr.bf16.mxu0 %v698
      %915 = vmatmul.mubr.bf16.gmra.mrb[0].mxu0 %v502
      %v916 = vpop.f32.mrb[0].mxu0
      %v917 = vadd.f32 %v274, %v916
      %v918 = vpop.f32.mrb[0].mxu0
      %v919 = vpop.f32.mrb[0].mxu0
      %v920 = vadd.f32 %v274, %v919
      %v921 = vpop.f32.mrb[0].mxu0
      %922 = vmatprep.mubr.bf16.mxu0 %v701
      %923 = vmatmul.mubr.bf16.gmra.mrb[0].mxu0 %v504
      %v924 = vpop.f32.mrb[0].mxu0
      %v925 = vadd.f32 %v274, %v924
      %v926 = vpop.f32.mrb[0].mxu0
      %v927 = vpop.f32.mrb[0].mxu0
      %v928 = vadd.f32 %v274, %v927
      %v929 = vpop.f32.mrb[0].mxu0
      %930 = vmatprep.mubr.bf16.mxu0 %v704
      %931 = vmatmul.mubr.bf16.gmra.mrb[0].mxu0 %v506
      %v932 = vpop.f32.mrb[0].mxu0
      %v933 = vadd.f32 %v274, %v932
      %v934 = vpop.f32.mrb[0].mxu0
      %v935 = vpop.f32.mrb[0].mxu0
      %v936 = vadd.f32 %v274, %v935
      %v937 = vpop.f32.mrb[0].mxu0
      %938 = vmatprep.mubr.bf16.mxu0 %v707
      %939 = vmatmul.mubr.bf16.gmra.mrb[0].mxu0 %v508
      %v940 = vpop.f32.mrb[0].mxu0
      %v941 = vadd.f32 %v274, %v940
      %v942 = vpop.f32.mrb[0].mxu0
      %v943 = vpop.f32.mrb[0].mxu0
      %v944 = vadd.f32 %v274, %v943
      %v945 = vpop.f32.mrb[0].mxu0
      %946 = vmatprep.mubr.bf16.mxu0 %v710
      %947 = vmatmul.mubr.bf16.gmra.mrb[0].mxu0 %v510
      %v948 = vpop.f32.mrb[0].mxu0
      %v949 = vadd.f32 %v274, %v948
      %v950 = vpop.f32.mrb[0].mxu0
      %v951 = vpop.f32.mrb[0].mxu0
      %v952 = vadd.f32 %v274, %v951
      %v953 = vpop.f32.mrb[0].mxu0
      %954 = vmatprep.mubr.bf16.mxu0 %v713
      %955 = vmatmul.mubr.bf16.gmra.mrb[0].mxu0 %v512
      %v956 = vpop.f32.mrb[0].mxu0
      %v957 = vadd.f32 %v274, %v956
      %v958 = vpop.f32.mrb[0].mxu0
      %v959 = vpop.f32.mrb[0].mxu0
      %v960 = vadd.f32 %v274, %v959
      %v961 = vpop.f32.mrb[0].mxu0
      %962 = vmatprep.mubr.bf16.mxu0 %v716
      %963 = vmatmul.mubr.bf16.gmra.mrb[0].mxu0 %v514
      %v964 = vpop.f32.mrb[0].mxu0
      %v965 = vadd.f32 %v274, %v964
      %v966 = vpop.f32.mrb[0].mxu0
      %v967 = vpop.f32.mrb[0].mxu0
      %v968 = vadd.f32 %v274, %v967
      %v969 = vpop.f32.mrb[0].mxu0
      %970 = vmatprep.mubr.bf16.mxu0 %v719
      %971 = vmatmul.mubr.bf16.gmra.mrb[0].mxu0 %v516
      %v972 = vpop.f32.mrb[0].mxu0
      %v973 = vadd.f32 %v274, %v972
      %v974 = vpop.f32.mrb[0].mxu0
      %v975 = vpop.f32.mrb[0].mxu0
      %v976 = vadd.f32 %v274, %v975
      %v977 = vpop.f32.mrb[0].mxu0
      %978 = vmatprep.mubr.bf16.mxu0 %v722
      %979 = vmatmul.mubr.bf16.gmra.mrb[0].mxu0 %v518
      %v980 = vpop.f32.mrb[0].mxu0
      %v981 = vadd.f32 %v274, %v980
      %v982 = vpop.f32.mrb[0].mxu0
      %v983 = vpop.f32.mrb[0].mxu0
      %v984 = vadd.f32 %v274, %v983
      %v985 = vpop.f32.mrb[0].mxu0
      %986 = vmatprep.mubr.bf16.mxu0 %v725
      %987 = vmatmul.mubr.bf16.gmra.mrb[0].mxu0 %v520
      %v988 = vpop.f32.mrb[0].mxu0
      %v989 = vadd.f32 %v274, %v988
      %v990 = vpop.f32.mrb[0].mxu0
      %v991 = vpop.f32.mrb[0].mxu0
      %v992 = vadd.f32 %v274, %v991
      %v993 = vpop.f32.mrb[0].mxu0
      %994 = vmatprep.mubr.bf16.mxu0 %v728
      %995 = vmatmul.mubr.bf16.gmra.mrb[0].mxu0 %v522
      %v996 = vpop.f32.mrb[0].mxu0
      %v997 = vadd.f32 %v274, %v996
      %v998 = vpop.f32.mrb[0].mxu0
      %v999 = vpop.f32.mrb[0].mxu0
      %v1000 = vadd.f32 %v274, %v999
      %v1001 = vpop.f32.mrb[0].mxu0
      %1002 = vmatprep.mubr.bf16.mxu0 %v731
      %1003 = vmatmul.mubr.bf16.gmra.mrb[0].mxu0 %v524
      %v1004 = vpop.f32.mrb[0].mxu0
      %v1005 = vadd.f32 %v274, %v1004
      %v1006 = vpop.f32.mrb[0].mxu0
      %v1007 = vpop.f32.mrb[0].mxu0
      %v1008 = vadd.f32 %v274, %v1007
      %v1009 = vpop.f32.mrb[0].mxu0
      %1010 = vmatprep.mubr.bf16.mxu0 %v734
      %1011 = vmatmul.mubr.bf16.gmra.mrb[0].mxu0 %v526
      %v1012 = vpop.f32.mrb[0].mxu0
      %v1013 = vadd.f32 %v274, %v1012
      %v1014 = vpop.f32.mrb[0].mxu0
      %v1015 = vpop.f32.mrb[0].mxu0
      %v1016 = vadd.f32 %v274, %v1015
      %v1017 = vpop.f32.mrb[0].mxu0
      %1018 = vmatprep.mubr.bf16.mxu0 %v737
      %1019 = vmatmul.mubr.bf16.gmra.mrb[0].mxu0 %v528
      %v1020 = vpop.f32.mrb[0].mxu0
      %v1021 = vadd.f32 %v274, %v1020
      %v1022 = vpop.f32.mrb[0].mxu0
      %v1023 = vpop.f32.mrb[0].mxu0
      %v1024 = vadd.f32 %v274, %v1023
      %v1025 = vpop.f32.mrb[0].mxu0
      %1026 = vmatprep.mubr.bf16.mxu0 %v740
      %1027 = vmatmul.mubr.bf16.gmra.mrb[0].mxu0 %v530
      %v1028 = vpop.f32.mrb[0].mxu0
      %v1029 = vadd.f32 %v274, %v1028
      %v1030 = vpop.f32.mrb[0].mxu0
      %v1031 = vpop.f32.mrb[0].mxu0
      %v1032 = vadd.f32 %v274, %v1031
      %v1033 = vpop.f32.mrb[0].mxu0
      %1034 = vdwg.mxu0
      %v1035 = vmax.f32 %v781, 0.0
      %v1036 = vmax.f32 %v784, 0.0
      %v1037 = vmax.f32 %v789, 0.0
      %v1038 = vmax.f32 %v792, 0.0
      %v1039 = vmax.f32 %v797, 0.0
      %v1040 = vmax.f32 %v800, 0.0
      %v1041 = vmax.f32 %v805, 0.0
      %v1042 = vmax.f32 %v808, 0.0
      %v1043 = vmax.f32 %v813, 0.0
      %v1044 = vmax.f32 %v816, 0.0
      %v1045 = vmax.f32 %v821, 0.0
      %v1046 = vmax.f32 %v824, 0.0
      %v1047 = vmax.f32 %v829, 0.0
      %v1048 = vmax.f32 %v832, 0.0
      %v1049 = vmax.f32 %v837, 0.0
      %v1050 = vmax.f32 %v840, 0.0
      %v1051 = vmax.f32 %v845, 0.0
      %v1052 = vmax.f32 %v848, 0.0
      %v1053 = vmax.f32 %v853, 0.0
      %v1054 = vmax.f32 %v856, 0.0
      %v1055 = vmax.f32 %v861, 0.0
      %v1056 = vmax.f32 %v864, 0.0
      %v1057 = vmax.f32 %v869, 0.0
      %v1058 = vmax.f32 %v872, 0.0
      %v1059 = vmax.f32 %v877, 0.0
      %v1060 = vmax.f32 %v880, 0.0
      %v1061 = vmax.f32 %v885, 0.0
      %v1062 = vmax.f32 %v888, 0.0
      %v1063 = vmax.f32 %v893, 0.0
      %v1064 = vmax.f32 %v896, 0.0
      %v1065 = vmax.f32 %v901, 0.0
      %v1066 = vmax.f32 %v904, 0.0
      %v1067 = vmax.f32 %v909, 0.0
      %v1068 = vmax.f32 %v912, 0.0
      %v1069 = vmax.f32 %v917, 0.0
      %v1070 = vmax.f32 %v920, 0.0
      %v1071 = vmax.f32 %v925, 0.0
      %v1072 = vmax.f32 %v928, 0.0
      %v1073 = vmax.f32 %v933, 0.0
      %v1074 = vmax.f32 %v936, 0.0
      %v1075 = vmax.f32 %v941, 0.0
      %v1076 = vmax.f32 %v944, 0.0
      %v1077 = vmax.f32 %v949, 0.0
      %v1078 = vmax.f32 %v952, 0.0
      %v1079 = vmax.f32 %v957, 0.0
      %v1080 = vmax.f32 %v960, 0.0
      %v1081 = vmax.f32 %v965, 0.0
      %v1082 = vmax.f32 %v968, 0.0
      %v1083 = vmax.f32 %v973, 0.0
      %v1084 = vmax.f32 %v976, 0.0
      %v1085 = vmax.f32 %v981, 0.0
      %v1086 = vmax.f32 %v984, 0.0
      %v1087 = vmax.f32 %v989, 0.0
      %v1088 = vmax.f32 %v992, 0.0
      %v1089 = vmax.f32 %v997, 0.0
      %v1090 = vmax.f32 %v1000, 0.0
      %v1091 = vmax.f32 %v1005, 0.0
      %v1092 = vmax.f32 %v1008, 0.0
      %v1093 = vmax.f32 %v1013, 0.0
      %v1094 = vmax.f32 %v1016, 0.0
      %v1095 = vmax.f32 %v1021, 0.0
      %v1096 = vmax.f32 %v1024, 0.0
      %v1097 = vmax.f32 %v1029, 0.0
      %v1098 = vmax.f32 %v1032, 0.0
      %vm1099 = vcmask 64512
      %1100 = vst.msk [vmem:[%s175] sm:$0xff] %vm1099, %v1035
      %1101 = vst.msk [vmem:[%s175 + $0x8] sm:$0xff] %vm1099, %v1036
      %1102 = vst.msk [vmem:[%s175 + $0x10] sm:$0xff] %vm1099, %v1037
      %1103 = vst.msk [vmem:[%s175 + $0x18] sm:$0xff] %vm1099, %v1038
      %1104 = vst.msk [vmem:[%s175 + $0x20] sm:$0xff] %vm1099, %v1039
      %1105 = vst.msk [vmem:[%s175 + $0x28] sm:$0xff] %vm1099, %v1040
      %1106 = vst.msk [vmem:[%s175 + $0x30] sm:$0xff] %vm1099, %v1041
      %1107 = vst.msk [vmem:[%s175 + $0x38] sm:$0xff] %vm1099, %v1042
      %1108 = vst.msk [vmem:[%s175 + $0x40] sm:$0xff] %vm1099, %v1043
      %1109 = vst.msk [vmem:[%s175 + $0x48] sm:$0xff] %vm1099, %v1044
      %1110 = vst.msk [vmem:[%s175 + $0x50] sm:$0xff] %vm1099, %v1045
      %1111 = vst.msk [vmem:[%s175 + $0x58] sm:$0xff] %vm1099, %v1046
      %1112 = vst.msk [vmem:[%s175 + $0x60] sm:$0xff] %vm1099, %v1047
      %1113 = vst.msk [vmem:[%s175 + $0x68] sm:$0xff] %vm1099, %v1048
      %1114 = vst.msk [vmem:[%s175 + $0x70] sm:$0xff] %vm1099, %v1049
      %1115 = vst.msk [vmem:[%s175 + $0x78] sm:$0xff] %vm1099, %v1050
      %1116 = vst.msk [vmem:[%s175 + $0x80] sm:$0xff] %vm1099, %v1051
      %1117 = vst.msk [vmem:[%s175 + $0x88] sm:$0xff] %vm1099, %v1052
      %1118 = vst.msk [vmem:[%s175 + $0x90] sm:$0xff] %vm1099, %v1053
      %1119 = vst.msk [vmem:[%s175 + $0x98] sm:$0xff] %vm1099, %v1054
      %1120 = vst.msk [vmem:[%s175 + $0xa0] sm:$0xff] %vm1099, %v1055
      %1121 = vst.msk [vmem:[%s175 + $0xa8] sm:$0xff] %vm1099, %v1056
      %1122 = vst.msk [vmem:[%s175 + $0xb0] sm:$0xff] %vm1099, %v1057
      %1123 = vst.msk [vmem:[%s175 + $0xb8] sm:$0xff] %vm1099, %v1058
      %1124 = vst.msk [vmem:[%s175 + $0xc0] sm:$0xff] %vm1099, %v1059
      %1125 = vst.msk [vmem:[%s175 + $0xc8] sm:$0xff] %vm1099, %v1060
      %1126 = vst.msk [vmem:[%s175 + $0xd0] sm:$0xff] %vm1099, %v1061
      %1127 = vst.msk [vmem:[%s175 + $0xd8] sm:$0xff] %vm1099, %v1062
      %1128 = vst.msk [vmem:[%s175 + $0xe0] sm:$0xff] %vm1099, %v1063
      %1129 = vst.msk [vmem:[%s175 + $0xe8] sm:$0xff] %vm1099, %v1064
      %1130 = vst.msk [vmem:[%s175 + $0xf0] sm:$0xff] %vm1099, %v1065
      %1131 = vst.msk [vmem:[%s175 + $0xf8] sm:$0xff] %vm1099, %v1066
      %1132 = vst.msk [vmem:[%s175 + $0x100] sm:$0xff] %vm1099, %v1067
      %1133 = vst.msk [vmem:[%s175 + $0x108] sm:$0xff] %vm1099, %v1068
      %1134 = vst.msk [vmem:[%s175 + $0x110] sm:$0xff] %vm1099, %v1069
      %1135 = vst.msk [vmem:[%s175 + $0x118] sm:$0xff] %vm1099, %v1070
      %1136 = vst.msk [vmem:[%s175 + $0x120] sm:$0xff] %vm1099, %v1071
      %1137 = vst.msk [vmem:[%s175 + $0x128] sm:$0xff] %vm1099, %v1072
      %1138 = vst.msk [vmem:[%s175 + $0x130] sm:$0xff] %vm1099, %v1073
      %1139 = vst.msk [vmem:[%s175 + $0x138] sm:$0xff] %vm1099, %v1074
      %1140 = vst.msk [vmem:[%s175 + $0x140] sm:$0xff] %vm1099, %v1075
      %1141 = vst.msk [vmem:[%s175 + $0x148] sm:$0xff] %vm1099, %v1076
      %1142 = vst.msk [vmem:[%s175 + $0x150] sm:$0xff] %vm1099, %v1077
      %1143 = vst.msk [vmem:[%s175 + $0x158] sm:$0xff] %vm1099, %v1078
      %1144 = vst.msk [vmem:[%s175 + $0x160] sm:$0xff] %vm1099, %v1079
      %1145 = vst.msk [vmem:[%s175 + $0x168] sm:$0xff] %vm1099, %v1080
      %1146 = vst.msk [vmem:[%s175 + $0x170] sm:$0xff] %vm1099, %v1081
      %1147 = vst.msk [vmem:[%s175 + $0x178] sm:$0xff] %vm1099, %v1082
      %1148 = vst.msk [vmem:[%s175 + $0x180] sm:$0xff] %vm1099, %v1083
      %1149 = vst.msk [vmem:[%s175 + $0x188] sm:$0xff] %vm1099, %v1084
      %1150 = vst.msk [vmem:[%s175 + $0x190] sm:$0xff] %vm1099, %v1085
      %1151 = vst.msk [vmem:[%s175 + $0x198] sm:$0xff] %vm1099, %v1086
      %1152 = vst.msk [vmem:[%s175 + $0x1a0] sm:$0xff] %vm1099, %v1087
      %1153 = vst.msk [vmem:[%s175 + $0x1a8] sm:$0xff] %vm1099, %v1088
      %1154 = vst.msk [vmem:[%s175 + $0x1b0] sm:$0xff] %vm1099, %v1089
      %1155 = vst.msk [vmem:[%s175 + $0x1b8] sm:$0xff] %vm1099, %v1090
      %1156 = vst.msk [vmem:[%s175 + $0x1c0] sm:$0xff] %vm1099, %v1091
      %1157 = vst.msk [vmem:[%s175 + $0x1c8] sm:$0xff] %vm1099, %v1092
      %1158 = vst.msk [vmem:[%s175 + $0x1d0] sm:$0xff] %vm1099, %v1093
      %1159 = vst.msk [vmem:[%s175 + $0x1d8] sm:$0xff] %vm1099, %v1094
      %1160 = vst.msk [vmem:[%s175 + $0x1e0] sm:$0xff] %vm1099, %v1095
      %1161 = vst.msk [vmem:[%s175 + $0x1e8] sm:$0xff] %vm1099, %v1096
      %1162 = vst.msk [vmem:[%s175 + $0x1f0] sm:$0xff] %vm1099, %v1097
      %1163 = vst.msk [vmem:[%s175 + $0x1f8] sm:$0xff] %vm1099, %v1098
      %s1164 = smul.u32 64, %s14
      %p1165 = scmp.lt.s32.totalorder %s1164, 255
      %s1166 = scalar_select %p1165, %s1164, 255
      %s1167 = smul.addr %s1166, 8
      %s1168 = scalar_lea.vmem %s3, %s1167
      // Predicated region
      $region33: #{octave_3d_cnn_forward.5} parent=31 // pred_check
        %p1169 = pneg %p100
      $region34: #{octave_3d_cnn_forward.5} parent=31 // pred_check_branch
        %1171 = sbr.rel (%p1169) target = $region36
      $region35: #{octave_3d_cnn_forward.5} parent=31 // pred_region
        %s1172 = smul.u32 64, %s14
      $region36: #{octave_3d_cnn_forward.5} parent=31 // pred_fallthru
        _
    $region32: #{octave_3d_cnn_forward.5} parent=5 // pred_fallthru
      _
    %p1173 = scmp.le.s32.totalorder 2, %s9
    // Predicated region
    $region37: #{octave_3d_cnn_forward.5} parent=5 // pred_check
      %p1174 = pneg %p1173
    $region38: #{octave_3d_cnn_forward.5} parent=5 // pred_check_branch
      %1176 = sbr.rel (%p1174) target = $region40
    $region39: #{octave_3d_cnn_forward.5} parent=5 // pred_region
      %s1177 = ssub.s32 %s9, 2
      // Predicated region
      $region41: #{octave_3d_cnn_forward.5} parent=39 // pred_check
        %p1178 = pneg %p106
      $region42: #{octave_3d_cnn_forward.5} parent=39 // pred_check_branch
        %1180 = sbr.rel (%p1178) target = $region44
      $region43: #{octave_3d_cnn_forward.5} parent=39 // pred_region
        %s1181 = smul.u32 64, %s15
        %p1182 = scmp.lt.s32.totalorder %s1181, 255
        %s1183 = scalar_select %p1182, %s1181, 255
        %s1184 = smul.addr %s1183, 8
        %s1185 = scalar_lea.vmem %s3, %s1184
      $region44: #{octave_3d_cnn_forward.5} parent=39 // pred_fallthru
        _
    $region40: #{octave_3d_cnn_forward.5} parent=5 // pred_fallthru
      _
  $region6: #{octave_3d_cnn_forward.5} parent=0 // loop_footer
    %s13 = sadd.s32 1, %s9
  $region7: #{octave_3d_cnn_forward.5} parent=0 // loop_footer_branch
    %8 = sbr.rel target = $region3
  $region8: #{octave_3d_cnn_forward.5} parent=0 // loop_exit
    _

// kernel: octave_3d_cnn_forward.6
$region0: #{octave_3d_cnn_forward.6}
  #allocation0 [shape = 'u32[]', space=smem, size = 0x4, offset = 0x4, fixed_abs, tag = 'smem constant byte address 0x4 - core index']
  #allocation1 [shape = 'u32[144,128]{1,0:T(1,128)}', space=vmem, size = 0x12000, scoped, tag = 'internal scratch']
  %s0 = inlined_call_operand.vmem [shape: bf16[256,216], index: 0, kind: input, shape index: {}]
  %s1 = inlined_call_operand.vmem [shape: bf16[216,132], index: 1, kind: input, shape index: {}]
  %s2 = inlined_call_operand.vmem [shape: f32[1,132], index: 2, kind: input, shape index: {}]
  %s3 = inlined_call_operand.vmem [shape: f32[256,132], index: 3, kind: output, shape index: {}]
  %s4 = sld [smem:[#allocation0]]
  $region45: #{octave_3d_cnn_forward.6} parent=0
    _
  %s6 = ssub.s32 1, %s4
  %s7 = scalar_select 0, %s6, %s4
  loop: start=0, step=1, limit=4
  $region2: #{octave_3d_cnn_forward.6} parent=0 // loop_pre_header
    _
  $region3: #{octave_3d_cnn_forward.6} parent=0 // loop_header
    %s9 = sphi 0, %s13
    %p10 = scmp.ge.s32.totalorder %s9, 4
    %s19 = sphi 0, %s21
    %s22 = sphi 0, %s19
    %s23 = sphi 0, %s22
    %s39 = sphi 0, %s23
    %s43 = sphi 0, %s43
    %s45 = sphi 0, %s43
    %s46 = sphi 0, %s45
    %s60 = sphi 0, %s46
    %s64 = sphi 0, %s64
    %s66 = sphi 0, %s64
    %s67 = sphi 0, %s66
    %s81 = sphi 0, %s67
    %s87 = sphi 0, %s89
    %s90 = sphi 0, %s87
    %s91 = sphi 0, %s90
    %s107 = sphi 0, %s91
  $region4: #{octave_3d_cnn_forward.6} parent=0 // loop_header_branch
    %12 = sbr.rel (%p10) target = $region8
  $region5: #{octave_3d_cnn_forward.6} parent=0 // loop_body
    %s14 = ssub.s32 %s9, 1
    %s15 = ssub.s32 %s9, 2
    %s16 = sadd.s32 %s9, 1
    %s17 = ssub.s32 %s9, %s16
    %p18 = scmp.eq.s32.totalorder %s17, 0
    %s20 = sadd.s32 %s19, 1
    %s21 = scalar_select %p18, %s19, %s20
    %p24 = pneg %p18
    %p25 = scmp.eq.s32.totalorder %s9, 1
    %p26 = por %p24, %p25
    %p27 = scmp.ne.s32.totalorder %s19, %s22
    %p28 = scmp.eq.s32.totalorder %s9, 0
    %p29 = por %p27, %p28
    %p30 = scmp.ne.s32.totalorder %s19, %s22
    %p31 = scmp.eq.s32.totalorder %s14, 1
    %p32 = por %p30, %p31
    %p33 = scmp.ne.s32.totalorder %s22, %s23
    %p34 = scmp.eq.s32.totalorder %s14, 0
    %p35 = por %p33, %p34
    %p36 = scmp.ne.s32.totalorder %s22, %s23
    %p37 = scmp.eq.s32.totalorder %s15, 1
    %p38 = por %p36, %p37
    %p40 = scmp.ne.s32.totalorder %s23, %s39
    %p41 = scmp.eq.s32.totalorder %s15, 0
    %p42 = por %p40, %p41
    %s44 = sadd.s32 %s43, 1
    %p47 = scmp.eq.s32.totalorder %s9, 1
    %p48 = scmp.ne.s32.totalorder %s43, %s45
    %p49 = scmp.eq.s32.totalorder %s9, 0
    %p50 = por %p48, %p49
    %p51 = scmp.ne.s32.totalorder %s43, %s45
    %p52 = scmp.eq.s32.totalorder %s14, 1
    %p53 = por %p51, %p52
    %p54 = scmp.ne.s32.totalorder %s45, %s46
    %p55 = scmp.eq.s32.totalorder %s14, 0
    %p56 = por %p54, %p55
    %p57 = scmp.ne.s32.totalorder %s45, %s46
    %p58 = scmp.eq.s32.totalorder %s15, 1
    %p59 = por %p57, %p58
    %p61 = scmp.ne.s32.totalorder %s46, %s60
    %p62 = scmp.eq.s32.totalorder %s15, 0
    %p63 = por %p61, %p62
    %s65 = sadd.s32 %s64, 1
    %p68 = scmp.eq.s32.totalorder %s9, 1
    %p69 = scmp.ne.s32.totalorder %s64, %s66
    %p70 = scmp.eq.s32.totalorder %s9, 0
    %p71 = por %p69, %p70
    %p72 = scmp.ne.s32.totalorder %s64, %s66
    %p73 = scmp.eq.s32.totalorder %s14, 1
    %p74 = por %p72, %p73
    %p75 = scmp.ne.s32.totalorder %s66, %s67
    %p76 = scmp.eq.s32.totalorder %s14, 0
    %p77 = por %p75, %p76
    %p78 = scmp.ne.s32.totalorder %s66, %s67
    %p79 = scmp.eq.s32.totalorder %s15, 1
    %p80 = por %p78, %p79
    %p82 = scmp.ne.s32.totalorder %s67, %s81
    %p83 = scmp.eq.s32.totalorder %s15, 0
    %p84 = por %p82, %p83
    %s85 = ssub.s32 %s9, %s16
    %p86 = scmp.eq.s32.totalorder %s85, 0
    %s88 = sadd.s32 %s87, 1
    %s89 = scalar_select %p86, %s87, %s88
    %p92 = pneg %p86
    %p93 = scmp.eq.s32.totalorder %s9, 1
    %p94 = por %p92, %p93
    %p95 = scmp.ne.s32.totalorder %s87, %s90
    %p96 = scmp.eq.s32.totalorder %s9, 0
    %p97 = por %p95, %p96
    %p98 = scmp.ne.s32.totalorder %s87, %s90
    %p99 = scmp.eq.s32.totalorder %s14, 1
    %p100 = por %p98, %p99
    %p101 = scmp.ne.s32.totalorder %s90, %s91
    %p102 = scmp.eq.s32.totalorder %s14, 0
    %p103 = por %p101, %p102
    %p104 = scmp.ne.s32.totalorder %s90, %s91
    %p105 = scmp.eq.s32.totalorder %s15, 1
    %p106 = por %p104, %p105
    %p108 = scmp.ne.s32.totalorder %s91, %s107
    %p109 = scmp.eq.s32.totalorder %s15, 0
    %p110 = por %p108, %p109
    %p111 = scmp.le.s32.totalorder 1, %s9
    %p112 = scmp.lt.s32.totalorder %s9, 3
    %p113 = pnand %p111, %p112
    %p114 = pneg %p113
    // Predicated region
    $region9: #{octave_3d_cnn_forward.6} parent=5 // pred_check
      _
    $region10: #{octave_3d_cnn_forward.6} parent=5 // pred_check_branch
      %116 = sbr.rel (%p113) target = $region12
    $region11: #{octave_3d_cnn_forward.6} parent=5 // pred_region
      %s117 = ssub.s32 %s9, 1
      // Predicated region
      $region13: #{octave_3d_cnn_forward.6} parent=11 // pred_check
        %p118 = pneg %p56
      $region14: #{octave_3d_cnn_forward.6} parent=11 // pred_check_branch
        %120 = sbr.rel (%p118) target = $region16
      $region15: #{octave_3d_cnn_forward.6} parent=11 // pred_region
        _
      $region16: #{octave_3d_cnn_forward.6} parent=11 // pred_fallthru
        _
      // Predicated region
      $region17: #{octave_3d_cnn_forward.6} parent=11 // pred_check
        %p121 = pneg %p77
      $region18: #{octave_3d_cnn_forward.6} parent=11 // pred_check_branch
        %123 = sbr.rel (%p121) target = $region20
      $region19: #{octave_3d_cnn_forward.6} parent=11 // pred_region
        _
      $region20: #{octave_3d_cnn_forward.6} parent=11 // pred_fallthru
        _
    $region12: #{octave_3d_cnn_forward.6} parent=5 // pred_fallthru
      _
    %p124 = scmp.lt.s32.totalorder %s9, 2
    // Predicated region
    $region21: #{octave_3d_cnn_forward.6} parent=5 // pred_check
      %p125 = pneg %p124
    $region22: #{octave_3d_cnn_forward.6} parent=5 // pred_check_branch
      %127 = sbr.rel (%p125) target = $region24
    $region23: #{octave_3d_cnn_forward.6} parent=5 // pred_region
      // Predicated region
      $region25: #{octave_3d_cnn_forward.6} parent=23 // pred_check
        %p128 = pneg %p29
      $region26: #{octave_3d_cnn_forward.6} parent=23 // pred_check_branch
        %130 = sbr.rel (%p128) target = $region28
      $region27: #{octave_3d_cnn_forward.6} parent=23 // pred_region
        %s131 = smul.u32 16, %s9
        %p132 = scmp.lt.s32.totalorder %s131, 31
        %s133 = scalar_select %p132, %s131, 31
        %s134 = smul.addr %s133, 2
        %s135 = smul.addr %s134, 4
        %s136 = scalar_lea.vmem %s0, %s135
        %s137 = smul.u32 16, %s9
      $region28: #{octave_3d_cnn_forward.6} parent=23 // pred_fallthru
        _
    $region24: #{octave_3d_cnn_forward.6} parent=5 // pred_fallthru
      _
    %p138 = scmp.le.s32.totalorder 1, %s9
    %p139 = scmp.lt.s32.totalorder %s9, 3
    %p140 = pnand %p138, %p139
    %p141 = pneg %p140
    // Predicated region
    $region29: #{octave_3d_cnn_forward.6} parent=5 // pred_check
      _
    $region30: #{octave_3d_cnn_forward.6} parent=5 // pred_check_branch
      %143 = sbr.rel (%p140) target = $region32
    $region31: #{octave_3d_cnn_forward.6} parent=5 // pred_region
      %s144 = ssub.s32 %s9, 1
      %s145 = smul.u32 16, %s14
      %p146 = scmp.lt.s32.totalorder %s145, 31
      %s147 = scalar_select %p146, %s145, 31
      %s148 = smul.addr %s147, 2
      %s149 = smul.addr %s148, 4
      %s150 = scalar_lea.vmem %s0, %s149
      %p151 = pneg %p35
      %p152 = pneg %p32
      %p153 = pneg %p56
      %p154 = pneg %p53
      %p155 = pneg %p77
      %p156 = pneg %p74
      %p157 = pneg %p103
      %p158 = pneg %p100
      %s159 = smul.u32 16, %s14
      %p160 = scmp.lt.s32.totalorder %s159, 31
      %s161 = scalar_select %p160, %s159, 31
      %s162 = smul.addr %s161, 2
      %s163 = smul.addr %s162, 8
      %s164 = scalar_lea.vmem %s3, %s163
      %s165 = smul.u32 16, %s14
      %p166 = scmp.lt.s32.totalorder %s165, 31
      %s167 = scalar_select %p166, %s165, 31
      %s168 = smul.addr %s167, 2
      %s169 = smul.addr %s168, 4
      %s170 = scalar_lea.vmem %s0, %s169
      %s171 = smul.u32 16, %s14
      %s172 = smul.u32 16, %s14
      %p173 = scmp.lt.s32.totalorder %s172, 31
      %s174 = scalar_select %p173, %s172, 31
      %s175 = smul.addr %s174, 2
      %s176 = smul.addr %s175, 8
      %s177 = scalar_lea.vmem %s3, %s176
      %s178 = smul.u32 16, %s14
      %v180 = vld [vmem:[%s170] sm:$0xff]
      %v181 = vld [vmem:[%s170 + $0x8] sm:$0xff]
      %v182 = vld [vmem:[%s170 + $0x10] sm:$0xff]
      %v183 = vld [vmem:[%s170 + $0x18] sm:$0xff]
      %v184 = vld [vmem:[%s170 + $0x20] sm:$0xff]
      %v185 = vld [vmem:[%s170 + $0x28] sm:$0xff]
      %v186 = vld [vmem:[%s170 + $0x30] sm:$0xff]
      %v187 = vld [vmem:[%s170 + $0x38] sm:$0xff]
      %v188 = vld [vmem:[%s170 + $0x40] sm:$0xff]
      %v189 = vld [vmem:[%s170 + $0x48] sm:$0xff]
      %v190 = vld [vmem:[%s170 + $0x50] sm:$0xff]
      %v191 = vld [vmem:[%s170 + $0x58] sm:$0xff]
      %v192 = vld [vmem:[%s170 + $0x60] sm:$0xff]
      %v193 = vld [vmem:[%s170 + $0x68] sm:$0xff]
      %v194 = vld [vmem:[%s170 + $0x70] sm:$0xff]
      %v195 = vld [vmem:[%s170 + $0x78] sm:$0xff]
      %v196 = vld [vmem:[%s1] sm:$0xff]
      %v197 = vld [vmem:[%s1 + $0x8] sm:$0xff]
      %v198 = vld [vmem:[%s1 + $0x10] sm:$0xff]
      %v199 = vld [vmem:[%s1 + $0x18] sm:$0xff]
      %v200 = vld [vmem:[%s1 + $0x20] sm:$0xff]
      %v201 = vld [vmem:[%s1 + $0x28] sm:$0xff]
      %v202 = vld [vmem:[%s1 + $0x30] sm:$0xff]
      %v203 = vld [vmem:[%s1 + $0x38] sm:$0xff]
      %v204 = vld [vmem:[%s1 + $0x40] sm:$0xff]
      %v205 = vld [vmem:[%s1 + $0x48] sm:$0xff]
      %v206 = vld [vmem:[%s1 + $0x50] sm:$0xff]
      %v207 = vld [vmem:[%s1 + $0x58] sm:$0xff]
      %v208 = vld [vmem:[%s1 + $0x60] sm:$0xff]
      %v209 = vld [vmem:[%s1 + $0x68] sm:$0xff]
      %v210 = vld [vmem:[%s1 + $0x70] sm:$0xff]
      %v211 = vld [vmem:[%s1 + $0x78] sm:$0xff]
      %v212 = vld [vmem:[%s1 + $0x80] sm:$0xff]
      %v213 = vld [vmem:[%s1 + $0x88] sm:$0xff]
      %v214 = vld [vmem:[%s1 + $0x90] sm:$0xff]
      %v215 = vld [vmem:[%s1 + $0x98] sm:$0xff]
      %v216 = vld [vmem:[%s1 + $0xa0] sm:$0xff]
      %v217 = vld [vmem:[%s1 + $0xa8] sm:$0xff]
      %v218 = vld [vmem:[%s1 + $0xb0] sm:$0xff]
      %v219 = vld [vmem:[%s1 + $0xb8] sm:$0xff]
      %v220 = vld [vmem:[%s1 + $0xc0] sm:$0xff]
      %v221 = vld [vmem:[%s1 + $0xc8] sm:$0xff]
      %v222 = vld [vmem:[%s1 + $0xd0] sm:$0xff]
      %v223 = vld [vmem:[%s2] sm:$0x3]
      %v225 = vlaneseq
      %v226 = vshrl.u32 %v225, 7
      %v227 = vsub.s32 0, %v226
      %v228 = vrot.slane %v223, %v227
      %v229 = vlaneseq
      %v230 = vshrl.u32 %v229, 7
      %v231 = vsub.s32 1, %v230
      %v232 = vrot.slane %v223, %v231
      %v251 = vunpack.c.l.b16 %v180
      %v252 = vunpack.c.h.b16 %v180
      %v253 = vunpack.c.l.b16 %v181
      %v254 = vunpack.c.h.b16 %v181
      %v255 = vunpack.c.l.b16 %v182
      %v256 = vunpack.c.h.b16 %v182
      %v257 = vunpack.c.l.b16 %v183
      %v258 = vunpack.c.h.b16 %v183
      %v259 = vunpack.c.l.b16 %v184
      %v260 = vunpack.c.h.b16 %v184
      %v261 = vunpack.c.l.b16 %v185
      %v262 = vunpack.c.h.b16 %v185
      %v263 = vunpack.c.l.b16 %v186
      %v264 = vunpack.c.h.b16 %v186
      %v265 = vunpack.c.l.b16 %v187
      %v266 = vunpack.c.h.b16 %v187
      %v267 = vunpack.c.l.b16 %v188
      %v268 = vunpack.c.h.b16 %v188
      %v269 = vunpack.c.l.b16 %v189
      %v270 = vunpack.c.h.b16 %v189
      %v271 = vunpack.c.l.b16 %v190
      %v272 = vunpack.c.h.b16 %v190
      %v273 = vunpack.c.l.b16 %v191
      %v274 = vunpack.c.h.b16 %v191
      %v275 = vunpack.c.l.b16 %v192
      %v276 = vunpack.c.h.b16 %v192
      %v277 = vunpack.c.l.b16 %v193
      %v278 = vunpack.c.h.b16 %v193
      %v279 = vunpack.c.l.b16 %v194
      %v280 = vunpack.c.h.b16 %v194
      %v281 = vunpack.c.l.b16 %v195
      %v282 = vunpack.c.h.b16 %v195
      %v283 = vpack.c.b16 %v253, %v251
      %v284 = vpack.c.b16 %v254, %v252
      %v285 = vpack.c.b16 %v257, %v255
      %v286 = vpack.c.b16 %v258, %v256
      %v287 = vpack.c.b16 %v261, %v259
      %v288 = vpack.c.b16 %v262, %v260
      %v289 = vpack.c.b16 %v265, %v263
      %v290 = vpack.c.b16 %v266, %v264
      %v291 = vpack.c.b16 %v269, %v267
      %v292 = vpack.c.b16 %v270, %v268
      %v293 = vpack.c.b16 %v273, %v271
      %v294 = vpack.c.b16 %v274, %v272
      %v295 = vpack.c.b16 %v277, %v275
      %v296 = vpack.c.b16 %v278, %v276
      %v297 = vpack.c.b16 %v281, %v279
      %v298 = vpack.c.b16 %v282, %v280
      %v334 = vunpack.c.l.b16 %v196
      %v335 = vunpack.c.h.b16 %v196
      %v336 = vunpack.c.l.b16 %v197
      %v337 = vunpack.c.h.b16 %v197
      %v338 = vunpack.c.l.b16 %v198
      %v339 = vunpack.c.h.b16 %v198
      %v340 = vunpack.c.l.b16 %v199
      %v341 = vunpack.c.h.b16 %v199
      %v342 = vunpack.c.l.b16 %v200
      %v343 = vunpack.c.h.b16 %v200
      %v344 = vunpack.c.l.b16 %v201
      %v345 = vunpack.c.h.b16 %v201
      %v346 = vunpack.c.l.b16 %v202
      %v347 = vunpack.c.h.b16 %v202
      %v348 = vunpack.c.l.b16 %v203
      %v349 = vunpack.c.h.b16 %v203
      %v350 = vunpack.c.l.b16 %v204
      %v351 = vunpack.c.h.b16 %v204
      %v352 = vunpack.c.l.b16 %v205
      %v353 = vunpack.c.h.b16 %v205
      %v354 = vunpack.c.l.b16 %v206
      %v355 = vunpack.c.h.b16 %v206
      %v356 = vunpack.c.l.b16 %v207
      %v357 = vunpack.c.h.b16 %v207
      %v358 = vunpack.c.l.b16 %v208
      %v359 = vunpack.c.h.b16 %v208
      %v360 = vunpack.c.l.b16 %v209
      %v361 = vunpack.c.h.b16 %v209
      %v362 = vunpack.c.l.b16 %v210
      %v363 = vunpack.c.h.b16 %v210
      %v364 = vunpack.c.l.b16 %v211
      %v365 = vunpack.c.h.b16 %v211
      %v366 = vunpack.c.l.b16 %v212
      %v367 = vunpack.c.h.b16 %v212
      %v368 = vunpack.c.l.b16 %v213
      %v369 = vunpack.c.h.b16 %v213
      %v370 = vunpack.c.l.b16 %v214
      %v371 = vunpack.c.h.b16 %v214
      %v372 = vunpack.c.l.b16 %v215
      %v373 = vunpack.c.h.b16 %v215
      %v374 = vunpack.c.l.b16 %v216
      %v375 = vunpack.c.h.b16 %v216
      %v376 = vunpack.c.l.b16 %v217
      %v377 = vunpack.c.h.b16 %v217
      %v378 = vunpack.c.l.b16 %v218
      %v379 = vunpack.c.h.b16 %v218
      %v380 = vunpack.c.l.b16 %v219
      %v381 = vunpack.c.h.b16 %v219
      %v382 = vunpack.c.l.b16 %v220
      %v383 = vunpack.c.h.b16 %v220
      %v384 = vunpack.c.l.b16 %v221
      %v385 = vunpack.c.h.b16 %v221
      %v386 = vunpack.c.l.b16 %v222
      %v387 = vunpack.c.h.b16 %v222
      %v388 = vpack.c.b16 %v336, %v334
      %v389 = vpack.c.b16 %v337, %v335
      %v390 = vpack.c.b16 %v340, %v338
      %v391 = vpack.c.b16 %v341, %v339
      %v392 = vpack.c.b16 %v344, %v342
      %v393 = vpack.c.b16 %v345, %v343
      %v394 = vpack.c.b16 %v348, %v346
      %v395 = vpack.c.b16 %v349, %v347
      %v396 = vpack.c.b16 %v352, %v350
      %v397 = vpack.c.b16 %v353, %v351
      %v398 = vpack.c.b16 %v356, %v354
      %v399 = vpack.c.b16 %v357, %v355
      %v400 = vpack.c.b16 %v360, %v358
      %v401 = vpack.c.b16 %v361, %v359
      %v402 = vpack.c.b16 %v364, %v362
      %v403 = vpack.c.b16 %v365, %v363
      %v404 = vpack.c.b16 %v368, %v366
      %v405 = vpack.c.b16 %v369, %v367
      %v406 = vpack.c.b16 %v372, %v370
      %v407 = vpack.c.b16 %v373, %v371
      %v408 = vpack.c.b16 %v376, %v374
      %v409 = vpack.c.b16 %v377, %v375
      %v410 = vpack.c.b16 %v380, %v378
      %v411 = vpack.c.b16 %v381, %v379
      %v412 = vpack.c.b16 %v384, %v382
      %v413 = vpack.c.b16 %v385, %v383
      %v414 = vpack.c.b16 %v386, %v386
      %v415 = vpack.c.b16 %v387, %v387
      %vm442 = vcmask 719872
      %v444 = vsel %vm442, %v284, 0
      %v447 = vsel %vm442, %v286, 0
      %v450 = vsel %vm442, %v288, 0
      %v453 = vsel %vm442, %v290, 0
      %v456 = vsel %vm442, %v292, 0
      %v459 = vsel %vm442, %v294, 0
      %v462 = vsel %vm442, %v296, 0
      %v465 = vsel %vm442, %v298, 0
      %vm467 = vcmask 1043456
      %v469 = vsel %vm467, %v414, 0
      %v472 = vsel %vm467, %v415, 0
      %474 = vmatprep.subr.bf16.mxu0 %v389
      %475 = vmatpush1.bf16.msra.mxu0 %v388
      %476 = vmatprep.subr.bf16.mxu0 %v391
      %477 = vmatpush1.bf16.msra.mxu0 %v390
      %478 = vmatprep.subr.bf16.mxu0 %v393
      %479 = vmatpush1.bf16.msra.mxu0 %v392
      %480 = vmatprep.subr.bf16.mxu0 %v395
      %481 = vmatpush1.bf16.msra.mxu0 %v394
      %482 = vmatprep.subr.bf16.mxu0 %v397
      %483 = vmatpush1.bf16.msra.mxu0 %v396
      %484 = vmatprep.subr.bf16.mxu0 %v399
      %485 = vmatpush1.bf16.msra.mxu0 %v398
      %486 = vmatprep.subr.bf16.mxu0 %v401
      %487 = vmatpush1.bf16.msra.mxu0 %v400
      %488 = vmatprep.subr.bf16.mxu0 %v403
      %489 = vmatpush1.bf16.msra.mxu0 %v402
      %490 = vmatprep.subr.bf16.mxu0 %v405
      %491 = vmatpush1.bf16.msra.mxu0 %v404
      %492 = vmatprep.subr.bf16.mxu0 %v407
      %493 = vmatpush1.bf16.msra.mxu0 %v406
      %494 = vmatprep.subr.bf16.mxu0 %v409
      %495 = vmatpush1.bf16.msra.mxu0 %v408
      %496 = vmatprep.subr.bf16.mxu0 %v411
      %497 = vmatpush1.bf16.msra.mxu0 %v410
      %498 = vmatprep.subr.bf16.mxu0 %v413
      %499 = vmatpush1.bf16.msra.mxu0 %v412
      %500 = vmatprep.subr.bf16.mxu0 %v472
      %501 = vmatpush1.bf16.msra.mxu0 %v469
      %502 = vmatprep.subr.bf16.mxu0 0
      %503 = vmatpush1.bf16.msra.mxu0 0
      %504 = vmatprep.subr.bf16.mxu0 0
      %505 = vmatpush1.bf16.msra.mxu0 0
      %506 = vmatprep.mubr.bf16.mxu0 %v444
      %507 = vmatmul.mubr.bf16.gmra.mrb[0].mxu0 %v283
      %v508 = vpop.f32.mrb[0].mxu0
      %v509 = vadd.f32 %v228, %v508
      %v510 = vpop.f32.mrb[0].mxu0
      %v511 = vadd.f32 %v232, %v510
      %v512 = vpop.f32.mrb[0].mxu0
      %v513 = vadd.f32 %v228, %v512
      %v514 = vpop.f32.mrb[0].mxu0
      %v515 = vadd.f32 %v232, %v514
      %516 = vmatprep.mubr.bf16.mxu0 %v447
      %517 = vmatmul.mubr.bf16.gmra.mrb[0].mxu0 %v285
      %v518 = vpop.f32.mrb[0].mxu0
      %v519 = vadd.f32 %v228, %v518
      %v520 = vpop.f32.mrb[0].mxu0
      %v521 = vadd.f32 %v232, %v520
      %v522 = vpop.f32.mrb[0].mxu0
      %v523 = vadd.f32 %v228, %v522
      %v524 = vpop.f32.mrb[0].mxu0
      %v525 = vadd.f32 %v232, %v524
      %526 = vmatprep.mubr.bf16.mxu0 %v450
      %527 = vmatmul.mubr.bf16.gmra.mrb[0].mxu0 %v287
      %v528 = vpop.f32.mrb[0].mxu0
      %v529 = vadd.f32 %v228, %v528
      %v530 = vpop.f32.mrb[0].mxu0
      %v531 = vadd.f32 %v232, %v530
      %v532 = vpop.f32.mrb[0].mxu0
      %v533 = vadd.f32 %v228, %v532
      %v534 = vpop.f32.mrb[0].mxu0
      %v535 = vadd.f32 %v232, %v534
      %536 = vmatprep.mubr.bf16.mxu0 %v453
      %537 = vmatmul.mubr.bf16.gmra.mrb[0].mxu0 %v289
      %v538 = vpop.f32.mrb[0].mxu0
      %v539 = vadd.f32 %v228, %v538
      %v540 = vpop.f32.mrb[0].mxu0
      %v541 = vadd.f32 %v232, %v540
      %v542 = vpop.f32.mrb[0].mxu0
      %v543 = vadd.f32 %v228, %v542
      %v544 = vpop.f32.mrb[0].mxu0
      %v545 = vadd.f32 %v232, %v544
      %546 = vmatprep.mubr.bf16.mxu0 %v456
      %547 = vmatmul.mubr.bf16.gmra.mrb[0].mxu0 %v291
      %v548 = vpop.f32.mrb[0].mxu0
      %v549 = vadd.f32 %v228, %v548
      %v550 = vpop.f32.mrb[0].mxu0
      %v551 = vadd.f32 %v232, %v550
      %v552 = vpop.f32.mrb[0].mxu0
      %v553 = vadd.f32 %v228, %v552
      %v554 = vpop.f32.mrb[0].mxu0
      %v555 = vadd.f32 %v232, %v554
      %556 = vmatprep.mubr.bf16.mxu0 %v459
      %557 = vmatmul.mubr.bf16.gmra.mrb[0].mxu0 %v293
      %v558 = vpop.f32.mrb[0].mxu0
      %v559 = vadd.f32 %v228, %v558
      %v560 = vpop.f32.mrb[0].mxu0
      %v561 = vadd.f32 %v232, %v560
      %v562 = vpop.f32.mrb[0].mxu0
      %v563 = vadd.f32 %v228, %v562
      %v564 = vpop.f32.mrb[0].mxu0
      %v565 = vadd.f32 %v232, %v564
      %566 = vmatprep.mubr.bf16.mxu0 %v462
      %567 = vmatmul.mubr.bf16.gmra.mrb[0].mxu0 %v295
      %v568 = vpop.f32.mrb[0].mxu0
      %v569 = vadd.f32 %v228, %v568
      %v570 = vpop.f32.mrb[0].mxu0
      %v571 = vadd.f32 %v232, %v570
      %v572 = vpop.f32.mrb[0].mxu0
      %v573 = vadd.f32 %v228, %v572
      %v574 = vpop.f32.mrb[0].mxu0
      %v575 = vadd.f32 %v232, %v574
      %576 = vmatprep.mubr.bf16.mxu0 %v465
      %577 = vmatmul.mubr.bf16.gmra.mrb[0].mxu0 %v297
      %v578 = vpop.f32.mrb[0].mxu0
      %v579 = vadd.f32 %v228, %v578
      %v580 = vpop.f32.mrb[0].mxu0
      %v581 = vadd.f32 %v232, %v580
      %v582 = vpop.f32.mrb[0].mxu0
      %v583 = vadd.f32 %v228, %v582
      %v584 = vpop.f32.mrb[0].mxu0
      %v585 = vadd.f32 %v232, %v584
      %586 = vdwg.mxu0
      %v587 = vmax.f32 %v509, 0.0
      %v588 = vmax.f32 %v511, 0.0
      %v589 = vmax.f32 %v513, 0.0
      %v590 = vmax.f32 %v515, 0.0
      %v591 = vmax.f32 %v519, 0.0
      %v592 = vmax.f32 %v521, 0.0
      %v593 = vmax.f32 %v523, 0.0
      %v594 = vmax.f32 %v525, 0.0
      %v595 = vmax.f32 %v529, 0.0
      %v596 = vmax.f32 %v531, 0.0
      %v597 = vmax.f32 %v533, 0.0
      %v598 = vmax.f32 %v535, 0.0
      %v599 = vmax.f32 %v539, 0.0
      %v600 = vmax.f32 %v541, 0.0
      %v601 = vmax.f32 %v543, 0.0
      %v602 = vmax.f32 %v545, 0.0
      %v603 = vmax.f32 %v549, 0.0
      %v604 = vmax.f32 %v551, 0.0
      %v605 = vmax.f32 %v553, 0.0
      %v606 = vmax.f32 %v555, 0.0
      %v607 = vmax.f32 %v559, 0.0
      %v608 = vmax.f32 %v561, 0.0
      %v609 = vmax.f32 %v563, 0.0
      %v610 = vmax.f32 %v565, 0.0
      %v611 = vmax.f32 %v569, 0.0
      %v612 = vmax.f32 %v571, 0.0
      %v613 = vmax.f32 %v573, 0.0
      %v614 = vmax.f32 %v575, 0.0
      %v615 = vmax.f32 %v579, 0.0
      %v616 = vmax.f32 %v581, 0.0
      %v617 = vmax.f32 %v583, 0.0
      %v618 = vmax.f32 %v585, 0.0
      %619 = vst [vmem:[%s177] sm:$0xff] %v587
      %vm620 = vcmask 31744
      %621 = vst.msk [vmem:[%s177 + $0x8] sm:$0xff] %vm620, %v588
      %622 = vst [vmem:[%s177 + $0x10] sm:$0xff] %v589
      %623 = vst.msk [vmem:[%s177 + $0x18] sm:$0xff] %vm620, %v590
      %624 = vst [vmem:[%s177 + $0x20] sm:$0xff] %v591
      %625 = vst.msk [vmem:[%s177 + $0x28] sm:$0xff] %vm620, %v592
      %626 = vst [vmem:[%s177 + $0x30] sm:$0xff] %v593
      %627 = vst.msk [vmem:[%s177 + $0x38] sm:$0xff] %vm620, %v594
      %628 = vst [vmem:[%s177 + $0x40] sm:$0xff] %v595
      %629 = vst.msk [vmem:[%s177 + $0x48] sm:$0xff] %vm620, %v596
      %630 = vst [vmem:[%s177 + $0x50] sm:$0xff] %v597
      %631 = vst.msk [vmem:[%s177 + $0x58] sm:$0xff] %vm620, %v598
      %632 = vst [vmem:[%s177 + $0x60] sm:$0xff] %v599
      %633 = vst.msk [vmem:[%s177 + $0x68] sm:$0xff] %vm620, %v600
      %634 = vst [vmem:[%s177 + $0x70] sm:$0xff] %v601
      %635 = vst.msk [vmem:[%s177 + $0x78] sm:$0xff] %vm620, %v602
      %636 = vst [vmem:[%s177 + $0x80] sm:$0xff] %v603
      %637 = vst.msk [vmem:[%s177 + $0x88] sm:$0xff] %vm620, %v604
      %638 = vst [vmem:[%s177 + $0x90] sm:$0xff] %v605
      %639 = vst.msk [vmem:[%s177 + $0x98] sm:$0xff] %vm620, %v606
      %640 = vst [vmem:[%s177 + $0xa0] sm:$0xff] %v607
      %641 = vst.msk [vmem:[%s177 + $0xa8] sm:$0xff] %vm620, %v608
      %642 = vst [vmem:[%s177 + $0xb0] sm:$0xff] %v609
      %643 = vst.msk [vmem:[%s177 + $0xb8] sm:$0xff] %vm620, %v610
      %644 = vst [vmem:[%s177 + $0xc0] sm:$0xff] %v611
      %645 = vst.msk [vmem:[%s177 + $0xc8] sm:$0xff] %vm620, %v612
      %646 = vst [vmem:[%s177 + $0xd0] sm:$0xff] %v613
      %647 = vst.msk [vmem:[%s177 + $0xd8] sm:$0xff] %vm620, %v614
      %648 = vst [vmem:[%s177 + $0xe0] sm:$0xff] %v615
      %649 = vst.msk [vmem:[%s177 + $0xe8] sm:$0xff] %vm620, %v616
      %650 = vst [vmem:[%s177 + $0xf0] sm:$0xff] %v617
      %651 = vst.msk [vmem:[%s177 + $0xf8] sm:$0xff] %vm620, %v618
      %s652 = smul.u32 16, %s14
      %p653 = scmp.lt.s32.totalorder %s652, 31
      %s654 = scalar_select %p653, %s652, 31
      %s655 = smul.addr %s654, 2
      %s656 = smul.addr %s655, 8
      %s657 = scalar_lea.vmem %s3, %s656
      // Predicated region
      $region33: #{octave_3d_cnn_forward.6} parent=31 // pred_check
        %p658 = pneg %p100
      $region34: #{octave_3d_cnn_forward.6} parent=31 // pred_check_branch
        %660 = sbr.rel (%p658) target = $region36
      $region35: #{octave_3d_cnn_forward.6} parent=31 // pred_region
        %s661 = smul.u32 16, %s14
      $region36: #{octave_3d_cnn_forward.6} parent=31 // pred_fallthru
        _
    $region32: #{octave_3d_cnn_forward.6} parent=5 // pred_fallthru
      _
    %p662 = scmp.le.s32.totalorder 2, %s9
    // Predicated region
    $region37: #{octave_3d_cnn_forward.6} parent=5 // pred_check
      %p663 = pneg %p662
    $region38: #{octave_3d_cnn_forward.6} parent=5 // pred_check_branch
      %665 = sbr.rel (%p663) target = $region40
    $region39: #{octave_3d_cnn_forward.6} parent=5 // pred_region
      %s666 = ssub.s32 %s9, 2
      // Predicated region
      $region41: #{octave_3d_cnn_forward.6} parent=39 // pred_check
        %p667 = pneg %p106
      $region42: #{octave_3d_cnn_forward.6} parent=39 // pred_check_branch
        %669 = sbr.rel (%p667) target = $region44
      $region43: #{octave_3d_cnn_forward.6} parent=39 // pred_region
        %s670 = smul.u32 16, %s15
        %p671 = scmp.lt.s32.totalorder %s670, 31
        %s672 = scalar_select %p671, %s670, 31
        %s673 = smul.addr %s672, 2
        %s674 = smul.addr %s673, 8
        %s675 = scalar_lea.vmem %s3, %s674
      $region44: #{octave_3d_cnn_forward.6} parent=39 // pred_fallthru
        _
    $region40: #{octave_3d_cnn_forward.6} parent=5 // pred_fallthru
      _
  $region6: #{octave_3d_cnn_forward.6} parent=0 // loop_footer
    %s13 = sadd.s32 1, %s9
  $region7: #{octave_3d_cnn_forward.6} parent=0 // loop_footer_branch
    %8 = sbr.rel target = $region3
  $region8: #{octave_3d_cnn_forward.6} parent=0 // loop_exit
    _

// kernel: octave_3d_cnn_forward.7
$region0: #{octave_3d_cnn_forward.7}
  #allocation0 [shape = 'u32[]', space=smem, size = 0x4, offset = 0x4, fixed_abs, tag = 'smem constant byte address 0x4 - core index']
  #allocation1 [shape = 'u32[144,128]{1,0:T(1,128)}', space=vmem, size = 0x12000, scoped, tag = 'internal scratch']
  %s0 = inlined_call_operand.vmem [shape: bf16[32,4752], index: 0, kind: input, shape index: {}]
  %s1 = inlined_call_operand.vmem [shape: bf16[4752,32], index: 1, kind: input, shape index: {}]
  %s2 = inlined_call_operand.vmem [shape: f32[1,32], index: 2, kind: input, shape index: {}]
  %s3 = inlined_call_operand.vmem [shape: f32[32,32], index: 3, kind: output, shape index: {}]
  %s4 = sld [smem:[#allocation0]]
  $region45: #{octave_3d_cnn_forward.7} parent=0
    _
  %s6 = ssub.s32 1, %s4
  %s7 = scalar_select 0, %s6, %s4
  loop: start=0, step=1, limit=4
  $region2: #{octave_3d_cnn_forward.7} parent=0 // loop_pre_header
    _
  $region3: #{octave_3d_cnn_forward.7} parent=0 // loop_header
    %s9 = sphi 0, %s13
    %p10 = scmp.ge.s32.totalorder %s9, 4
    %s19 = sphi 0, %s21
    %s22 = sphi 0, %s19
    %s23 = sphi 0, %s22
    %s39 = sphi 0, %s23
    %s43 = sphi 0, %s43
    %s45 = sphi 0, %s43
    %s46 = sphi 0, %s45
    %s60 = sphi 0, %s46
    %s64 = sphi 0, %s64
    %s66 = sphi 0, %s64
    %s67 = sphi 0, %s66
    %s81 = sphi 0, %s67
    %s87 = sphi 0, %s89
    %s90 = sphi 0, %s87
    %s91 = sphi 0, %s90
    %s107 = sphi 0, %s91
  $region4: #{octave_3d_cnn_forward.7} parent=0 // loop_header_branch
    %12 = sbr.rel (%p10) target = $region8
  $region5: #{octave_3d_cnn_forward.7} parent=0 // loop_body
    %s14 = ssub.s32 %s9, 1
    %s15 = ssub.s32 %s9, 2
    %s16 = sadd.s32 %s9, 1
    %s17 = ssub.s32 %s9, %s16
    %p18 = scmp.eq.s32.totalorder %s17, 0
    %s20 = sadd.s32 %s19, 1
    %s21 = scalar_select %p18, %s19, %s20
    %p24 = pneg %p18
    %p25 = scmp.eq.s32.totalorder %s9, 1
    %p26 = por %p24, %p25
    %p27 = scmp.ne.s32.totalorder %s19, %s22
    %p28 = scmp.eq.s32.totalorder %s9, 0
    %p29 = por %p27, %p28
    %p30 = scmp.ne.s32.totalorder %s19, %s22
    %p31 = scmp.eq.s32.totalorder %s14, 1
    %p32 = por %p30, %p31
    %p33 = scmp.ne.s32.totalorder %s22, %s23
    %p34 = scmp.eq.s32.totalorder %s14, 0
    %p35 = por %p33, %p34
    %p36 = scmp.ne.s32.totalorder %s22, %s23
    %p37 = scmp.eq.s32.totalorder %s15, 1
    %p38 = por %p36, %p37
    %p40 = scmp.ne.s32.totalorder %s23, %s39
    %p41 = scmp.eq.s32.totalorder %s15, 0
    %p42 = por %p40, %p41
    %s44 = sadd.s32 %s43, 1
    %p47 = scmp.eq.s32.totalorder %s9, 1
    %p48 = scmp.ne.s32.totalorder %s43, %s45
    %p49 = scmp.eq.s32.totalorder %s9, 0
    %p50 = por %p48, %p49
    %p51 = scmp.ne.s32.totalorder %s43, %s45
    %p52 = scmp.eq.s32.totalorder %s14, 1
    %p53 = por %p51, %p52
    %p54 = scmp.ne.s32.totalorder %s45, %s46
    %p55 = scmp.eq.s32.totalorder %s14, 0
    %p56 = por %p54, %p55
    %p57 = scmp.ne.s32.totalorder %s45, %s46
    %p58 = scmp.eq.s32.totalorder %s15, 1
    %p59 = por %p57, %p58
    %p61 = scmp.ne.s32.totalorder %s46, %s60
    %p62 = scmp.eq.s32.totalorder %s15, 0
    %p63 = por %p61, %p62
    %s65 = sadd.s32 %s64, 1
    %p68 = scmp.eq.s32.totalorder %s9, 1
    %p69 = scmp.ne.s32.totalorder %s64, %s66
    %p70 = scmp.eq.s32.totalorder %s9, 0
    %p71 = por %p69, %p70
    %p72 = scmp.ne.s32.totalorder %s64, %s66
    %p73 = scmp.eq.s32.totalorder %s14, 1
    %p74 = por %p72, %p73
    %p75 = scmp.ne.s32.totalorder %s66, %s67
    %p76 = scmp.eq.s32.totalorder %s14, 0
    %p77 = por %p75, %p76
    %p78 = scmp.ne.s32.totalorder %s66, %s67
    %p79 = scmp.eq.s32.totalorder %s15, 1
    %p80 = por %p78, %p79
    %p82 = scmp.ne.s32.totalorder %s67, %s81
    %p83 = scmp.eq.s32.totalorder %s15, 0
    %p84 = por %p82, %p83
    %s85 = ssub.s32 %s9, %s16
    %p86 = scmp.eq.s32.totalorder %s85, 0
    %s88 = sadd.s32 %s87, 1
    %s89 = scalar_select %p86, %s87, %s88
    %p92 = pneg %p86
    %p93 = scmp.eq.s32.totalorder %s9, 1
    %p94 = por %p92, %p93
    %p95 = scmp.ne.s32.totalorder %s87, %s90
    %p96 = scmp.eq.s32.totalorder %s9, 0
    %p97 = por %p95, %p96
    %p98 = scmp.ne.s32.totalorder %s87, %s90
    %p99 = scmp.eq.s32.totalorder %s14, 1
    %p100 = por %p98, %p99
    %p101 = scmp.ne.s32.totalorder %s90, %s91
    %p102 = scmp.eq.s32.totalorder %s14, 0
    %p103 = por %p101, %p102
    %p104 = scmp.ne.s32.totalorder %s90, %s91
    %p105 = scmp.eq.s32.totalorder %s15, 1
    %p106 = por %p104, %p105
    %p108 = scmp.ne.s32.totalorder %s91, %s107
    %p109 = scmp.eq.s32.totalorder %s15, 0
    %p110 = por %p108, %p109
    %p111 = scmp.le.s32.totalorder 1, %s9
    %p112 = scmp.lt.s32.totalorder %s9, 3
    %p113 = pnand %p111, %p112
    %p114 = pneg %p113
    // Predicated region
    $region9: #{octave_3d_cnn_forward.7} parent=5 // pred_check
      _
    $region10: #{octave_3d_cnn_forward.7} parent=5 // pred_check_branch
      %116 = sbr.rel (%p113) target = $region12
    $region11: #{octave_3d_cnn_forward.7} parent=5 // pred_region
      %s117 = ssub.s32 %s9, 1
      // Predicated region
      $region13: #{octave_3d_cnn_forward.7} parent=11 // pred_check
        %p118 = pneg %p56
      $region14: #{octave_3d_cnn_forward.7} parent=11 // pred_check_branch
        %120 = sbr.rel (%p118) target = $region16
      $region15: #{octave_3d_cnn_forward.7} parent=11 // pred_region
        _
      $region16: #{octave_3d_cnn_forward.7} parent=11 // pred_fallthru
        _
      // Predicated region
      $region17: #{octave_3d_cnn_forward.7} parent=11 // pred_check
        %p121 = pneg %p77
      $region18: #{octave_3d_cnn_forward.7} parent=11 // pred_check_branch
        %123 = sbr.rel (%p121) target = $region20
      $region19: #{octave_3d_cnn_forward.7} parent=11 // pred_region
        _
      $region20: #{octave_3d_cnn_forward.7} parent=11 // pred_fallthru
        _
    $region12: #{octave_3d_cnn_forward.7} parent=5 // pred_fallthru
      _
    %p124 = scmp.lt.s32.totalorder %s9, 2
    // Predicated region
    $region21: #{octave_3d_cnn_forward.7} parent=5 // pred_check
      %p125 = pneg %p124
    $region22: #{octave_3d_cnn_forward.7} parent=5 // pred_check_branch
      %127 = sbr.rel (%p125) target = $region24
    $region23: #{octave_3d_cnn_forward.7} parent=5 // pred_region
      // Predicated region
      $region25: #{octave_3d_cnn_forward.7} parent=23 // pred_check
        %p128 = pneg %p29
      $region26: #{octave_3d_cnn_forward.7} parent=23 // pred_check_branch
        %130 = sbr.rel (%p128) target = $region28
      $region27: #{octave_3d_cnn_forward.7} parent=23 // pred_region
        %s131 = smul.u32 2, %s9
        %p132 = scmp.lt.s32.totalorder %s131, 3
        %s133 = scalar_select %p132, %s131, 3
        %s134 = smul.addr %s133, 38
        %s135 = smul.addr %s134, 4
        %s136 = scalar_lea.vmem %s0, %s135
        %s137 = smul.u32 2, %s9
      $region28: #{octave_3d_cnn_forward.7} parent=23 // pred_fallthru
        _
    $region24: #{octave_3d_cnn_forward.7} parent=5 // pred_fallthru
      _
    %p138 = scmp.le.s32.totalorder 1, %s9
    %p139 = scmp.lt.s32.totalorder %s9, 3
    %p140 = pnand %p138, %p139
    %p141 = pneg %p140
    // Predicated region
    $region29: #{octave_3d_cnn_forward.7} parent=5 // pred_check
      _
    $region30: #{octave_3d_cnn_forward.7} parent=5 // pred_check_branch
      %143 = sbr.rel (%p140) target = $region32
    $region31: #{octave_3d_cnn_forward.7} parent=5 // pred_region
      %s144 = ssub.s32 %s9, 1
      %s145 = smul.u32 2, %s14
      %p146 = scmp.lt.s32.totalorder %s145, 3
      %s147 = scalar_select %p146, %s145, 3
      %s148 = smul.addr %s147, 38
      %s149 = smul.addr %s148, 4
      %s150 = scalar_lea.vmem %s0, %s149
      %p151 = pneg %p35
      %p152 = pneg %p32
      %p153 = pneg %p56
      %p154 = pneg %p53
      %p155 = pneg %p77
      %p156 = pneg %p74
      %p157 = pneg %p103
      %p158 = pneg %p100
      %s159 = smul.u32 2, %s14
      %p160 = scmp.lt.s32.totalorder %s159, 3
      %s161 = scalar_select %p160, %s159, 3
      %s162 = smul.addr %s161, 8
      %s163 = scalar_lea.vmem %s3, %s162
      %s164 = smul.u32 2, %s14
      %p165 = scmp.lt.s32.totalorder %s164, 3
      %s166 = scalar_select %p165, %s164, 3
      %s167 = smul.addr %s166, 38
      %s168 = smul.addr %s167, 4
      %s169 = scalar_lea.vmem %s0, %s168
      %s170 = smul.u32 2, %s14
      %s171 = smul.u32 2, %s14
      %p172 = scmp.lt.s32.totalorder %s171, 3
      %s173 = scalar_select %p172, %s171, 3
      %s174 = smul.addr %s173, 8
      %s175 = scalar_lea.vmem %s3, %s174
      %s176 = smul.u32 2, %s14
      %v178 = vld [vmem:[%s169] sm:$0xff]
      %v179 = vld [vmem:[%s169 + $0x8] sm:$0xff]
      %v180 = vld [vmem:[%s169 + $0x10] sm:$0xff]
      %v181 = vld [vmem:[%s169 + $0x18] sm:$0xff]
      %v182 = vld [vmem:[%s169 + $0x20] sm:$0xff]
      %v183 = vld [vmem:[%s169 + $0x28] sm:$0xff]
      %v184 = vld [vmem:[%s169 + $0x30] sm:$0xff]
      %v185 = vld [vmem:[%s169 + $0x38] sm:$0xff]
      %v186 = vld [vmem:[%s169 + $0x40] sm:$0xff]
      %v187 = vld [vmem:[%s169 + $0x48] sm:$0xff]
      %v188 = vld [vmem:[%s169 + $0x50] sm:$0xff]
      %v189 = vld [vmem:[%s169 + $0x58] sm:$0xff]
      %v190 = vld [vmem:[%s169 + $0x60] sm:$0xff]
      %v191 = vld [vmem:[%s169 + $0x68] sm:$0xff]
      %v192 = vld [vmem:[%s169 + $0x70] sm:$0xff]
      %v193 = vld [vmem:[%s169 + $0x78] sm:$0xff]
      %v194 = vld [vmem:[%s169 + $0x80] sm:$0xff]
      %v195 = vld [vmem:[%s169 + $0x88] sm:$0xff]
      %v196 = vld [vmem:[%s169 + $0x90] sm:$0xff]
      %v197 = vld [vmem:[%s169 + $0x98] sm:$0xff]
      %v198 = vld [vmem:[%s169 + $0xa0] sm:$0xff]
      %v199 = vld [vmem:[%s169 + $0xa8] sm:$0xff]
      %v200 = vld [vmem:[%s169 + $0xb0] sm:$0xff]
      %v201 = vld [vmem:[%s169 + $0xb8] sm:$0xff]
      %v202 = vld [vmem:[%s169 + $0xc0] sm:$0xff]
      %v203 = vld [vmem:[%s169 + $0xc8] sm:$0xff]
      %v204 = vld [vmem:[%s169 + $0xd0] sm:$0xff]
      %v205 = vld [vmem:[%s169 + $0xd8] sm:$0xff]
      %v206 = vld [vmem:[%s169 + $0xe0] sm:$0xff]
      %v207 = vld [vmem:[%s169 + $0xe8] sm:$0xff]
      %v208 = vld [vmem:[%s169 + $0xf0] sm:$0xff]
      %v209 = vld [vmem:[%s169 + $0xf8] sm:$0xff]
      %v210 = vld [vmem:[%s169 + $0x100] sm:$0xff]
      %v211 = vld [vmem:[%s169 + $0x108] sm:$0xff]
      %v212 = vld [vmem:[%s169 + $0x110] sm:$0xff]
      %v213 = vld [vmem:[%s169 + $0x118] sm:$0xff]
      %v214 = vld [vmem:[%s169 + $0x120] sm:$0xff]
      %v215 = vld [vmem:[%s169 + $0x128] sm:$0xff]
      %v216 = vld [vmem:[%s1] sm:$0xf]
      %v217 = vld [vmem:[%s1 + $0x4] sm:$0xf]
      %v218 = vld [vmem:[%s1 + $0x8] sm:$0xf]
      %v219 = vld [vmem:[%s1 + $0xc] sm:$0xf]
      %v220 = vld [vmem:[%s1 + $0x10] sm:$0xf]
      %v221 = vld [vmem:[%s1 + $0x14] sm:$0xf]
      %v222 = vld [vmem:[%s1 + $0x18] sm:$0xf]
      %v223 = vld [vmem:[%s1 + $0x1c] sm:$0xf]
      %v224 = vld [vmem:[%s1 + $0x20] sm:$0xf]
      %v225 = vld [vmem:[%s1 + $0x24] sm:$0xf]
      %v226 = vld [vmem:[%s1 + $0x28] sm:$0xf]
      %v227 = vld [vmem:[%s1 + $0x2c] sm:$0xf]
      %v228 = vld [vmem:[%s1 + $0x30] sm:$0xf]
      %v229 = vld [vmem:[%s1 + $0x34] sm:$0xf]
      %v230 = vld [vmem:[%s1 + $0x38] sm:$0xf]
      %v231 = vld [vmem:[%s1 + $0x3c] sm:$0xf]
      %v232 = vld [vmem:[%s1 + $0x40] sm:$0xf]
      %v233 = vld [vmem:[%s1 + $0x44] sm:$0xf]
      %v234 = vld [vmem:[%s1 + $0x48] sm:$0xf]
      %v235 = vld [vmem:[%s1 + $0x4c] sm:$0xf]
      %v236 = vld [vmem:[%s1 + $0x50] sm:$0xf]
      %v237 = vld [vmem:[%s1 + $0x54] sm:$0xf]
      %v238 = vld [vmem:[%s1 + $0x58] sm:$0xf]
      %v239 = vld [vmem:[%s1 + $0x5c] sm:$0xf]
      %v240 = vld [vmem:[%s1 + $0x60] sm:$0xf]
      %v241 = vld [vmem:[%s1 + $0x64] sm:$0xf]
      %v242 = vld [vmem:[%s1 + $0x68] sm:$0xf]
      %v243 = vld [vmem:[%s1 + $0x6c] sm:$0xf]
      %v244 = vld [vmem:[%s1 + $0x70] sm:$0xf]
      %v245 = vld [vmem:[%s1 + $0x74] sm:$0xf]
      %v246 = vld [vmem:[%s1 + $0x78] sm:$0xf]
      %v247 = vld [vmem:[%s1 + $0x7c] sm:$0xf]
      %v248 = vld [vmem:[%s1 + $0x80] sm:$0xf]
      %v249 = vld [vmem:[%s1 + $0x84] sm:$0xf]
      %v250 = vld [vmem:[%s1 + $0x88] sm:$0xf]
      %v251 = vld [vmem:[%s1 + $0x8c] sm:$0xf]
      %v252 = vld [vmem:[%s1 + $0x90] sm:$0xf]
      %v253 = vld [vmem:[%s1 + $0x94] sm:$0xf]
      %v254 = vld [vmem:[%s1 + $0x98] sm:$0xf]
      %v255 = vld [vmem:[%s1 + $0x9c] sm:$0xf]
      %v256 = vld [vmem:[%s1 + $0xa0] sm:$0xf]
      %v257 = vld [vmem:[%s1 + $0xa4] sm:$0xf]
      %v258 = vld [vmem:[%s1 + $0xa8] sm:$0xf]
      %v259 = vld [vmem:[%s1 + $0xac] sm:$0xf]
      %v260 = vld [vmem:[%s1 + $0xb0] sm:$0xf]
      %v261 = vld [vmem:[%s1 + $0xb4] sm:$0xf]
      %v262 = vld [vmem:[%s1 + $0xb8] sm:$0xf]
      %v263 = vld [vmem:[%s1 + $0xbc] sm:$0xf]
      %v264 = vld [vmem:[%s1 + $0xc0] sm:$0xf]
      %v265 = vld [vmem:[%s1 + $0xc4] sm:$0xf]
      %v266 = vld [vmem:[%s1 + $0xc8] sm:$0xf]
      %v267 = vld [vmem:[%s1 + $0xcc] sm:$0xf]
      %v268 = vld [vmem:[%s1 + $0xd0] sm:$0xf]
      %v269 = vld [vmem:[%s1 + $0xd4] sm:$0xf]
      %v270 = vld [vmem:[%s1 + $0xd8] sm:$0xf]
      %v271 = vld [vmem:[%s1 + $0xdc] sm:$0xf]
      %v272 = vld [vmem:[%s1 + $0xe0] sm:$0xf]
      %v273 = vld [vmem:[%s1 + $0xe4] sm:$0xf]
      %v274 = vld [vmem:[%s1 + $0xe8] sm:$0xf]
      %v275 = vld [vmem:[%s1 + $0xec] sm:$0xf]
      %v276 = vld [vmem:[%s1 + $0xf0] sm:$0xf]
      %v277 = vld [vmem:[%s1 + $0xf4] sm:$0xf]
      %v278 = vld [vmem:[%s1 + $0xf8] sm:$0xf]
      %v279 = vld [vmem:[%s1 + $0xfc] sm:$0xf]
      %v280 = vld [vmem:[%s1 + $0x100] sm:$0xf]
      %v281 = vld [vmem:[%s1 + $0x104] sm:$0xf]
      %v282 = vld [vmem:[%s1 + $0x108] sm:$0xf]
      %v283 = vld [vmem:[%s1 + $0x10c] sm:$0xf]
      %v284 = vld [vmem:[%s1 + $0x110] sm:$0xf]
      %v285 = vld [vmem:[%s1 + $0x114] sm:$0xf]
      %v286 = vld [vmem:[%s1 + $0x118] sm:$0xf]
      %v287 = vld [vmem:[%s1 + $0x11c] sm:$0xf]
      %v288 = vld [vmem:[%s1 + $0x120] sm:$0xf]
      %v289 = vld [vmem:[%s1 + $0x124] sm:$0xf]
      %v290 = vld [vmem:[%s1 + $0x128] sm:$0xf]
      %v291 = vld [vmem:[%s1 + $0x12c] sm:$0xf]
      %v292 = vld [vmem:[%s1 + $0x130] sm:$0xf]
      %v293 = vld [vmem:[%s1 + $0x134] sm:$0xf]
      %v294 = vld [vmem:[%s1 + $0x138] sm:$0xf]
      %v295 = vld [vmem:[%s1 + $0x13c] sm:$0xf]
      %v296 = vld [vmem:[%s1 + $0x140] sm:$0xf]
      %v297 = vld [vmem:[%s1 + $0x144] sm:$0xf]
      %v298 = vld [vmem:[%s1 + $0x148] sm:$0xf]
      %v299 = vld [vmem:[%s1 + $0x14c] sm:$0xf]
      %v300 = vld [vmem:[%s1 + $0x150] sm:$0xf]
      %v301 = vld [vmem:[%s1 + $0x154] sm:$0xf]
      %v302 = vld [vmem:[%s1 + $0x158] sm:$0xf]
      %v303 = vld [vmem:[%s1 + $0x15c] sm:$0xf]
      %v304 = vld [vmem:[%s1 + $0x160] sm:$0xf]
      %v305 = vld [vmem:[%s1 + $0x164] sm:$0xf]
      %v306 = vld [vmem:[%s1 + $0x168] sm:$0xf]
      %v307 = vld [vmem:[%s1 + $0x16c] sm:$0xf]
      %v308 = vld [vmem:[%s1 + $0x170] sm:$0xf]
      %v309 = vld [vmem:[%s1 + $0x174] sm:$0xf]
      %v310 = vld [vmem:[%s1 + $0x178] sm:$0xf]
      %v311 = vld [vmem:[%s1 + $0x17c] sm:$0xf]
      %v312 = vld [vmem:[%s1 + $0x180] sm:$0xf]
      %v313 = vld [vmem:[%s1 + $0x184] sm:$0xf]
      %v314 = vld [vmem:[%s1 + $0x188] sm:$0xf]
      %v315 = vld [vmem:[%s1 + $0x18c] sm:$0xf]
      %v316 = vld [vmem:[%s1 + $0x190] sm:$0xf]
      %v317 = vld [vmem:[%s1 + $0x194] sm:$0xf]
      %v318 = vld [vmem:[%s1 + $0x198] sm:$0xf]
      %v319 = vld [vmem:[%s1 + $0x19c] sm:$0xf]
      %v320 = vld [vmem:[%s1 + $0x1a0] sm:$0xf]
      %v321 = vld [vmem:[%s1 + $0x1a4] sm:$0xf]
      %v322 = vld [vmem:[%s1 + $0x1a8] sm:$0xf]
      %v323 = vld [vmem:[%s1 + $0x1ac] sm:$0xf]
      %v324 = vld [vmem:[%s1 + $0x1b0] sm:$0xf]
      %v325 = vld [vmem:[%s1 + $0x1b4] sm:$0xf]
      %v326 = vld [vmem:[%s1 + $0x1b8] sm:$0xf]
      %v327 = vld [vmem:[%s1 + $0x1bc] sm:$0xf]
      %v328 = vld [vmem:[%s1 + $0x1c0] sm:$0xf]
      %v329 = vld [vmem:[%s1 + $0x1c4] sm:$0xf]
      %v330 = vld [vmem:[%s1 + $0x1c8] sm:$0xf]
      %v331 = vld [vmem:[%s1 + $0x1cc] sm:$0xf]
      %v332 = vld [vmem:[%s1 + $0x1d0] sm:$0xf]
      %v333 = vld [vmem:[%s1 + $0x1d4] sm:$0xf]
      %v334 = vld [vmem:[%s1 + $0x1d8] sm:$0xf]
      %v335 = vld [vmem:[%s1 + $0x1dc] sm:$0xf]
      %v336 = vld [vmem:[%s1 + $0x1e0] sm:$0xf]
      %v337 = vld [vmem:[%s1 + $0x1e4] sm:$0xf]
      %v338 = vld [vmem:[%s1 + $0x1e8] sm:$0xf]
      %v339 = vld [vmem:[%s1 + $0x1ec] sm:$0xf]
      %v340 = vld [vmem:[%s1 + $0x1f0] sm:$0xf]
      %v341 = vld [vmem:[%s1 + $0x1f4] sm:$0xf]
      %v342 = vld [vmem:[%s1 + $0x1f8] sm:$0xf]
      %v343 = vld [vmem:[%s1 + $0x1fc] sm:$0xf]
      %v344 = vld [vmem:[%s1 + $0x200] sm:$0xf]
      %v345 = vld [vmem:[%s1 + $0x204] sm:$0xf]
      %v346 = vld [vmem:[%s1 + $0x208] sm:$0xf]
      %v347 = vld [vmem:[%s1 + $0x20c] sm:$0xf]
      %v348 = vld [vmem:[%s1 + $0x210] sm:$0xf]
      %v349 = vld [vmem:[%s1 + $0x214] sm:$0xf]
      %v350 = vld [vmem:[%s1 + $0x218] sm:$0xf]
      %v351 = vld [vmem:[%s1 + $0x21c] sm:$0xf]
      %v352 = vld [vmem:[%s1 + $0x220] sm:$0xf]
      %v353 = vld [vmem:[%s1 + $0x224] sm:$0xf]
      %v354 = vld [vmem:[%s1 + $0x228] sm:$0xf]
      %v355 = vld [vmem:[%s1 + $0x22c] sm:$0xf]
      %v356 = vld [vmem:[%s1 + $0x230] sm:$0xf]
      %v357 = vld [vmem:[%s1 + $0x234] sm:$0xf]
      %v358 = vld [vmem:[%s1 + $0x238] sm:$0xf]
      %v359 = vld [vmem:[%s1 + $0x23c] sm:$0xf]
      %v360 = vld [vmem:[%s1 + $0x240] sm:$0xf]
      %v361 = vld [vmem:[%s1 + $0x244] sm:$0xf]
      %v362 = vld [vmem:[%s1 + $0x248] sm:$0xf]
      %v363 = vld [vmem:[%s1 + $0x24c] sm:$0xf]
      %v364 = vld [vmem:[%s1 + $0x250] sm:$0xf]
      %v365 = vld [vmem:[%s1 + $0x254] sm:$0xf]
      %v366 = vld [vmem:[%s1 + $0x258] sm:$0xf]
      %v367 = vld [vmem:[%s1 + $0x25c] sm:$0xf]
      %v368 = vld [vmem:[%s1 + $0x260] sm:$0xf]
      %v369 = vld [vmem:[%s1 + $0x264] sm:$0xf]
      %v370 = vld [vmem:[%s1 + $0x268] sm:$0xf]
      %v371 = vld [vmem:[%s1 + $0x26c] sm:$0xf]
      %v372 = vld [vmem:[%s1 + $0x270] sm:$0xf]
      %v373 = vld [vmem:[%s1 + $0x274] sm:$0xf]
      %v374 = vld [vmem:[%s1 + $0x278] sm:$0xf]
      %v375 = vld [vmem:[%s1 + $0x27c] sm:$0xf]
      %v376 = vld [vmem:[%s1 + $0x280] sm:$0xf]
      %v377 = vld [vmem:[%s1 + $0x284] sm:$0xf]
      %v378 = vld [vmem:[%s1 + $0x288] sm:$0xf]
      %v379 = vld [vmem:[%s1 + $0x28c] sm:$0xf]
      %v380 = vld [vmem:[%s1 + $0x290] sm:$0xf]
      %v381 = vld [vmem:[%s1 + $0x294] sm:$0xf]
      %v382 = vld [vmem:[%s1 + $0x298] sm:$0xf]
      %v383 = vld [vmem:[%s1 + $0x29c] sm:$0xf]
      %v384 = vld [vmem:[%s1 + $0x2a0] sm:$0xf]
      %v385 = vld [vmem:[%s1 + $0x2a4] sm:$0xf]
      %v386 = vld [vmem:[%s1 + $0x2a8] sm:$0xf]
      %v387 = vld [vmem:[%s1 + $0x2ac] sm:$0xf]
      %v388 = vld [vmem:[%s1 + $0x2b0] sm:$0xf]
      %v389 = vld [vmem:[%s1 + $0x2b4] sm:$0xf]
      %v390 = vld [vmem:[%s1 + $0x2b8] sm:$0xf]
      %v391 = vld [vmem:[%s1 + $0x2bc] sm:$0xf]
      %v392 = vld [vmem:[%s1 + $0x2c0] sm:$0xf]
      %v393 = vld [vmem:[%s1 + $0x2c4] sm:$0xf]
      %v394 = vld [vmem:[%s1 + $0x2c8] sm:$0xf]
      %v395 = vld [vmem:[%s1 + $0x2cc] sm:$0xf]
      %v396 = vld [vmem:[%s1 + $0x2d0] sm:$0xf]
      %v397 = vld [vmem:[%s1 + $0x2d4] sm:$0xf]
      %v398 = vld [vmem:[%s1 + $0x2d8] sm:$0xf]
      %v399 = vld [vmem:[%s1 + $0x2dc] sm:$0xf]
      %v400 = vld [vmem:[%s1 + $0x2e0] sm:$0xf]
      %v401 = vld [vmem:[%s1 + $0x2e4] sm:$0xf]
      %v402 = vld [vmem:[%s1 + $0x2e8] sm:$0xf]
      %v403 = vld [vmem:[%s1 + $0x2ec] sm:$0xf]
      %v404 = vld [vmem:[%s1 + $0x2f0] sm:$0xf]
      %v405 = vld [vmem:[%s1 + $0x2f4] sm:$0xf]
      %v406 = vld [vmem:[%s1 + $0x2f8] sm:$0xf]
      %v407 = vld [vmem:[%s1 + $0x2fc] sm:$0xf]
      %v408 = vld [vmem:[%s1 + $0x300] sm:$0xf]
      %v409 = vld [vmem:[%s1 + $0x304] sm:$0xf]
      %v410 = vld [vmem:[%s1 + $0x308] sm:$0xf]
      %v411 = vld [vmem:[%s1 + $0x30c] sm:$0xf]
      %v412 = vld [vmem:[%s1 + $0x310] sm:$0xf]
      %v413 = vld [vmem:[%s1 + $0x314] sm:$0xf]
      %v414 = vld [vmem:[%s1 + $0x318] sm:$0xf]
      %v415 = vld [vmem:[%s1 + $0x31c] sm:$0xf]
      %v416 = vld [vmem:[%s1 + $0x320] sm:$0xf]
      %v417 = vld [vmem:[%s1 + $0x324] sm:$0xf]
      %v418 = vld [vmem:[%s1 + $0x328] sm:$0xf]
      %v419 = vld [vmem:[%s1 + $0x32c] sm:$0xf]
      %v420 = vld [vmem:[%s1 + $0x330] sm:$0xf]
      %v421 = vld [vmem:[%s1 + $0x334] sm:$0xf]
      %v422 = vld [vmem:[%s1 + $0x338] sm:$0xf]
      %v423 = vld [vmem:[%s1 + $0x33c] sm:$0xf]
      %v424 = vld [vmem:[%s1 + $0x340] sm:$0xf]
      %v425 = vld [vmem:[%s1 + $0x344] sm:$0xf]
      %v426 = vld [vmem:[%s1 + $0x348] sm:$0xf]
      %v427 = vld [vmem:[%s1 + $0x34c] sm:$0xf]
      %v428 = vld [vmem:[%s1 + $0x350] sm:$0xf]
      %v429 = vld [vmem:[%s1 + $0x354] sm:$0xf]
      %v430 = vld [vmem:[%s1 + $0x358] sm:$0xf]
      %v431 = vld [vmem:[%s1 + $0x35c] sm:$0xf]
      %v432 = vld [vmem:[%s1 + $0x360] sm:$0xf]
      %v433 = vld [vmem:[%s1 + $0x364] sm:$0xf]
      %v434 = vld [vmem:[%s1 + $0x368] sm:$0xf]
      %v435 = vld [vmem:[%s1 + $0x36c] sm:$0xf]
      %v436 = vld [vmem:[%s1 + $0x370] sm:$0xf]
      %v437 = vld [vmem:[%s1 + $0x374] sm:$0xf]
      %v438 = vld [vmem:[%s1 + $0x378] sm:$0xf]
      %v439 = vld [vmem:[%s1 + $0x37c] sm:$0xf]
      %v440 = vld [vmem:[%s1 + $0x380] sm:$0xf]
      %v441 = vld [vmem:[%s1 + $0x384] sm:$0xf]
      %v442 = vld [vmem:[%s1 + $0x388] sm:$0xf]
      %v443 = vld [vmem:[%s1 + $0x38c] sm:$0xf]
      %v444 = vld [vmem:[%s1 + $0x390] sm:$0xf]
      %v445 = vld [vmem:[%s1 + $0x394] sm:$0xf]
      %v446 = vld [vmem:[%s1 + $0x398] sm:$0xf]
      %v447 = vld [vmem:[%s1 + $0x39c] sm:$0xf]
      %v448 = vld [vmem:[%s1 + $0x3a0] sm:$0xf]
      %v449 = vld [vmem:[%s1 + $0x3a4] sm:$0xf]
      %v450 = vld [vmem:[%s1 + $0x3a8] sm:$0xf]
      %v451 = vld [vmem:[%s1 + $0x3ac] sm:$0xf]
      %v452 = vld [vmem:[%s1 + $0x3b0] sm:$0xf]
      %v453 = vld [vmem:[%s1 + $0x3b4] sm:$0xf]
      %v454 = vld [vmem:[%s1 + $0x3b8] sm:$0xf]
      %v455 = vld [vmem:[%s1 + $0x3bc] sm:$0xf]
      %v456 = vld [vmem:[%s1 + $0x3c0] sm:$0xf]
      %v457 = vld [vmem:[%s1 + $0x3c4] sm:$0xf]
      %v458 = vld [vmem:[%s1 + $0x3c8] sm:$0xf]
      %v459 = vld [vmem:[%s1 + $0x3cc] sm:$0xf]
      %v460 = vld [vmem:[%s1 + $0x3d0] sm:$0xf]
      %v461 = vld [vmem:[%s1 + $0x3d4] sm:$0xf]
      %v462 = vld [vmem:[%s1 + $0x3d8] sm:$0xf]
      %v463 = vld [vmem:[%s1 + $0x3dc] sm:$0xf]
      %v464 = vld [vmem:[%s1 + $0x3e0] sm:$0xf]
      %v465 = vld [vmem:[%s1 + $0x3e4] sm:$0xf]
      %v466 = vld [vmem:[%s1 + $0x3e8] sm:$0xf]
      %v467 = vld [vmem:[%s1 + $0x3ec] sm:$0xf]
      %v468 = vld [vmem:[%s1 + $0x3f0] sm:$0xf]
      %v469 = vld [vmem:[%s1 + $0x3f4] sm:$0xf]
      %v470 = vld [vmem:[%s1 + $0x3f8] sm:$0xf]
      %v471 = vld [vmem:[%s1 + $0x3fc] sm:$0xf]
      %v472 = vld [vmem:[%s1 + $0x400] sm:$0xf]
      %v473 = vld [vmem:[%s1 + $0x404] sm:$0xf]
      %v474 = vld [vmem:[%s1 + $0x408] sm:$0xf]
      %v475 = vld [vmem:[%s1 + $0x40c] sm:$0xf]
      %v476 = vld [vmem:[%s1 + $0x410] sm:$0xf]
      %v477 = vld [vmem:[%s1 + $0x414] sm:$0xf]
      %v478 = vld [vmem:[%s1 + $0x418] sm:$0xf]
      %v479 = vld [vmem:[%s1 + $0x41c] sm:$0xf]
      %v480 = vld [vmem:[%s1 + $0x420] sm:$0xf]
      %v481 = vld [vmem:[%s1 + $0x424] sm:$0xf]
      %v482 = vld [vmem:[%s1 + $0x428] sm:$0xf]
      %v483 = vld [vmem:[%s1 + $0x42c] sm:$0xf]
      %v484 = vld [vmem:[%s1 + $0x430] sm:$0xf]
      %v485 = vld [vmem:[%s1 + $0x434] sm:$0xf]
      %v486 = vld [vmem:[%s1 + $0x438] sm:$0xf]
      %v487 = vld [vmem:[%s1 + $0x43c] sm:$0xf]
      %v488 = vld [vmem:[%s1 + $0x440] sm:$0xf]
      %v489 = vld [vmem:[%s1 + $0x444] sm:$0xf]
      %v490 = vld [vmem:[%s1 + $0x448] sm:$0xf]
      %v491 = vld [vmem:[%s1 + $0x44c] sm:$0xf]
      %v492 = vld [vmem:[%s1 + $0x450] sm:$0xf]
      %v493 = vld [vmem:[%s1 + $0x454] sm:$0xf]
      %v494 = vld [vmem:[%s1 + $0x458] sm:$0xf]
      %v495 = vld [vmem:[%s1 + $0x45c] sm:$0xf]
      %v496 = vld [vmem:[%s1 + $0x460] sm:$0xf]
      %v497 = vld [vmem:[%s1 + $0x464] sm:$0xf]
      %v498 = vld [vmem:[%s1 + $0x468] sm:$0xf]
      %v499 = vld [vmem:[%s1 + $0x46c] sm:$0xf]
      %v500 = vld [vmem:[%s1 + $0x470] sm:$0xf]
      %v501 = vld [vmem:[%s1 + $0x474] sm:$0xf]
      %v502 = vld [vmem:[%s1 + $0x478] sm:$0xf]
      %v503 = vld [vmem:[%s1 + $0x47c] sm:$0xf]
      %v504 = vld [vmem:[%s1 + $0x480] sm:$0xf]
      %v505 = vld [vmem:[%s1 + $0x484] sm:$0xf]
      %v506 = vld [vmem:[%s1 + $0x488] sm:$0xf]
      %v507 = vld [vmem:[%s1 + $0x48c] sm:$0xf]
      %v508 = vld [vmem:[%s1 + $0x490] sm:$0xf]
      %v509 = vld [vmem:[%s1 + $0x494] sm:$0xf]
      %v510 = vld [vmem:[%s1 + $0x498] sm:$0xf]
      %v511 = vld [vmem:[%s1 + $0x49c] sm:$0xf]
      %v512 = vld [vmem:[%s1 + $0x4a0] sm:$0xf]
      %v513 = vld [vmem:[%s1 + $0x4a4] sm:$0xf]
      %v514 = vld [vmem:[%s1 + $0x4a8] sm:$0xf]
      %v515 = vld [vmem:[%s1 + $0x4ac] sm:$0xf]
      %v516 = vld [vmem:[%s1 + $0x4b0] sm:$0xf]
      %v517 = vld [vmem:[%s1 + $0x4b4] sm:$0xf]
      %v518 = vld [vmem:[%s1 + $0x4b8] sm:$0xf]
      %v519 = vld [vmem:[%s1 + $0x4bc] sm:$0xf]
      %v520 = vld [vmem:[%s1 + $0x4c0] sm:$0xf]
      %v521 = vld [vmem:[%s1 + $0x4c4] sm:$0xf]
      %v522 = vld [vmem:[%s1 + $0x4c8] sm:$0xf]
      %v523 = vld [vmem:[%s1 + $0x4cc] sm:$0xf]
      %v524 = vld [vmem:[%s1 + $0x4d0] sm:$0xf]
      %v525 = vld [vmem:[%s1 + $0x4d4] sm:$0xf]
      %v526 = vld [vmem:[%s1 + $0x4d8] sm:$0xf]
      %v527 = vld [vmem:[%s1 + $0x4dc] sm:$0xf]
      %v528 = vld [vmem:[%s1 + $0x4e0] sm:$0xf]
      %v529 = vld [vmem:[%s1 + $0x4e4] sm:$0xf]
      %v530 = vld [vmem:[%s1 + $0x4e8] sm:$0xf]
      %v531 = vld [vmem:[%s1 + $0x4ec] sm:$0xf]
      %v532 = vld [vmem:[%s1 + $0x4f0] sm:$0xf]
      %v533 = vld [vmem:[%s1 + $0x4f4] sm:$0xf]
      %v534 = vld [vmem:[%s1 + $0x4f8] sm:$0xf]
      %v535 = vld [vmem:[%s1 + $0x4fc] sm:$0xf]
      %v536 = vld [vmem:[%s1 + $0x500] sm:$0xf]
      %v537 = vld [vmem:[%s1 + $0x504] sm:$0xf]
      %v538 = vld [vmem:[%s1 + $0x508] sm:$0xf]
      %v539 = vld [vmem:[%s1 + $0x50c] sm:$0xf]
      %v540 = vld [vmem:[%s1 + $0x510] sm:$0xf]
      %v541 = vld [vmem:[%s1 + $0x514] sm:$0xf]
      %v542 = vld [vmem:[%s1 + $0x518] sm:$0xf]
      %v543 = vld [vmem:[%s1 + $0x51c] sm:$0xf]
      %v544 = vld [vmem:[%s1 + $0x520] sm:$0xf]
      %v545 = vld [vmem:[%s1 + $0x524] sm:$0xf]
      %v546 = vld [vmem:[%s1 + $0x528] sm:$0xf]
      %v547 = vld [vmem:[%s1 + $0x52c] sm:$0xf]
      %v548 = vld [vmem:[%s1 + $0x530] sm:$0xf]
      %v549 = vld [vmem:[%s1 + $0x534] sm:$0xf]
      %v550 = vld [vmem:[%s1 + $0x538] sm:$0xf]
      %v551 = vld [vmem:[%s1 + $0x53c] sm:$0xf]
      %v552 = vld [vmem:[%s1 + $0x540] sm:$0xf]
      %v553 = vld [vmem:[%s1 + $0x544] sm:$0xf]
      %v554 = vld [vmem:[%s1 + $0x548] sm:$0xf]
      %v555 = vld [vmem:[%s1 + $0x54c] sm:$0xf]
      %v556 = vld [vmem:[%s1 + $0x550] sm:$0xf]
      %v557 = vld [vmem:[%s1 + $0x554] sm:$0xf]
      %v558 = vld [vmem:[%s1 + $0x558] sm:$0xf]
      %v559 = vld [vmem:[%s1 + $0x55c] sm:$0xf]
      %v560 = vld [vmem:[%s1 + $0x560] sm:$0xf]
      %v561 = vld [vmem:[%s1 + $0x564] sm:$0xf]
      %v562 = vld [vmem:[%s1 + $0x568] sm:$0xf]
      %v563 = vld [vmem:[%s1 + $0x56c] sm:$0xf]
      %v564 = vld [vmem:[%s1 + $0x570] sm:$0xf]
      %v565 = vld [vmem:[%s1 + $0x574] sm:$0xf]
      %v566 = vld [vmem:[%s1 + $0x578] sm:$0xf]
      %v567 = vld [vmem:[%s1 + $0x57c] sm:$0xf]
      %v568 = vld [vmem:[%s1 + $0x580] sm:$0xf]
      %v569 = vld [vmem:[%s1 + $0x584] sm:$0xf]
      %v570 = vld [vmem:[%s1 + $0x588] sm:$0xf]
      %v571 = vld [vmem:[%s1 + $0x58c] sm:$0xf]
      %v572 = vld [vmem:[%s1 + $0x590] sm:$0xf]
      %v573 = vld [vmem:[%s1 + $0x594] sm:$0xf]
      %v574 = vld [vmem:[%s1 + $0x598] sm:$0xf]
      %v575 = vld [vmem:[%s1 + $0x59c] sm:$0xf]
      %v576 = vld [vmem:[%s1 + $0x5a0] sm:$0xf]
      %v577 = vld [vmem:[%s1 + $0x5a4] sm:$0xf]
      %v578 = vld [vmem:[%s1 + $0x5a8] sm:$0xf]
      %v579 = vld [vmem:[%s1 + $0x5ac] sm:$0xf]
      %v580 = vld [vmem:[%s1 + $0x5b0] sm:$0xf]
      %v581 = vld [vmem:[%s1 + $0x5b4] sm:$0xf]
      %v582 = vld [vmem:[%s1 + $0x5b8] sm:$0xf]
      %v583 = vld [vmem:[%s1 + $0x5bc] sm:$0xf]
      %v584 = vld [vmem:[%s1 + $0x5c0] sm:$0xf]
      %v585 = vld [vmem:[%s1 + $0x5c4] sm:$0xf]
      %v586 = vld [vmem:[%s1 + $0x5c8] sm:$0xf]
      %v587 = vld [vmem:[%s1 + $0x5cc] sm:$0xf]
      %v588 = vld [vmem:[%s1 + $0x5d0] sm:$0xf]
      %v589 = vld [vmem:[%s1 + $0x5d4] sm:$0xf]
      %v590 = vld [vmem:[%s1 + $0x5d8] sm:$0xf]
      %v591 = vld [vmem:[%s1 + $0x5dc] sm:$0xf]
      %v592 = vld [vmem:[%s1 + $0x5e0] sm:$0xf]
      %v593 = vld [vmem:[%s1 + $0x5e4] sm:$0xf]
      %v594 = vld [vmem:[%s1 + $0x5e8] sm:$0xf]
      %v595 = vld [vmem:[%s1 + $0x5ec] sm:$0xf]
      %v596 = vld [vmem:[%s1 + $0x5f0] sm:$0xf]
      %v597 = vld [vmem:[%s1 + $0x5f4] sm:$0xf]
      %v598 = vld [vmem:[%s1 + $0x5f8] sm:$0xf]
      %v599 = vld [vmem:[%s1 + $0x5fc] sm:$0xf]
      %v600 = vld [vmem:[%s1 + $0x600] sm:$0xf]
      %v601 = vld [vmem:[%s1 + $0x604] sm:$0xf]
      %v602 = vld [vmem:[%s1 + $0x608] sm:$0xf]
      %v603 = vld [vmem:[%s1 + $0x60c] sm:$0xf]
      %v604 = vld [vmem:[%s1 + $0x610] sm:$0xf]
      %v605 = vld [vmem:[%s1 + $0x614] sm:$0xf]
      %v606 = vld [vmem:[%s1 + $0x618] sm:$0xf]
      %v607 = vld [vmem:[%s1 + $0x61c] sm:$0xf]
      %v608 = vld [vmem:[%s1 + $0x620] sm:$0xf]
      %v609 = vld [vmem:[%s1 + $0x624] sm:$0xf]
      %v610 = vld [vmem:[%s1 + $0x628] sm:$0xf]
      %v611 = vld [vmem:[%s1 + $0x62c] sm:$0xf]
      %v612 = vld [vmem:[%s1 + $0x630] sm:$0xf]
      %v613 = vld [vmem:[%s1 + $0x634] sm:$0xf]
      %v614 = vld [vmem:[%s1 + $0x638] sm:$0xf]
      %v615 = vld [vmem:[%s1 + $0x63c] sm:$0xf]
      %v616 = vld [vmem:[%s1 + $0x640] sm:$0xf]
      %v617 = vld [vmem:[%s1 + $0x644] sm:$0xf]
      %v618 = vld [vmem:[%s1 + $0x648] sm:$0xf]
      %v619 = vld [vmem:[%s1 + $0x64c] sm:$0xf]
      %v620 = vld [vmem:[%s1 + $0x650] sm:$0xf]
      %v621 = vld [vmem:[%s1 + $0x654] sm:$0xf]
      %v622 = vld [vmem:[%s1 + $0x658] sm:$0xf]
      %v623 = vld [vmem:[%s1 + $0x65c] sm:$0xf]
      %v624 = vld [vmem:[%s1 + $0x660] sm:$0xf]
      %v625 = vld [vmem:[%s1 + $0x664] sm:$0xf]
      %v626 = vld [vmem:[%s1 + $0x668] sm:$0xf]
      %v627 = vld [vmem:[%s1 + $0x66c] sm:$0xf]
      %v628 = vld [vmem:[%s1 + $0x670] sm:$0xf]
      %v629 = vld [vmem:[%s1 + $0x674] sm:$0xf]
      %v630 = vld [vmem:[%s1 + $0x678] sm:$0xf]
      %v631 = vld [vmem:[%s1 + $0x67c] sm:$0xf]
      %v632 = vld [vmem:[%s1 + $0x680] sm:$0xf]
      %v633 = vld [vmem:[%s1 + $0x684] sm:$0xf]
      %v634 = vld [vmem:[%s1 + $0x688] sm:$0xf]
      %v635 = vld [vmem:[%s1 + $0x68c] sm:$0xf]
      %v636 = vld [vmem:[%s1 + $0x690] sm:$0xf]
      %v637 = vld [vmem:[%s1 + $0x694] sm:$0xf]
      %v638 = vld [vmem:[%s1 + $0x698] sm:$0xf]
      %v639 = vld [vmem:[%s1 + $0x69c] sm:$0xf]
      %v640 = vld [vmem:[%s1 + $0x6a0] sm:$0xf]
      %v641 = vld [vmem:[%s1 + $0x6a4] sm:$0xf]
      %v642 = vld [vmem:[%s1 + $0x6a8] sm:$0xf]
      %v643 = vld [vmem:[%s1 + $0x6ac] sm:$0xf]
      %v644 = vld [vmem:[%s1 + $0x6b0] sm:$0xf]
      %v645 = vld [vmem:[%s1 + $0x6b4] sm:$0xf]
      %v646 = vld [vmem:[%s1 + $0x6b8] sm:$0xf]
      %v647 = vld [vmem:[%s1 + $0x6bc] sm:$0xf]
      %v648 = vld [vmem:[%s1 + $0x6c0] sm:$0xf]
      %v649 = vld [vmem:[%s1 + $0x6c4] sm:$0xf]
      %v650 = vld [vmem:[%s1 + $0x6c8] sm:$0xf]
      %v651 = vld [vmem:[%s1 + $0x6cc] sm:$0xf]
      %v652 = vld [vmem:[%s1 + $0x6d0] sm:$0xf]
      %v653 = vld [vmem:[%s1 + $0x6d4] sm:$0xf]
      %v654 = vld [vmem:[%s1 + $0x6d8] sm:$0xf]
      %v655 = vld [vmem:[%s1 + $0x6dc] sm:$0xf]
      %v656 = vld [vmem:[%s1 + $0x6e0] sm:$0xf]
      %v657 = vld [vmem:[%s1 + $0x6e4] sm:$0xf]
      %v658 = vld [vmem:[%s1 + $0x6e8] sm:$0xf]
      %v659 = vld [vmem:[%s1 + $0x6ec] sm:$0xf]
      %v660 = vld [vmem:[%s1 + $0x6f0] sm:$0xf]
      %v661 = vld [vmem:[%s1 + $0x6f4] sm:$0xf]
      %v662 = vld [vmem:[%s1 + $0x6f8] sm:$0xf]
      %v663 = vld [vmem:[%s1 + $0x6fc] sm:$0xf]
      %v664 = vld [vmem:[%s1 + $0x700] sm:$0xf]
      %v665 = vld [vmem:[%s1 + $0x704] sm:$0xf]
      %v666 = vld [vmem:[%s1 + $0x708] sm:$0xf]
      %v667 = vld [vmem:[%s1 + $0x70c] sm:$0xf]
      %v668 = vld [vmem:[%s1 + $0x710] sm:$0xf]
      %v669 = vld [vmem:[%s1 + $0x714] sm:$0xf]
      %v670 = vld [vmem:[%s1 + $0x718] sm:$0xf]
      %v671 = vld [vmem:[%s1 + $0x71c] sm:$0xf]
      %v672 = vld [vmem:[%s1 + $0x720] sm:$0xf]
      %v673 = vld [vmem:[%s1 + $0x724] sm:$0xf]
      %v674 = vld [vmem:[%s1 + $0x728] sm:$0xf]
      %v675 = vld [vmem:[%s1 + $0x72c] sm:$0xf]
      %v676 = vld [vmem:[%s1 + $0x730] sm:$0xf]
      %v677 = vld [vmem:[%s1 + $0x734] sm:$0xf]
      %v678 = vld [vmem:[%s1 + $0x738] sm:$0xf]
      %v679 = vld [vmem:[%s1 + $0x73c] sm:$0xf]
      %v680 = vld [vmem:[%s1 + $0x740] sm:$0xf]
      %v681 = vld [vmem:[%s1 + $0x744] sm:$0xf]
      %v682 = vld [vmem:[%s1 + $0x748] sm:$0xf]
      %v683 = vld [vmem:[%s1 + $0x74c] sm:$0xf]
      %v684 = vld [vmem:[%s1 + $0x750] sm:$0xf]
      %v685 = vld [vmem:[%s1 + $0x754] sm:$0xf]
      %v686 = vld [vmem:[%s1 + $0x758] sm:$0xf]
      %v687 = vld [vmem:[%s1 + $0x75c] sm:$0xf]
      %v688 = vld [vmem:[%s1 + $0x760] sm:$0xf]
      %v689 = vld [vmem:[%s1 + $0x764] sm:$0xf]
      %v690 = vld [vmem:[%s1 + $0x768] sm:$0xf]
      %v691 = vld [vmem:[%s1 + $0x76c] sm:$0xf]
      %v692 = vld [vmem:[%s1 + $0x770] sm:$0xf]
      %v693 = vld [vmem:[%s1 + $0x774] sm:$0xf]
      %v694 = vld [vmem:[%s1 + $0x778] sm:$0xf]
      %v695 = vld [vmem:[%s1 + $0x77c] sm:$0xf]
      %v696 = vld [vmem:[%s1 + $0x780] sm:$0xf]
      %v697 = vld [vmem:[%s1 + $0x784] sm:$0xf]
      %v698 = vld [vmem:[%s1 + $0x788] sm:$0xf]
      %v699 = vld [vmem:[%s1 + $0x78c] sm:$0xf]
      %v700 = vld [vmem:[%s1 + $0x790] sm:$0xf]
      %v701 = vld [vmem:[%s1 + $0x794] sm:$0xf]
      %v702 = vld [vmem:[%s1 + $0x798] sm:$0xf]
      %v703 = vld [vmem:[%s1 + $0x79c] sm:$0xf]
      %v704 = vld [vmem:[%s1 + $0x7a0] sm:$0xf]
      %v705 = vld [vmem:[%s1 + $0x7a4] sm:$0xf]
      %v706 = vld [vmem:[%s1 + $0x7a8] sm:$0xf]
      %v707 = vld [vmem:[%s1 + $0x7ac] sm:$0xf]
      %v708 = vld [vmem:[%s1 + $0x7b0] sm:$0xf]
      %v709 = vld [vmem:[%s1 + $0x7b4] sm:$0xf]
      %v710 = vld [vmem:[%s1 + $0x7b8] sm:$0xf]
      %v711 = vld [vmem:[%s1 + $0x7bc] sm:$0xf]
      %v712 = vld [vmem:[%s1 + $0x7c0] sm:$0xf]
      %v713 = vld [vmem:[%s1 + $0x7c4] sm:$0xf]
      %v714 = vld [vmem:[%s1 + $0x7c8] sm:$0xf]
      %v715 = vld [vmem:[%s1 + $0x7cc] sm:$0xf]
      %v716 = vld [vmem:[%s1 + $0x7d0] sm:$0xf]
      %v717 = vld [vmem:[%s1 + $0x7d4] sm:$0xf]
      %v718 = vld [vmem:[%s1 + $0x7d8] sm:$0xf]
      %v719 = vld [vmem:[%s1 + $0x7dc] sm:$0xf]
      %v720 = vld [vmem:[%s1 + $0x7e0] sm:$0xf]
      %v721 = vld [vmem:[%s1 + $0x7e4] sm:$0xf]
      %v722 = vld [vmem:[%s1 + $0x7e8] sm:$0xf]
      %v723 = vld [vmem:[%s1 + $0x7ec] sm:$0xf]
      %v724 = vld [vmem:[%s1 + $0x7f0] sm:$0xf]
      %v725 = vld [vmem:[%s1 + $0x7f4] sm:$0xf]
      %v726 = vld [vmem:[%s1 + $0x7f8] sm:$0xf]
      %v727 = vld [vmem:[%s1 + $0x7fc] sm:$0xf]
      %v728 = vld [vmem:[%s1 + $0x800] sm:$0xf]
      %v729 = vld [vmem:[%s1 + $0x804] sm:$0xf]
      %v730 = vld [vmem:[%s1 + $0x808] sm:$0xf]
      %v731 = vld [vmem:[%s1 + $0x80c] sm:$0xf]
      %v732 = vld [vmem:[%s1 + $0x810] sm:$0xf]
      %v733 = vld [vmem:[%s1 + $0x814] sm:$0xf]
      %v734 = vld [vmem:[%s1 + $0x818] sm:$0xf]
      %v735 = vld [vmem:[%s1 + $0x81c] sm:$0xf]
      %v736 = vld [vmem:[%s1 + $0x820] sm:$0xf]
      %v737 = vld [vmem:[%s1 + $0x824] sm:$0xf]
      %v738 = vld [vmem:[%s1 + $0x828] sm:$0xf]
      %v739 = vld [vmem:[%s1 + $0x82c] sm:$0xf]
      %v740 = vld [vmem:[%s1 + $0x830] sm:$0xf]
      %v741 = vld [vmem:[%s1 + $0x834] sm:$0xf]
      %v742 = vld [vmem:[%s1 + $0x838] sm:$0xf]
      %v743 = vld [vmem:[%s1 + $0x83c] sm:$0xf]
      %v744 = vld [vmem:[%s1 + $0x840] sm:$0xf]
      %v745 = vld [vmem:[%s1 + $0x844] sm:$0xf]
      %v746 = vld [vmem:[%s1 + $0x848] sm:$0xf]
      %v747 = vld [vmem:[%s1 + $0x84c] sm:$0xf]
      %v748 = vld [vmem:[%s1 + $0x850] sm:$0xf]
      %v749 = vld [vmem:[%s1 + $0x854] sm:$0xf]
      %v750 = vld [vmem:[%s1 + $0x858] sm:$0xf]
      %v751 = vld [vmem:[%s1 + $0x85c] sm:$0xf]
      %v752 = vld [vmem:[%s1 + $0x860] sm:$0xf]
      %v753 = vld [vmem:[%s1 + $0x864] sm:$0xf]
      %v754 = vld [vmem:[%s1 + $0x868] sm:$0xf]
      %v755 = vld [vmem:[%s1 + $0x86c] sm:$0xf]
      %v756 = vld [vmem:[%s1 + $0x870] sm:$0xf]
      %v757 = vld [vmem:[%s1 + $0x874] sm:$0xf]
      %v758 = vld [vmem:[%s1 + $0x878] sm:$0xf]
      %v759 = vld [vmem:[%s1 + $0x87c] sm:$0xf]
      %v760 = vld [vmem:[%s1 + $0x880] sm:$0xf]
      %v761 = vld [vmem:[%s1 + $0x884] sm:$0xf]
      %v762 = vld [vmem:[%s1 + $0x888] sm:$0xf]
      %v763 = vld [vmem:[%s1 + $0x88c] sm:$0xf]
      %v764 = vld [vmem:[%s1 + $0x890] sm:$0xf]
      %v765 = vld [vmem:[%s1 + $0x894] sm:$0xf]
      %v766 = vld [vmem:[%s1 + $0x898] sm:$0xf]
      %v767 = vld [vmem:[%s1 + $0x89c] sm:$0xf]
      %v768 = vld [vmem:[%s1 + $0x8a0] sm:$0xf]
      %v769 = vld [vmem:[%s1 + $0x8a4] sm:$0xf]
      %v770 = vld [vmem:[%s1 + $0x8a8] sm:$0xf]
      %v771 = vld [vmem:[%s1 + $0x8ac] sm:$0xf]
      %v772 = vld [vmem:[%s1 + $0x8b0] sm:$0xf]
      %v773 = vld [vmem:[%s1 + $0x8b4] sm:$0xf]
      %v774 = vld [vmem:[%s1 + $0x8b8] sm:$0xf]
      %v775 = vld [vmem:[%s1 + $0x8bc] sm:$0xf]
      %v776 = vld [vmem:[%s1 + $0x8c0] sm:$0xf]
      %v777 = vld [vmem:[%s1 + $0x8c4] sm:$0xf]
      %v778 = vld [vmem:[%s1 + $0x8c8] sm:$0xf]
      %v779 = vld [vmem:[%s1 + $0x8cc] sm:$0xf]
      %v780 = vld [vmem:[%s1 + $0x8d0] sm:$0xf]
      %v781 = vld [vmem:[%s1 + $0x8d4] sm:$0xf]
      %v782 = vld [vmem:[%s1 + $0x8d8] sm:$0xf]
      %v783 = vld [vmem:[%s1 + $0x8dc] sm:$0xf]
      %v784 = vld [vmem:[%s1 + $0x8e0] sm:$0xf]
      %v785 = vld [vmem:[%s1 + $0x8e4] sm:$0xf]
      %v786 = vld [vmem:[%s1 + $0x8e8] sm:$0xf]
      %v787 = vld [vmem:[%s1 + $0x8ec] sm:$0xf]
      %v788 = vld [vmem:[%s1 + $0x8f0] sm:$0xf]
      %v789 = vld [vmem:[%s1 + $0x8f4] sm:$0xf]
      %v790 = vld [vmem:[%s1 + $0x8f8] sm:$0xf]
      %v791 = vld [vmem:[%s1 + $0x8fc] sm:$0xf]
      %v792 = vld [vmem:[%s1 + $0x900] sm:$0xf]
      %v793 = vld [vmem:[%s1 + $0x904] sm:$0xf]
      %v794 = vld [vmem:[%s1 + $0x908] sm:$0xf]
      %v795 = vld [vmem:[%s1 + $0x90c] sm:$0xf]
      %v796 = vld [vmem:[%s1 + $0x910] sm:$0xf]
      %v797 = vld [vmem:[%s1 + $0x914] sm:$0xf]
      %v798 = vld [vmem:[%s1 + $0x918] sm:$0xf]
      %v799 = vld [vmem:[%s1 + $0x91c] sm:$0xf]
      %v800 = vld [vmem:[%s1 + $0x920] sm:$0xf]
      %v801 = vld [vmem:[%s1 + $0x924] sm:$0xf]
      %v802 = vld [vmem:[%s1 + $0x928] sm:$0xf]
      %v803 = vld [vmem:[%s1 + $0x92c] sm:$0xf]
      %v804 = vld [vmem:[%s1 + $0x930] sm:$0xf]
      %v805 = vld [vmem:[%s1 + $0x934] sm:$0xf]
      %v806 = vld [vmem:[%s1 + $0x938] sm:$0xf]
      %v807 = vld [vmem:[%s1 + $0x93c] sm:$0xf]
      %v808 = vld [vmem:[%s1 + $0x940] sm:$0xf]
      %v809 = vld [vmem:[%s1 + $0x944] sm:$0xf]
      %v810 = vld [vmem:[%s2] sm:$0x1]
      %v812 = vlaneseq
      %v813 = vshrl.u32 %v812, 7
      %v814 = vsub.s32 0, %v813
      %v815 = vrot.slane %v810, %v814
      %v855 = vunpack.c.l.b16 %v178
      %v856 = vunpack.c.h.b16 %v178
      %v857 = vunpack.c.l.b16 %v179
      %v858 = vunpack.c.h.b16 %v179
      %v859 = vunpack.c.l.b16 %v180
      %v860 = vunpack.c.h.b16 %v180
      %v861 = vunpack.c.l.b16 %v181
      %v862 = vunpack.c.h.b16 %v181
      %v863 = vunpack.c.l.b16 %v182
      %v864 = vunpack.c.h.b16 %v182
      %v865 = vunpack.c.l.b16 %v183
      %v866 = vunpack.c.h.b16 %v183
      %v867 = vunpack.c.l.b16 %v184
      %v868 = vunpack.c.h.b16 %v184
      %v869 = vunpack.c.l.b16 %v185
      %v870 = vunpack.c.h.b16 %v185
      %v871 = vunpack.c.l.b16 %v186
      %v872 = vunpack.c.h.b16 %v186
      %v873 = vunpack.c.l.b16 %v187
      %v874 = vunpack.c.h.b16 %v187
      %v875 = vunpack.c.l.b16 %v188
      %v876 = vunpack.c.h.b16 %v188
      %v877 = vunpack.c.l.b16 %v189
      %v878 = vunpack.c.h.b16 %v189
      %v879 = vunpack.c.l.b16 %v190
      %v880 = vunpack.c.h.b16 %v190
      %v881 = vunpack.c.l.b16 %v191
      %v882 = vunpack.c.h.b16 %v191
      %v883 = vunpack.c.l.b16 %v192
      %v884 = vunpack.c.h.b16 %v192
      %v885 = vunpack.c.l.b16 %v193
      %v886 = vunpack.c.h.b16 %v193
      %v887 = vunpack.c.l.b16 %v194
      %v888 = vunpack.c.h.b16 %v194
      %v889 = vunpack.c.l.b16 %v195
      %v890 = vunpack.c.h.b16 %v195
      %v891 = vunpack.c.l.b16 %v196
      %v892 = vunpack.c.h.b16 %v196
      %v893 = vunpack.c.l.b16 %v197
      %v894 = vunpack.c.h.b16 %v197
      %v895 = vunpack.c.l.b16 %v198
      %v896 = vunpack.c.h.b16 %v198
      %v897 = vunpack.c.l.b16 %v199
      %v898 = vunpack.c.h.b16 %v199
      %v899 = vunpack.c.l.b16 %v200
      %v900 = vunpack.c.h.b16 %v200
      %v901 = vunpack.c.l.b16 %v201
      %v902 = vunpack.c.h.b16 %v201
      %v903 = vunpack.c.l.b16 %v202
      %v904 = vunpack.c.h.b16 %v202
      %v905 = vunpack.c.l.b16 %v203
      %v906 = vunpack.c.h.b16 %v203
      %v907 = vunpack.c.l.b16 %v204
      %v908 = vunpack.c.h.b16 %v204
      %v909 = vunpack.c.l.b16 %v205
      %v910 = vunpack.c.h.b16 %v205
      %v911 = vunpack.c.l.b16 %v206
      %v912 = vunpack.c.h.b16 %v206
      %v913 = vunpack.c.l.b16 %v207
      %v914 = vunpack.c.h.b16 %v207
      %v915 = vunpack.c.l.b16 %v208
      %v916 = vunpack.c.h.b16 %v208
      %v917 = vunpack.c.l.b16 %v209
      %v918 = vunpack.c.h.b16 %v209
      %v919 = vunpack.c.l.b16 %v210
      %v920 = vunpack.c.h.b16 %v210
      %v921 = vunpack.c.l.b16 %v211
      %v922 = vunpack.c.h.b16 %v211
      %v923 = vunpack.c.l.b16 %v212
      %v924 = vunpack.c.h.b16 %v212
      %v925 = vunpack.c.l.b16 %v213
      %v926 = vunpack.c.h.b16 %v213
      %v927 = vunpack.c.l.b16 %v214
      %v928 = vunpack.c.h.b16 %v214
      %v929 = vunpack.c.l.b16 %v215
      %v930 = vunpack.c.h.b16 %v215
      %v931 = vpack.c.b16 %v893, %v855
      %v932 = vpack.c.b16 %v894, %v856
      %v933 = vpack.c.b16 %v895, %v857
      %v934 = vpack.c.b16 %v896, %v858
      %v935 = vpack.c.b16 %v897, %v859
      %v936 = vpack.c.b16 %v898, %v860
      %v937 = vpack.c.b16 %v899, %v861
      %v938 = vpack.c.b16 %v900, %v862
      %v939 = vpack.c.b16 %v901, %v863
      %v940 = vpack.c.b16 %v902, %v864
      %v941 = vpack.c.b16 %v903, %v865
      %v942 = vpack.c.b16 %v904, %v866
      %v943 = vpack.c.b16 %v905, %v867
      %v944 = vpack.c.b16 %v906, %v868
      %v945 = vpack.c.b16 %v907, %v869
      %v946 = vpack.c.b16 %v908, %v870
      %v947 = vpack.c.b16 %v909, %v871
      %v948 = vpack.c.b16 %v910, %v872
      %v949 = vpack.c.b16 %v911, %v873
      %v950 = vpack.c.b16 %v912, %v874
      %v951 = vpack.c.b16 %v913, %v875
      %v952 = vpack.c.b16 %v914, %v876
      %v953 = vpack.c.b16 %v915, %v877
      %v954 = vpack.c.b16 %v916, %v878
      %v955 = vpack.c.b16 %v917, %v879
      %v956 = vpack.c.b16 %v918, %v880
      %v957 = vpack.c.b16 %v919, %v881
      %v958 = vpack.c.b16 %v920, %v882
      %v959 = vpack.c.b16 %v921, %v883
      %v960 = vpack.c.b16 %v922, %v884
      %v961 = vpack.c.b16 %v923, %v885
      %v962 = vpack.c.b16 %v924, %v886
      %v963 = vpack.c.b16 %v925, %v887
      %v964 = vpack.c.b16 %v926, %v888
      %v965 = vpack.c.b16 %v927, %v889
      %v966 = vpack.c.b16 %v928, %v890
      %v967 = vpack.c.b16 %v929, %v891
      %v968 = vpack.c.b16 %v930, %v892
      %v1600 = vunpack.c.l.b16 %v216
      %v1601 = vunpack.c.l.b16 %v217
      %v1602 = vunpack.c.l.b16 %v218
      %v1603 = vunpack.c.l.b16 %v219
      %v1604 = vunpack.c.l.b16 %v220
      %v1605 = vunpack.c.l.b16 %v221
      %v1606 = vunpack.c.l.b16 %v222
      %v1607 = vunpack.c.l.b16 %v223
      %v1608 = vunpack.c.l.b16 %v224
      %v1609 = vunpack.c.l.b16 %v225
      %v1610 = vunpack.c.l.b16 %v226
      %v1611 = vunpack.c.l.b16 %v227
      %v1612 = vunpack.c.l.b16 %v228
      %v1613 = vunpack.c.l.b16 %v229
      %v1614 = vunpack.c.l.b16 %v230
      %v1615 = vunpack.c.l.b16 %v231
      %v1616 = vunpack.c.l.b16 %v232
      %v1617 = vunpack.c.l.b16 %v233
      %v1618 = vunpack.c.l.b16 %v234
      %v1619 = vunpack.c.l.b16 %v235
      %v1620 = vunpack.c.l.b16 %v236
      %v1621 = vunpack.c.l.b16 %v237
      %v1622 = vunpack.c.l.b16 %v238
      %v1623 = vunpack.c.l.b16 %v239
      %v1624 = vunpack.c.l.b16 %v240
      %v1625 = vunpack.c.l.b16 %v241
      %v1626 = vunpack.c.l.b16 %v242
      %v1627 = vunpack.c.l.b16 %v243
      %v1628 = vunpack.c.l.b16 %v244
      %v1629 = vunpack.c.l.b16 %v245
      %v1630 = vunpack.c.l.b16 %v246
      %v1631 = vunpack.c.l.b16 %v247
      %v1632 = vunpack.c.l.b16 %v248
      %v1633 = vunpack.c.l.b16 %v249
      %v1634 = vunpack.c.l.b16 %v250
      %v1635 = vunpack.c.l.b16 %v251
      %v1636 = vunpack.c.l.b16 %v252
      %v1637 = vunpack.c.l.b16 %v253
      %v1638 = vunpack.c.l.b16 %v254
      %v1639 = vunpack.c.l.b16 %v255
      %v1640 = vunpack.c.l.b16 %v256
      %v1641 = vunpack.c.l.b16 %v257
      %v1642 = vunpack.c.l.b16 %v258
      %v1643 = vunpack.c.l.b16 %v259
      %v1644 = vunpack.c.l.b16 %v260
      %v1645 = vunpack.c.l.b16 %v261
      %v1646 = vunpack.c.l.b16 %v262
      %v1647 = vunpack.c.l.b16 %v263
      %v1648 = vunpack.c.l.b16 %v264
      %v1649 = vunpack.c.l.b16 %v265
      %v1650 = vunpack.c.l.b16 %v266
      %v1651 = vunpack.c.l.b16 %v267
      %v1652 = vunpack.c.l.b16 %v268
      %v1653 = vunpack.c.l.b16 %v269
      %v1654 = vunpack.c.l.b16 %v270
      %v1655 = vunpack.c.l.b16 %v271
      %v1656 = vunpack.c.l.b16 %v272
      %v1657 = vunpack.c.l.b16 %v273
      %v1658 = vunpack.c.l.b16 %v274
      %v1659 = vunpack.c.l.b16 %v275
      %v1660 = vunpack.c.l.b16 %v276
      %v1661 = vunpack.c.l.b16 %v277
      %v1662 = vunpack.c.l.b16 %v278
      %v1663 = vunpack.c.l.b16 %v279
      %v1664 = vunpack.c.l.b16 %v280
      %v1665 = vunpack.c.l.b16 %v281
      %v1666 = vunpack.c.l.b16 %v282
      %v1667 = vunpack.c.l.b16 %v283
      %v1668 = vunpack.c.l.b16 %v284
      %v1669 = vunpack.c.l.b16 %v285
      %v1670 = vunpack.c.l.b16 %v286
      %v1671 = vunpack.c.l.b16 %v287
      %v1672 = vunpack.c.l.b16 %v288
      %v1673 = vunpack.c.l.b16 %v289
      %v1674 = vunpack.c.l.b16 %v290
      %v1675 = vunpack.c.l.b16 %v291
      %v1676 = vunpack.c.l.b16 %v292
      %v1677 = vunpack.c.l.b16 %v293
      %v1678 = vunpack.c.l.b16 %v294
      %v1679 = vunpack.c.l.b16 %v295
      %v1680 = vunpack.c.l.b16 %v296
      %v1681 = vunpack.c.l.b16 %v297
      %v1682 = vunpack.c.l.b16 %v298
      %v1683 = vunpack.c.l.b16 %v299
      %v1684 = vunpack.c.l.b16 %v300
      %v1685 = vunpack.c.l.b16 %v301
      %v1686 = vunpack.c.l.b16 %v302
      %v1687 = vunpack.c.l.b16 %v303
      %v1688 = vunpack.c.l.b16 %v304
      %v1689 = vunpack.c.l.b16 %v305
      %v1690 = vunpack.c.l.b16 %v306
      %v1691 = vunpack.c.l.b16 %v307
      %v1692 = vunpack.c.l.b16 %v308
      %v1693 = vunpack.c.l.b16 %v309
      %v1694 = vunpack.c.l.b16 %v310
      %v1695 = vunpack.c.l.b16 %v311
      %v1696 = vunpack.c.l.b16 %v312
      %v1697 = vunpack.c.l.b16 %v313
      %v1698 = vunpack.c.l.b16 %v314
      %v1699 = vunpack.c.l.b16 %v315
      %v1700 = vunpack.c.l.b16 %v316
      %v1701 = vunpack.c.l.b16 %v317
      %v1702 = vunpack.c.l.b16 %v318
      %v1703 = vunpack.c.l.b16 %v319
      %v1704 = vunpack.c.l.b16 %v320
      %v1705 = vunpack.c.l.b16 %v321
      %v1706 = vunpack.c.l.b16 %v322
      %v1707 = vunpack.c.l.b16 %v323
      %v1708 = vunpack.c.l.b16 %v324
      %v1709 = vunpack.c.l.b16 %v325
      %v1710 = vunpack.c.l.b16 %v326
      %v1711 = vunpack.c.l.b16 %v327
      %v1712 = vunpack.c.l.b16 %v328
      %v1713 = vunpack.c.l.b16 %v329
      %v1714 = vunpack.c.l.b16 %v330
      %v1715 = vunpack.c.l.b16 %v331
      %v1716 = vunpack.c.l.b16 %v332
      %v1717 = vunpack.c.l.b16 %v333
      %v1718 = vunpack.c.l.b16 %v334
      %v1719 = vunpack.c.l.b16 %v335
      %v1720 = vunpack.c.l.b16 %v336
      %v1721 = vunpack.c.l.b16 %v337
      %v1722 = vunpack.c.l.b16 %v338
      %v1723 = vunpack.c.l.b16 %v339
      %v1724 = vunpack.c.l.b16 %v340
      %v1725 = vunpack.c.l.b16 %v341
      %v1726 = vunpack.c.l.b16 %v342
      %v1727 = vunpack.c.l.b16 %v343
      %v1728 = vunpack.c.l.b16 %v344
      %v1729 = vunpack.c.l.b16 %v345
      %v1730 = vunpack.c.l.b16 %v346
      %v1731 = vunpack.c.l.b16 %v347
      %v1732 = vunpack.c.l.b16 %v348
      %v1733 = vunpack.c.l.b16 %v349
      %v1734 = vunpack.c.l.b16 %v350
      %v1735 = vunpack.c.l.b16 %v351
      %v1736 = vunpack.c.l.b16 %v352
      %v1737 = vunpack.c.l.b16 %v353
      %v1738 = vunpack.c.l.b16 %v354
      %v1739 = vunpack.c.l.b16 %v355
      %v1740 = vunpack.c.l.b16 %v356
      %v1741 = vunpack.c.l.b16 %v357
      %v1742 = vunpack.c.l.b16 %v358
      %v1743 = vunpack.c.l.b16 %v359
      %v1744 = vunpack.c.l.b16 %v360
      %v1745 = vunpack.c.l.b16 %v361
      %v1746 = vunpack.c.l.b16 %v362
      %v1747 = vunpack.c.l.b16 %v363
      %v1748 = vunpack.c.l.b16 %v364
      %v1749 = vunpack.c.l.b16 %v365
      %v1750 = vunpack.c.l.b16 %v366
      %v1751 = vunpack.c.l.b16 %v367
      %v1752 = vunpack.c.l.b16 %v368
      %v1753 = vunpack.c.l.b16 %v369
      %v1754 = vunpack.c.l.b16 %v370
      %v1755 = vunpack.c.l.b16 %v371
      %v1756 = vunpack.c.l.b16 %v372
      %v1757 = vunpack.c.l.b16 %v373
      %v1758 = vunpack.c.l.b16 %v374
      %v1759 = vunpack.c.l.b16 %v375
      %v1760 = vunpack.c.l.b16 %v376
      %v1761 = vunpack.c.l.b16 %v377
      %v1762 = vunpack.c.l.b16 %v378
      %v1763 = vunpack.c.l.b16 %v379
      %v1764 = vunpack.c.l.b16 %v380
      %v1765 = vunpack.c.l.b16 %v381
      %v1766 = vunpack.c.l.b16 %v382
      %v1767 = vunpack.c.l.b16 %v383
      %v1768 = vunpack.c.l.b16 %v384
      %v1769 = vunpack.c.l.b16 %v385
      %v1770 = vunpack.c.l.b16 %v386
      %v1771 = vunpack.c.l.b16 %v387
      %v1772 = vunpack.c.l.b16 %v388
      %v1773 = vunpack.c.l.b16 %v389
      %v1774 = vunpack.c.l.b16 %v390
      %v1775 = vunpack.c.l.b16 %v391
      %v1776 = vunpack.c.l.b16 %v392
      %v1777 = vunpack.c.l.b16 %v393
      %v1778 = vunpack.c.l.b16 %v394
      %v1779 = vunpack.c.l.b16 %v395
      %v1780 = vunpack.c.l.b16 %v396
      %v1781 = vunpack.c.l.b16 %v397
      %v1782 = vunpack.c.l.b16 %v398
      %v1783 = vunpack.c.l.b16 %v399
      %v1784 = vunpack.c.l.b16 %v400
      %v1785 = vunpack.c.l.b16 %v401
      %v1786 = vunpack.c.l.b16 %v402
      %v1787 = vunpack.c.l.b16 %v403
      %v1788 = vunpack.c.l.b16 %v404
      %v1789 = vunpack.c.l.b16 %v405
      %v1790 = vunpack.c.l.b16 %v406
      %v1791 = vunpack.c.l.b16 %v407
      %v1792 = vunpack.c.l.b16 %v408
      %v1793 = vunpack.c.l.b16 %v409
      %v1794 = vunpack.c.l.b16 %v410
      %v1795 = vunpack.c.l.b16 %v411
      %v1796 = vunpack.c.l.b16 %v412
      %v1797 = vunpack.c.l.b16 %v413
      %v1798 = vunpack.c.l.b16 %v414
      %v1799 = vunpack.c.l.b16 %v415
      %v1800 = vunpack.c.l.b16 %v416
      %v1801 = vunpack.c.l.b16 %v417
      %v1802 = vunpack.c.l.b16 %v418
      %v1803 = vunpack.c.l.b16 %v419
      %v1804 = vunpack.c.l.b16 %v420
      %v1805 = vunpack.c.l.b16 %v421
      %v1806 = vunpack.c.l.b16 %v422
      %v1807 = vunpack.c.l.b16 %v423
      %v1808 = vunpack.c.l.b16 %v424
      %v1809 = vunpack.c.l.b16 %v425
      %v1810 = vunpack.c.l.b16 %v426
      %v1811 = vunpack.c.l.b16 %v427
      %v1812 = vunpack.c.l.b16 %v428
      %v1813 = vunpack.c.l.b16 %v429
      %v1814 = vunpack.c.l.b16 %v430
      %v1815 = vunpack.c.l.b16 %v431
      %v1816 = vunpack.c.l.b16 %v432
      %v1817 = vunpack.c.l.b16 %v433
      %v1818 = vunpack.c.l.b16 %v434
      %v1819 = vunpack.c.l.b16 %v435
      %v1820 = vunpack.c.l.b16 %v436
      %v1821 = vunpack.c.l.b16 %v437
      %v1822 = vunpack.c.l.b16 %v438
      %v1823 = vunpack.c.l.b16 %v439
      %v1824 = vunpack.c.l.b16 %v440
      %v1825 = vunpack.c.l.b16 %v441
      %v1826 = vunpack.c.l.b16 %v442
      %v1827 = vunpack.c.l.b16 %v443
      %v1828 = vunpack.c.l.b16 %v444
      %v1829 = vunpack.c.l.b16 %v445
      %v1830 = vunpack.c.l.b16 %v446
      %v1831 = vunpack.c.l.b16 %v447
      %v1832 = vunpack.c.l.b16 %v448
      %v1833 = vunpack.c.l.b16 %v449
      %v1834 = vunpack.c.l.b16 %v450
      %v1835 = vunpack.c.l.b16 %v451
      %v1836 = vunpack.c.l.b16 %v452
      %v1837 = vunpack.c.l.b16 %v453
      %v1838 = vunpack.c.l.b16 %v454
      %v1839 = vunpack.c.l.b16 %v455
      %v1840 = vunpack.c.l.b16 %v456
      %v1841 = vunpack.c.l.b16 %v457
      %v1842 = vunpack.c.l.b16 %v458
      %v1843 = vunpack.c.l.b16 %v459
      %v1844 = vunpack.c.l.b16 %v460
      %v1845 = vunpack.c.l.b16 %v461
      %v1846 = vunpack.c.l.b16 %v462
      %v1847 = vunpack.c.l.b16 %v463
      %v1848 = vunpack.c.l.b16 %v464
      %v1849 = vunpack.c.l.b16 %v465
      %v1850 = vunpack.c.l.b16 %v466
      %v1851 = vunpack.c.l.b16 %v467
      %v1852 = vunpack.c.l.b16 %v468
      %v1853 = vunpack.c.l.b16 %v469
      %v1854 = vunpack.c.l.b16 %v470
      %v1855 = vunpack.c.l.b16 %v471
      %v1856 = vunpack.c.l.b16 %v472
      %v1857 = vunpack.c.l.b16 %v473
      %v1858 = vunpack.c.l.b16 %v474
      %v1859 = vunpack.c.l.b16 %v475
      %v1860 = vunpack.c.l.b16 %v476
      %v1861 = vunpack.c.l.b16 %v477
      %v1862 = vunpack.c.l.b16 %v478
      %v1863 = vunpack.c.l.b16 %v479
      %v1864 = vunpack.c.l.b16 %v480
      %v1865 = vunpack.c.l.b16 %v481
      %v1866 = vunpack.c.l.b16 %v482
      %v1867 = vunpack.c.l.b16 %v483
      %v1868 = vunpack.c.l.b16 %v484
      %v1869 = vunpack.c.l.b16 %v485
      %v1870 = vunpack.c.l.b16 %v486
      %v1871 = vunpack.c.l.b16 %v487
      %v1872 = vunpack.c.l.b16 %v488
      %v1873 = vunpack.c.l.b16 %v489
      %v1874 = vunpack.c.l.b16 %v490
      %v1875 = vunpack.c.l.b16 %v491
      %v1876 = vunpack.c.l.b16 %v492
      %v1877 = vunpack.c.l.b16 %v493
      %v1878 = vunpack.c.l.b16 %v494
      %v1879 = vunpack.c.l.b16 %v495
      %v1880 = vunpack.c.l.b16 %v496
      %v1881 = vunpack.c.l.b16 %v497
      %v1882 = vunpack.c.l.b16 %v498
      %v1883 = vunpack.c.l.b16 %v499
      %v1884 = vunpack.c.l.b16 %v500
      %v1885 = vunpack.c.l.b16 %v501
      %v1886 = vunpack.c.l.b16 %v502
      %v1887 = vunpack.c.l.b16 %v503
      %v1888 = vunpack.c.l.b16 %v504
      %v1889 = vunpack.c.l.b16 %v505
      %v1890 = vunpack.c.l.b16 %v506
      %v1891 = vunpack.c.l.b16 %v507
      %v1892 = vunpack.c.l.b16 %v508
      %v1893 = vunpack.c.l.b16 %v509
      %v1894 = vunpack.c.l.b16 %v510
      %v1895 = vunpack.c.l.b16 %v511
      %v1896 = vunpack.c.l.b16 %v512
      %v1897 = vunpack.c.l.b16 %v513
      %v1898 = vunpack.c.l.b16 %v514
      %v1899 = vunpack.c.l.b16 %v515
      %v1900 = vunpack.c.l.b16 %v516
      %v1901 = vunpack.c.l.b16 %v517
      %v1902 = vunpack.c.l.b16 %v518
      %v1903 = vunpack.c.l.b16 %v519
      %v1904 = vunpack.c.l.b16 %v520
      %v1905 = vunpack.c.l.b16 %v521
      %v1906 = vunpack.c.l.b16 %v522
      %v1907 = vunpack.c.l.b16 %v523
      %v1908 = vunpack.c.l.b16 %v524
      %v1909 = vunpack.c.l.b16 %v525
      %v1910 = vunpack.c.l.b16 %v526
      %v1911 = vunpack.c.l.b16 %v527
      %v1912 = vunpack.c.l.b16 %v528
      %v1913 = vunpack.c.l.b16 %v529
      %v1914 = vunpack.c.l.b16 %v530
      %v1915 = vunpack.c.l.b16 %v531
      %v1916 = vunpack.c.l.b16 %v532
      %v1917 = vunpack.c.l.b16 %v533
      %v1918 = vunpack.c.l.b16 %v534
      %v1919 = vunpack.c.l.b16 %v535
      %v1920 = vunpack.c.l.b16 %v536
      %v1921 = vunpack.c.l.b16 %v537
      %v1922 = vunpack.c.l.b16 %v538
      %v1923 = vunpack.c.l.b16 %v539
      %v1924 = vunpack.c.l.b16 %v540
      %v1925 = vunpack.c.l.b16 %v541
      %v1926 = vunpack.c.l.b16 %v542
      %v1927 = vunpack.c.l.b16 %v543
      %v1928 = vunpack.c.l.b16 %v544
      %v1929 = vunpack.c.l.b16 %v545
      %v1930 = vunpack.c.l.b16 %v546
      %v1931 = vunpack.c.l.b16 %v547
      %v1932 = vunpack.c.l.b16 %v548
      %v1933 = vunpack.c.l.b16 %v549
      %v1934 = vunpack.c.l.b16 %v550
      %v1935 = vunpack.c.l.b16 %v551
      %v1936 = vunpack.c.l.b16 %v552
      %v1937 = vunpack.c.l.b16 %v553
      %v1938 = vunpack.c.l.b16 %v554
      %v1939 = vunpack.c.l.b16 %v555
      %v1940 = vunpack.c.l.b16 %v556
      %v1941 = vunpack.c.l.b16 %v557
      %v1942 = vunpack.c.l.b16 %v558
      %v1943 = vunpack.c.l.b16 %v559
      %v1944 = vunpack.c.l.b16 %v560
      %v1945 = vunpack.c.l.b16 %v561
      %v1946 = vunpack.c.l.b16 %v562
      %v1947 = vunpack.c.l.b16 %v563
      %v1948 = vunpack.c.l.b16 %v564
      %v1949 = vunpack.c.l.b16 %v565
      %v1950 = vunpack.c.l.b16 %v566
      %v1951 = vunpack.c.l.b16 %v567
      %v1952 = vunpack.c.l.b16 %v568
      %v1953 = vunpack.c.l.b16 %v569
      %v1954 = vunpack.c.l.b16 %v570
      %v1955 = vunpack.c.l.b16 %v571
      %v1956 = vunpack.c.l.b16 %v572
      %v1957 = vunpack.c.l.b16 %v573
      %v1958 = vunpack.c.l.b16 %v574
      %v1959 = vunpack.c.l.b16 %v575
      %v1960 = vunpack.c.l.b16 %v576
      %v1961 = vunpack.c.l.b16 %v577
      %v1962 = vunpack.c.l.b16 %v578
      %v1963 = vunpack.c.l.b16 %v579
      %v1964 = vunpack.c.l.b16 %v580
      %v1965 = vunpack.c.l.b16 %v581
      %v1966 = vunpack.c.l.b16 %v582
      %v1967 = vunpack.c.l.b16 %v583
      %v1968 = vunpack.c.l.b16 %v584
      %v1969 = vunpack.c.l.b16 %v585
      %v1970 = vunpack.c.l.b16 %v586
      %v1971 = vunpack.c.l.b16 %v587
      %v1972 = vunpack.c.l.b16 %v588
      %v1973 = vunpack.c.l.b16 %v589
      %v1974 = vunpack.c.l.b16 %v590
      %v1975 = vunpack.c.l.b16 %v591
      %v1976 = vunpack.c.l.b16 %v592
      %v1977 = vunpack.c.l.b16 %v593
      %v1978 = vunpack.c.l.b16 %v594
      %v1979 = vunpack.c.l.b16 %v595
      %v1980 = vunpack.c.l.b16 %v596
      %v1981 = vunpack.c.l.b16 %v597
      %v1982 = vunpack.c.l.b16 %v598
      %v1983 = vunpack.c.l.b16 %v599
      %v1984 = vunpack.c.l.b16 %v600
      %v1985 = vunpack.c.l.b16 %v601
      %v1986 = vunpack.c.l.b16 %v602
      %v1987 = vunpack.c.l.b16 %v603
      %v1988 = vunpack.c.l.b16 %v604
      %v1989 = vunpack.c.l.b16 %v605
      %v1990 = vunpack.c.l.b16 %v606
      %v1991 = vunpack.c.l.b16 %v607
      %v1992 = vunpack.c.l.b16 %v608
      %v1993 = vunpack.c.l.b16 %v609
      %v1994 = vunpack.c.l.b16 %v610
      %v1995 = vunpack.c.l.b16 %v611
      %v1996 = vunpack.c.l.b16 %v612
      %v1997 = vunpack.c.l.b16 %v613
      %v1998 = vunpack.c.l.b16 %v614
      %v1999 = vunpack.c.l.b16 %v615
      %v2000 = vunpack.c.l.b16 %v616
      %v2001 = vunpack.c.l.b16 %v617
      %v2002 = vunpack.c.l.b16 %v618
      %v2003 = vunpack.c.l.b16 %v619
      %v2004 = vunpack.c.l.b16 %v620
      %v2005 = vunpack.c.l.b16 %v621
      %v2006 = vunpack.c.l.b16 %v622
      %v2007 = vunpack.c.l.b16 %v623
      %v2008 = vunpack.c.l.b16 %v624
      %v2009 = vunpack.c.l.b16 %v625
      %v2010 = vunpack.c.l.b16 %v626
      %v2011 = vunpack.c.l.b16 %v627
      %v2012 = vunpack.c.l.b16 %v628
      %v2013 = vunpack.c.l.b16 %v629
      %v2014 = vunpack.c.l.b16 %v630
      %v2015 = vunpack.c.l.b16 %v631
      %v2016 = vunpack.c.l.b16 %v632
      %v2017 = vunpack.c.l.b16 %v633
      %v2018 = vunpack.c.l.b16 %v634
      %v2019 = vunpack.c.l.b16 %v635
      %v2020 = vunpack.c.l.b16 %v636
      %v2021 = vunpack.c.l.b16 %v637
      %v2022 = vunpack.c.l.b16 %v638
      %v2023 = vunpack.c.l.b16 %v639
      %v2024 = vunpack.c.l.b16 %v640
      %v2025 = vunpack.c.l.b16 %v641
      %v2026 = vunpack.c.l.b16 %v642
      %v2027 = vunpack.c.l.b16 %v643
      %v2028 = vunpack.c.l.b16 %v644
      %v2029 = vunpack.c.l.b16 %v645
      %v2030 = vunpack.c.l.b16 %v646
      %v2031 = vunpack.c.l.b16 %v647
      %v2032 = vunpack.c.l.b16 %v648
      %v2033 = vunpack.c.l.b16 %v649
      %v2034 = vunpack.c.l.b16 %v650
      %v2035 = vunpack.c.l.b16 %v651
      %v2036 = vunpack.c.l.b16 %v652
      %v2037 = vunpack.c.l.b16 %v653
      %v2038 = vunpack.c.l.b16 %v654
      %v2039 = vunpack.c.l.b16 %v655
      %v2040 = vunpack.c.l.b16 %v656
      %v2041 = vunpack.c.l.b16 %v657
      %v2042 = vunpack.c.l.b16 %v658
      %v2043 = vunpack.c.l.b16 %v659
      %v2044 = vunpack.c.l.b16 %v660
      %v2045 = vunpack.c.l.b16 %v661
      %v2046 = vunpack.c.l.b16 %v662
      %v2047 = vunpack.c.l.b16 %v663
      %v2048 = vunpack.c.l.b16 %v664
      %v2049 = vunpack.c.l.b16 %v665
      %v2050 = vunpack.c.l.b16 %v666
      %v2051 = vunpack.c.l.b16 %v667
      %v2052 = vunpack.c.l.b16 %v668
      %v2053 = vunpack.c.l.b16 %v669
      %v2054 = vunpack.c.l.b16 %v670
      %v2055 = vunpack.c.l.b16 %v671
      %v2056 = vunpack.c.l.b16 %v672
      %v2057 = vunpack.c.l.b16 %v673
      %v2058 = vunpack.c.l.b16 %v674
      %v2059 = vunpack.c.l.b16 %v675
      %v2060 = vunpack.c.l.b16 %v676
      %v2061 = vunpack.c.l.b16 %v677
      %v2062 = vunpack.c.l.b16 %v678
      %v2063 = vunpack.c.l.b16 %v679
      %v2064 = vunpack.c.l.b16 %v680
      %v2065 = vunpack.c.l.b16 %v681
      %v2066 = vunpack.c.l.b16 %v682
      %v2067 = vunpack.c.l.b16 %v683
      %v2068 = vunpack.c.l.b16 %v684
      %v2069 = vunpack.c.l.b16 %v685
      %v2070 = vunpack.c.l.b16 %v686
      %v2071 = vunpack.c.l.b16 %v687
      %v2072 = vunpack.c.l.b16 %v688
      %v2073 = vunpack.c.l.b16 %v689
      %v2074 = vunpack.c.l.b16 %v690
      %v2075 = vunpack.c.l.b16 %v691
      %v2076 = vunpack.c.l.b16 %v692
      %v2077 = vunpack.c.l.b16 %v693
      %v2078 = vunpack.c.l.b16 %v694
      %v2079 = vunpack.c.l.b16 %v695
      %v2080 = vunpack.c.l.b16 %v696
      %v2081 = vunpack.c.l.b16 %v697
      %v2082 = vunpack.c.l.b16 %v698
      %v2083 = vunpack.c.l.b16 %v699
      %v2084 = vunpack.c.l.b16 %v700
      %v2085 = vunpack.c.l.b16 %v701
      %v2086 = vunpack.c.l.b16 %v702
      %v2087 = vunpack.c.l.b16 %v703
      %v2088 = vunpack.c.l.b16 %v704
      %v2089 = vunpack.c.l.b16 %v705
      %v2090 = vunpack.c.l.b16 %v706
      %v2091 = vunpack.c.l.b16 %v707
      %v2092 = vunpack.c.l.b16 %v708
      %v2093 = vunpack.c.l.b16 %v709
      %v2094 = vunpack.c.l.b16 %v710
      %v2095 = vunpack.c.l.b16 %v711
      %v2096 = vunpack.c.l.b16 %v712
      %v2097 = vunpack.c.l.b16 %v713
      %v2098 = vunpack.c.l.b16 %v714
      %v2099 = vunpack.c.l.b16 %v715
      %v2100 = vunpack.c.l.b16 %v716
      %v2101 = vunpack.c.l.b16 %v717
      %v2102 = vunpack.c.l.b16 %v718
      %v2103 = vunpack.c.l.b16 %v719
      %v2104 = vunpack.c.l.b16 %v720
      %v2105 = vunpack.c.l.b16 %v721
      %v2106 = vunpack.c.l.b16 %v722
      %v2107 = vunpack.c.l.b16 %v723
      %v2108 = vunpack.c.l.b16 %v724
      %v2109 = vunpack.c.l.b16 %v725
      %v2110 = vunpack.c.l.b16 %v726
      %v2111 = vunpack.c.l.b16 %v727
      %v2112 = vunpack.c.l.b16 %v728
      %v2113 = vunpack.c.l.b16 %v729
      %v2114 = vunpack.c.l.b16 %v730
      %v2115 = vunpack.c.l.b16 %v731
      %v2116 = vunpack.c.l.b16 %v732
      %v2117 = vunpack.c.l.b16 %v733
      %v2118 = vunpack.c.l.b16 %v734
      %v2119 = vunpack.c.l.b16 %v735
      %v2120 = vunpack.c.l.b16 %v736
      %v2121 = vunpack.c.l.b16 %v737
      %v2122 = vunpack.c.l.b16 %v738
      %v2123 = vunpack.c.l.b16 %v739
      %v2124 = vunpack.c.l.b16 %v740
      %v2125 = vunpack.c.l.b16 %v741
      %v2126 = vunpack.c.l.b16 %v742
      %v2127 = vunpack.c.l.b16 %v743
      %v2128 = vunpack.c.l.b16 %v744
      %v2129 = vunpack.c.l.b16 %v745
      %v2130 = vunpack.c.l.b16 %v746
      %v2131 = vunpack.c.l.b16 %v747
      %v2132 = vunpack.c.l.b16 %v748
      %v2133 = vunpack.c.l.b16 %v749
      %v2134 = vunpack.c.l.b16 %v750
      %v2135 = vunpack.c.l.b16 %v751
      %v2136 = vunpack.c.l.b16 %v752
      %v2137 = vunpack.c.l.b16 %v753
      %v2138 = vunpack.c.l.b16 %v754
      %v2139 = vunpack.c.l.b16 %v755
      %v2140 = vunpack.c.l.b16 %v756
      %v2141 = vunpack.c.l.b16 %v757
      %v2142 = vunpack.c.l.b16 %v758
      %v2143 = vunpack.c.l.b16 %v759
      %v2144 = vunpack.c.l.b16 %v760
      %v2145 = vunpack.c.l.b16 %v761
      %v2146 = vunpack.c.l.b16 %v762
      %v2147 = vunpack.c.l.b16 %v763
      %v2148 = vunpack.c.l.b16 %v764
      %v2149 = vunpack.c.l.b16 %v765
      %v2150 = vunpack.c.l.b16 %v766
      %v2151 = vunpack.c.l.b16 %v767
      %v2152 = vunpack.c.l.b16 %v768
      %v2153 = vunpack.c.l.b16 %v769
      %v2154 = vunpack.c.l.b16 %v770
      %v2155 = vunpack.c.l.b16 %v771
      %v2156 = vunpack.c.l.b16 %v772
      %v2157 = vunpack.c.l.b16 %v773
      %v2158 = vunpack.c.l.b16 %v774
      %v2159 = vunpack.c.l.b16 %v775
      %v2160 = vunpack.c.l.b16 %v776
      %v2161 = vunpack.c.l.b16 %v777
      %v2162 = vunpack.c.l.b16 %v778
      %v2163 = vunpack.c.l.b16 %v779
      %v2164 = vunpack.c.l.b16 %v780
      %v2165 = vunpack.c.l.b16 %v781
      %v2166 = vunpack.c.l.b16 %v782
      %v2167 = vunpack.c.l.b16 %v783
      %v2168 = vunpack.c.l.b16 %v784
      %v2169 = vunpack.c.l.b16 %v785
      %v2170 = vunpack.c.l.b16 %v786
      %v2171 = vunpack.c.l.b16 %v787
      %v2172 = vunpack.c.l.b16 %v788
      %v2173 = vunpack.c.l.b16 %v789
      %v2174 = vunpack.c.l.b16 %v790
      %v2175 = vunpack.c.l.b16 %v791
      %v2176 = vunpack.c.l.b16 %v792
      %v2177 = vunpack.c.l.b16 %v793
      %v2178 = vunpack.c.l.b16 %v794
      %v2179 = vunpack.c.l.b16 %v795
      %v2180 = vunpack.c.l.b16 %v796
      %v2181 = vunpack.c.l.b16 %v797
      %v2182 = vunpack.c.l.b16 %v798
      %v2183 = vunpack.c.l.b16 %v799
      %v2184 = vunpack.c.l.b16 %v800
      %v2185 = vunpack.c.l.b16 %v801
      %v2186 = vunpack.c.l.b16 %v802
      %v2187 = vunpack.c.l.b16 %v803
      %v2188 = vunpack.c.l.b16 %v804
      %v2189 = vunpack.c.l.b16 %v805
      %v2190 = vunpack.c.l.b16 %v806
      %v2191 = vunpack.c.l.b16 %v807
      %v2192 = vunpack.c.l.b16 %v808
      %v2193 = vunpack.c.l.b16 %v809
      %v2194 = vpack.c.b16 %v1601, %v1600
      %v2195 = vpack.c.b16 %v1603, %v1602
      %v2196 = vpack.c.b16 %v1605, %v1604
      %v2197 = vpack.c.b16 %v1607, %v1606
      %v2198 = vpack.c.b16 %v1609, %v1608
      %v2199 = vpack.c.b16 %v1611, %v1610
      %v2200 = vpack.c.b16 %v1613, %v1612
      %v2201 = vpack.c.b16 %v1615, %v1614
      %v2202 = vpack.c.b16 %v1617, %v1616
      %v2203 = vpack.c.b16 %v1619, %v1618
      %v2204 = vpack.c.b16 %v1621, %v1620
      %v2205 = vpack.c.b16 %v1623, %v1622
      %v2206 = vpack.c.b16 %v1625, %v1624
      %v2207 = vpack.c.b16 %v1627, %v1626
      %v2208 = vpack.c.b16 %v1629, %v1628
      %v2209 = vpack.c.b16 %v1631, %v1630
      %v2210 = vpack.c.b16 %v1633, %v1632
      %v2211 = vpack.c.b16 %v1635, %v1634
      %v2212 = vpack.c.b16 %v1637, %v1636
      %v2213 = vpack.c.b16 %v1639, %v1638
      %v2214 = vpack.c.b16 %v1641, %v1640
      %v2215 = vpack.c.b16 %v1643, %v1642
      %v2216 = vpack.c.b16 %v1645, %v1644
      %v2217 = vpack.c.b16 %v1647, %v1646
      %v2218 = vpack.c.b16 %v1649, %v1648
      %v2219 = vpack.c.b16 %v1651, %v1650
      %v2220 = vpack.c.b16 %v1653, %v1652
      %v2221 = vpack.c.b16 %v1655, %v1654
      %v2222 = vpack.c.b16 %v1657, %v1656
      %v2223 = vpack.c.b16 %v1659, %v1658
      %v2224 = vpack.c.b16 %v1661, %v1660
      %v2225 = vpack.c.b16 %v1663, %v1662
      %v2226 = vpack.c.b16 %v1665, %v1664
      %v2227 = vpack.c.b16 %v1667, %v1666
      %v2228 = vpack.c.b16 %v1669, %v1668
      %v2229 = vpack.c.b16 %v1671, %v1670
      %v2230 = vpack.c.b16 %v1673, %v1672
      %v2231 = vpack.c.b16 %v1675, %v1674
      %v2232 = vpack.c.b16 %v1677, %v1676
      %v2233 = vpack.c.b16 %v1679, %v1678
      %v2234 = vpack.c.b16 %v1681, %v1680
      %v2235 = vpack.c.b16 %v1683, %v1682
      %v2236 = vpack.c.b16 %v1685, %v1684
      %v2237 = vpack.c.b16 %v1687, %v1686
      %v2238 = vpack.c.b16 %v1689, %v1688
      %v2239 = vpack.c.b16 %v1691, %v1690
      %v2240 = vpack.c.b16 %v1693, %v1692
      %v2241 = vpack.c.b16 %v1695, %v1694
      %v2242 = vpack.c.b16 %v1697, %v1696
      %v2243 = vpack.c.b16 %v1699, %v1698
      %v2244 = vpack.c.b16 %v1701, %v1700
      %v2245 = vpack.c.b16 %v1703, %v1702
      %v2246 = vpack.c.b16 %v1705, %v1704
      %v2247 = vpack.c.b16 %v1707, %v1706
      %v2248 = vpack.c.b16 %v1709, %v1708
      %v2249 = vpack.c.b16 %v1711, %v1710
      %v2250 = vpack.c.b16 %v1713, %v1712
      %v2251 = vpack.c.b16 %v1715, %v1714
      %v2252 = vpack.c.b16 %v1717, %v1716
      %v2253 = vpack.c.b16 %v1719, %v1718
      %v2254 = vpack.c.b16 %v1721, %v1720
      %v2255 = vpack.c.b16 %v1723, %v1722
      %v2256 = vpack.c.b16 %v1725, %v1724
      %v2257 = vpack.c.b16 %v1727, %v1726
      %v2258 = vpack.c.b16 %v1729, %v1728
      %v2259 = vpack.c.b16 %v1731, %v1730
      %v2260 = vpack.c.b16 %v1733, %v1732
      %v2261 = vpack.c.b16 %v1735, %v1734
      %v2262 = vpack.c.b16 %v1737, %v1736
      %v2263 = vpack.c.b16 %v1739, %v1738
      %v2264 = vpack.c.b16 %v1741, %v1740
      %v2265 = vpack.c.b16 %v1743, %v1742
      %v2266 = vpack.c.b16 %v1745, %v1744
      %v2267 = vpack.c.b16 %v1747, %v1746
      %v2268 = vpack.c.b16 %v1749, %v1748
      %v2269 = vpack.c.b16 %v1751, %v1750
      %v2270 = vpack.c.b16 %v1753, %v1752
      %v2271 = vpack.c.b16 %v1755, %v1754
      %v2272 = vpack.c.b16 %v1757, %v1756
      %v2273 = vpack.c.b16 %v1759, %v1758
      %v2274 = vpack.c.b16 %v1761, %v1760
      %v2275 = vpack.c.b16 %v1763, %v1762
      %v2276 = vpack.c.b16 %v1765, %v1764
      %v2277 = vpack.c.b16 %v1767, %v1766
      %v2278 = vpack.c.b16 %v1769, %v1768
      %v2279 = vpack.c.b16 %v1771, %v1770
      %v2280 = vpack.c.b16 %v1773, %v1772
      %v2281 = vpack.c.b16 %v1775, %v1774
      %v2282 = vpack.c.b16 %v1777, %v1776
      %v2283 = vpack.c.b16 %v1779, %v1778
      %v2284 = vpack.c.b16 %v1781, %v1780
      %v2285 = vpack.c.b16 %v1783, %v1782
      %v2286 = vpack.c.b16 %v1785, %v1784
      %v2287 = vpack.c.b16 %v1787, %v1786
      %v2288 = vpack.c.b16 %v1789, %v1788
      %v2289 = vpack.c.b16 %v1791, %v1790
      %v2290 = vpack.c.b16 %v1793, %v1792
      %v2291 = vpack.c.b16 %v1795, %v1794
      %v2292 = vpack.c.b16 %v1797, %v1796
      %v2293 = vpack.c.b16 %v1799, %v1798
      %v2294 = vpack.c.b16 %v1801, %v1800
      %v2295 = vpack.c.b16 %v1803, %v1802
      %v2296 = vpack.c.b16 %v1805, %v1804
      %v2297 = vpack.c.b16 %v1807, %v1806
      %v2298 = vpack.c.b16 %v1809, %v1808
      %v2299 = vpack.c.b16 %v1811, %v1810
      %v2300 = vpack.c.b16 %v1813, %v1812
      %v2301 = vpack.c.b16 %v1815, %v1814
      %v2302 = vpack.c.b16 %v1817, %v1816
      %v2303 = vpack.c.b16 %v1819, %v1818
      %v2304 = vpack.c.b16 %v1821, %v1820
      %v2305 = vpack.c.b16 %v1823, %v1822
      %v2306 = vpack.c.b16 %v1825, %v1824
      %v2307 = vpack.c.b16 %v1827, %v1826
      %v2308 = vpack.c.b16 %v1829, %v1828
      %v2309 = vpack.c.b16 %v1831, %v1830
      %v2310 = vpack.c.b16 %v1833, %v1832
      %v2311 = vpack.c.b16 %v1835, %v1834
      %v2312 = vpack.c.b16 %v1837, %v1836
      %v2313 = vpack.c.b16 %v1839, %v1838
      %v2314 = vpack.c.b16 %v1841, %v1840
      %v2315 = vpack.c.b16 %v1843, %v1842
      %v2316 = vpack.c.b16 %v1845, %v1844
      %v2317 = vpack.c.b16 %v1847, %v1846
      %v2318 = vpack.c.b16 %v1849, %v1848
      %v2319 = vpack.c.b16 %v1851, %v1850
      %v2320 = vpack.c.b16 %v1853, %v1852
      %v2321 = vpack.c.b16 %v1855, %v1854
      %v2322 = vpack.c.b16 %v1857, %v1856
      %v2323 = vpack.c.b16 %v1859, %v1858
      %v2324 = vpack.c.b16 %v1861, %v1860
      %v2325 = vpack.c.b16 %v1863, %v1862
      %v2326 = vpack.c.b16 %v1865, %v1864
      %v2327 = vpack.c.b16 %v1867, %v1866
      %v2328 = vpack.c.b16 %v1869, %v1868
      %v2329 = vpack.c.b16 %v1871, %v1870
      %v2330 = vpack.c.b16 %v1873, %v1872
      %v2331 = vpack.c.b16 %v1875, %v1874
      %v2332 = vpack.c.b16 %v1877, %v1876
      %v2333 = vpack.c.b16 %v1879, %v1878
      %v2334 = vpack.c.b16 %v1881, %v1880
      %v2335 = vpack.c.b16 %v1883, %v1882
      %v2336 = vpack.c.b16 %v1885, %v1884
      %v2337 = vpack.c.b16 %v1887, %v1886
      %v2338 = vpack.c.b16 %v1889, %v1888
      %v2339 = vpack.c.b16 %v1891, %v1890
      %v2340 = vpack.c.b16 %v1893, %v1892
      %v2341 = vpack.c.b16 %v1895, %v1894
      %v2342 = vpack.c.b16 %v1897, %v1896
      %v2343 = vpack.c.b16 %v1899, %v1898
      %v2344 = vpack.c.b16 %v1901, %v1900
      %v2345 = vpack.c.b16 %v1903, %v1902
      %v2346 = vpack.c.b16 %v1905, %v1904
      %v2347 = vpack.c.b16 %v1907, %v1906
      %v2348 = vpack.c.b16 %v1909, %v1908
      %v2349 = vpack.c.b16 %v1911, %v1910
      %v2350 = vpack.c.b16 %v1913, %v1912
      %v2351 = vpack.c.b16 %v1915, %v1914
      %v2352 = vpack.c.b16 %v1917, %v1916
      %v2353 = vpack.c.b16 %v1919, %v1918
      %v2354 = vpack.c.b16 %v1921, %v1920
      %v2355 = vpack.c.b16 %v1923, %v1922
      %v2356 = vpack.c.b16 %v1925, %v1924
      %v2357 = vpack.c.b16 %v1927, %v1926
      %v2358 = vpack.c.b16 %v1929, %v1928
      %v2359 = vpack.c.b16 %v1931, %v1930
      %v2360 = vpack.c.b16 %v1933, %v1932
      %v2361 = vpack.c.b16 %v1935, %v1934
      %v2362 = vpack.c.b16 %v1937, %v1936
      %v2363 = vpack.c.b16 %v1939, %v1938
      %v2364 = vpack.c.b16 %v1941, %v1940
      %v2365 = vpack.c.b16 %v1943, %v1942
      %v2366 = vpack.c.b16 %v1945, %v1944
      %v2367 = vpack.c.b16 %v1947, %v1946
      %v2368 = vpack.c.b16 %v1949, %v1948
      %v2369 = vpack.c.b16 %v1951, %v1950
      %v2370 = vpack.c.b16 %v1953, %v1952
      %v2371 = vpack.c.b16 %v1955, %v1954
      %v2372 = vpack.c.b16 %v1957, %v1956
      %v2373 = vpack.c.b16 %v1959, %v1958
      %v2374 = vpack.c.b16 %v1961, %v1960
      %v2375 = vpack.c.b16 %v1963, %v1962
      %v2376 = vpack.c.b16 %v1965, %v1964
      %v2377 = vpack.c.b16 %v1967, %v1966
      %v2378 = vpack.c.b16 %v1969, %v1968
      %v2379 = vpack.c.b16 %v1971, %v1970
      %v2380 = vpack.c.b16 %v1973, %v1972
      %v2381 = vpack.c.b16 %v1975, %v1974
      %v2382 = vpack.c.b16 %v1977, %v1976
      %v2383 = vpack.c.b16 %v1979, %v1978
      %v2384 = vpack.c.b16 %v1981, %v1980
      %v2385 = vpack.c.b16 %v1983, %v1982
      %v2386 = vpack.c.b16 %v1985, %v1984
      %v2387 = vpack.c.b16 %v1987, %v1986
      %v2388 = vpack.c.b16 %v1989, %v1988
      %v2389 = vpack.c.b16 %v1991, %v1990
      %v2390 = vpack.c.b16 %v1993, %v1992
      %v2391 = vpack.c.b16 %v1995, %v1994
      %v2392 = vpack.c.b16 %v1997, %v1996
      %v2393 = vpack.c.b16 %v1999, %v1998
      %v2394 = vpack.c.b16 %v2001, %v2000
      %v2395 = vpack.c.b16 %v2003, %v2002
      %v2396 = vpack.c.b16 %v2005, %v2004
      %v2397 = vpack.c.b16 %v2007, %v2006
      %v2398 = vpack.c.b16 %v2009, %v2008
      %v2399 = vpack.c.b16 %v2011, %v2010
      %v2400 = vpack.c.b16 %v2013, %v2012
      %v2401 = vpack.c.b16 %v2015, %v2014
      %v2402 = vpack.c.b16 %v2017, %v2016
      %v2403 = vpack.c.b16 %v2019, %v2018
      %v2404 = vpack.c.b16 %v2021, %v2020
      %v2405 = vpack.c.b16 %v2023, %v2022
      %v2406 = vpack.c.b16 %v2025, %v2024
      %v2407 = vpack.c.b16 %v2027, %v2026
      %v2408 = vpack.c.b16 %v2029, %v2028
      %v2409 = vpack.c.b16 %v2031, %v2030
      %v2410 = vpack.c.b16 %v2033, %v2032
      %v2411 = vpack.c.b16 %v2035, %v2034
      %v2412 = vpack.c.b16 %v2037, %v2036
      %v2413 = vpack.c.b16 %v2039, %v2038
      %v2414 = vpack.c.b16 %v2041, %v2040
      %v2415 = vpack.c.b16 %v2043, %v2042
      %v2416 = vpack.c.b16 %v2045, %v2044
      %v2417 = vpack.c.b16 %v2047, %v2046
      %v2418 = vpack.c.b16 %v2049, %v2048
      %v2419 = vpack.c.b16 %v2051, %v2050
      %v2420 = vpack.c.b16 %v2053, %v2052
      %v2421 = vpack.c.b16 %v2055, %v2054
      %v2422 = vpack.c.b16 %v2057, %v2056
      %v2423 = vpack.c.b16 %v2059, %v2058
      %v2424 = vpack.c.b16 %v2061, %v2060
      %v2425 = vpack.c.b16 %v2063, %v2062
      %v2426 = vpack.c.b16 %v2065, %v2064
      %v2427 = vpack.c.b16 %v2067, %v2066
      %v2428 = vpack.c.b16 %v2069, %v2068
      %v2429 = vpack.c.b16 %v2071, %v2070
      %v2430 = vpack.c.b16 %v2073, %v2072
      %v2431 = vpack.c.b16 %v2075, %v2074
      %v2432 = vpack.c.b16 %v2077, %v2076
      %v2433 = vpack.c.b16 %v2079, %v2078
      %v2434 = vpack.c.b16 %v2081, %v2080
      %v2435 = vpack.c.b16 %v2083, %v2082
      %v2436 = vpack.c.b16 %v2085, %v2084
      %v2437 = vpack.c.b16 %v2087, %v2086
      %v2438 = vpack.c.b16 %v2089, %v2088
      %v2439 = vpack.c.b16 %v2091, %v2090
      %v2440 = vpack.c.b16 %v2093, %v2092
      %v2441 = vpack.c.b16 %v2095, %v2094
      %v2442 = vpack.c.b16 %v2097, %v2096
      %v2443 = vpack.c.b16 %v2099, %v2098
      %v2444 = vpack.c.b16 %v2101, %v2100
      %v2445 = vpack.c.b16 %v2103, %v2102
      %v2446 = vpack.c.b16 %v2105, %v2104
      %v2447 = vpack.c.b16 %v2107, %v2106
      %v2448 = vpack.c.b16 %v2109, %v2108
      %v2449 = vpack.c.b16 %v2111, %v2110
      %v2450 = vpack.c.b16 %v2113, %v2112
      %v2451 = vpack.c.b16 %v2115, %v2114
      %v2452 = vpack.c.b16 %v2117, %v2116
      %v2453 = vpack.c.b16 %v2119, %v2118
      %v2454 = vpack.c.b16 %v2121, %v2120
      %v2455 = vpack.c.b16 %v2123, %v2122
      %v2456 = vpack.c.b16 %v2125, %v2124
      %v2457 = vpack.c.b16 %v2127, %v2126
      %v2458 = vpack.c.b16 %v2129, %v2128
      %v2459 = vpack.c.b16 %v2131, %v2130
      %v2460 = vpack.c.b16 %v2133, %v2132
      %v2461 = vpack.c.b16 %v2135, %v2134
      %v2462 = vpack.c.b16 %v2137, %v2136
      %v2463 = vpack.c.b16 %v2139, %v2138
      %v2464 = vpack.c.b16 %v2141, %v2140
      %v2465 = vpack.c.b16 %v2143, %v2142
      %v2466 = vpack.c.b16 %v2145, %v2144
      %v2467 = vpack.c.b16 %v2147, %v2146
      %v2468 = vpack.c.b16 %v2149, %v2148
      %v2469 = vpack.c.b16 %v2151, %v2150
      %v2470 = vpack.c.b16 %v2153, %v2152
      %v2471 = vpack.c.b16 %v2155, %v2154
      %v2472 = vpack.c.b16 %v2157, %v2156
      %v2473 = vpack.c.b16 %v2159, %v2158
      %v2474 = vpack.c.b16 %v2161, %v2160
      %v2475 = vpack.c.b16 %v2163, %v2162
      %v2476 = vpack.c.b16 %v2165, %v2164
      %v2477 = vpack.c.b16 %v2167, %v2166
      %v2478 = vpack.c.b16 %v2169, %v2168
      %v2479 = vpack.c.b16 %v2171, %v2170
      %v2480 = vpack.c.b16 %v2173, %v2172
      %v2481 = vpack.c.b16 %v2175, %v2174
      %v2482 = vpack.c.b16 %v2177, %v2176
      %v2483 = vpack.c.b16 %v2179, %v2178
      %v2484 = vpack.c.b16 %v2181, %v2180
      %v2485 = vpack.c.b16 %v2183, %v2182
      %v2486 = vpack.c.b16 %v2185, %v2184
      %v2487 = vpack.c.b16 %v2187, %v2186
      %v2488 = vpack.c.b16 %v2189, %v2188
      %v2489 = vpack.c.b16 %v2191, %v2190
      %v2490 = vpack.c.b16 %v2193, %v2192
      %vm2788 = vcmask 130048
      %v2790 = vsel %vm2788, %v968, 0
      %2792 = vmatprep.subr.bf16.mxu0 0
      %2793 = vmatpush1.bf16.msra.mxu0 %v2194
      %2794 = vmatprep.subr.bf16.mxu0 0
      %2795 = vmatpush1.bf16.msra.mxu0 %v2195
      %2796 = vmatprep.subr.bf16.mxu0 0
      %2797 = vmatpush1.bf16.msra.mxu0 %v2196
      %2798 = vmatprep.subr.bf16.mxu0 0
      %2799 = vmatpush1.bf16.msra.mxu0 %v2197
      %2800 = vmatprep.subr.bf16.mxu0 0
      %2801 = vmatpush1.bf16.msra.mxu0 %v2198
      %2802 = vmatprep.subr.bf16.mxu0 0
      %2803 = vmatpush1.bf16.msra.mxu0 %v2199
      %2804 = vmatprep.subr.bf16.mxu0 0
      %2805 = vmatpush1.bf16.msra.mxu0 %v2200
      %2806 = vmatprep.subr.bf16.mxu0 0
      %2807 = vmatpush1.bf16.msra.mxu0 %v2201
      %2808 = vmatprep.subr.bf16.mxu0 0
      %2809 = vmatpush1.bf16.msra.mxu0 %v2202
      %2810 = vmatprep.subr.bf16.mxu0 0
      %2811 = vmatpush1.bf16.msra.mxu0 %v2203
      %2812 = vmatprep.subr.bf16.mxu0 0
      %2813 = vmatpush1.bf16.msra.mxu0 %v2204
      %2814 = vmatprep.subr.bf16.mxu0 0
      %2815 = vmatpush1.bf16.msra.mxu0 %v2205
      %2816 = vmatprep.subr.bf16.mxu0 0
      %2817 = vmatpush1.bf16.msra.mxu0 %v2206
      %2818 = vmatprep.subr.bf16.mxu0 0
      %2819 = vmatpush1.bf16.msra.mxu0 %v2207
      %2820 = vmatprep.subr.bf16.mxu0 0
      %2821 = vmatpush1.bf16.msra.mxu0 %v2208
      %2822 = vmatprep.subr.bf16.mxu0 0
      %2823 = vmatpush1.bf16.msra.mxu0 %v2209
      %2824 = vmatprep.mubr.bf16.mxu0 %v932
      %2825 = vmatmul.mubr.bf16.gmra.mrb[0].mxu0 %v931
      %v2826 = vpop.f32.mrb[0].mxu0
      %v2827 = vadd.f32 %v815, %v2826
      %v2828 = vpop.f32.mrb[0].mxu0
      %v2829 = vpop.f32.mrb[0].mxu0
      %v2830 = vadd.f32 %v815, %v2829
      %v2831 = vpop.f32.mrb[0].mxu0
      %2832 = vdwg.mxu0
      %2833 = vmatprep.subr.bf16.mxu0 0
      %2834 = vmatpush1.bf16.msra.mxu0 %v2210
      %2835 = vmatprep.subr.bf16.mxu0 0
      %2836 = vmatpush1.bf16.msra.mxu0 %v2211
      %2837 = vmatprep.subr.bf16.mxu0 0
      %2838 = vmatpush1.bf16.msra.mxu0 %v2212
      %2839 = vmatprep.subr.bf16.mxu0 0
      %2840 = vmatpush1.bf16.msra.mxu0 %v2213
      %2841 = vmatprep.subr.bf16.mxu0 0
      %2842 = vmatpush1.bf16.msra.mxu0 %v2214
      %2843 = vmatprep.subr.bf16.mxu0 0
      %2844 = vmatpush1.bf16.msra.mxu0 %v2215
      %2845 = vmatprep.subr.bf16.mxu0 0
      %2846 = vmatpush1.bf16.msra.mxu0 %v2216
      %2847 = vmatprep.subr.bf16.mxu0 0
      %2848 = vmatpush1.bf16.msra.mxu0 %v2217
      %2849 = vmatprep.subr.bf16.mxu0 0
      %2850 = vmatpush1.bf16.msra.mxu0 %v2218
      %2851 = vmatprep.subr.bf16.mxu0 0
      %2852 = vmatpush1.bf16.msra.mxu0 %v2219
      %2853 = vmatprep.subr.bf16.mxu0 0
      %2854 = vmatpush1.bf16.msra.mxu0 %v2220
      %2855 = vmatprep.subr.bf16.mxu0 0
      %2856 = vmatpush1.bf16.msra.mxu0 %v2221
      %2857 = vmatprep.subr.bf16.mxu0 0
      %2858 = vmatpush1.bf16.msra.mxu0 %v2222
      %2859 = vmatprep.subr.bf16.mxu0 0
      %2860 = vmatpush1.bf16.msra.mxu0 %v2223
      %2861 = vmatprep.subr.bf16.mxu0 0
      %2862 = vmatpush1.bf16.msra.mxu0 %v2224
      %2863 = vmatprep.subr.bf16.mxu0 0
      %2864 = vmatpush1.bf16.msra.mxu0 %v2225
      %2865 = vmatprep.mubr.bf16.mxu0 %v934
      %2866 = vmatmul.mubr.bf16.gmra.mrb[0].mxu0 %v933
      %v2867 = vpop.f32.mrb[0].mxu0
      %v2868 = vadd.f32 %v2827, %v2867
      %v2869 = vpop.f32.mrb[0].mxu0
      %v2870 = vpop.f32.mrb[0].mxu0
      %v2871 = vadd.f32 %v2830, %v2870
      %v2872 = vpop.f32.mrb[0].mxu0
      %2873 = vdwg.mxu0
      %2874 = vmatprep.subr.bf16.mxu0 0
      %2875 = vmatpush1.bf16.msra.mxu0 %v2226
      %2876 = vmatprep.subr.bf16.mxu0 0
      %2877 = vmatpush1.bf16.msra.mxu0 %v2227
      %2878 = vmatprep.subr.bf16.mxu0 0
      %2879 = vmatpush1.bf16.msra.mxu0 %v2228
      %2880 = vmatprep.subr.bf16.mxu0 0
      %2881 = vmatpush1.bf16.msra.mxu0 %v2229
      %2882 = vmatprep.subr.bf16.mxu0 0
      %2883 = vmatpush1.bf16.msra.mxu0 %v2230
      %2884 = vmatprep.subr.bf16.mxu0 0
      %2885 = vmatpush1.bf16.msra.mxu0 %v2231
      %2886 = vmatprep.subr.bf16.mxu0 0
      %2887 = vmatpush1.bf16.msra.mxu0 %v2232
      %2888 = vmatprep.subr.bf16.mxu0 0
      %2889 = vmatpush1.bf16.msra.mxu0 %v2233
      %2890 = vmatprep.subr.bf16.mxu0 0
      %2891 = vmatpush1.bf16.msra.mxu0 %v2234
      %2892 = vmatprep.subr.bf16.mxu0 0
      %2893 = vmatpush1.bf16.msra.mxu0 %v2235
      %2894 = vmatprep.subr.bf16.mxu0 0
      %2895 = vmatpush1.bf16.msra.mxu0 %v2236
      %2896 = vmatprep.subr.bf16.mxu0 0
      %2897 = vmatpush1.bf16.msra.mxu0 %v2237
      %2898 = vmatprep.subr.bf16.mxu0 0
      %2899 = vmatpush1.bf16.msra.mxu0 %v2238
      %2900 = vmatprep.subr.bf16.mxu0 0
      %2901 = vmatpush1.bf16.msra.mxu0 %v2239
      %2902 = vmatprep.subr.bf16.mxu0 0
      %2903 = vmatpush1.bf16.msra.mxu0 %v2240
      %2904 = vmatprep.subr.bf16.mxu0 0
      %2905 = vmatpush1.bf16.msra.mxu0 %v2241
      %2906 = vmatprep.mubr.bf16.mxu0 %v936
      %2907 = vmatmul.mubr.bf16.gmra.mrb[0].mxu0 %v935
      %v2908 = vpop.f32.mrb[0].mxu0
      %v2909 = vadd.f32 %v2868, %v2908
      %v2910 = vpop.f32.mrb[0].mxu0
      %v2911 = vpop.f32.mrb[0].mxu0
      %v2912 = vadd.f32 %v2871, %v2911
      %v2913 = vpop.f32.mrb[0].mxu0
      %2914 = vdwg.mxu0
      %2915 = vmatprep.subr.bf16.mxu0 0
      %2916 = vmatpush1.bf16.msra.mxu0 %v2242
      %2917 = vmatprep.subr.bf16.mxu0 0
      %2918 = vmatpush1.bf16.msra.mxu0 %v2243
      %2919 = vmatprep.subr.bf16.mxu0 0
      %2920 = vmatpush1.bf16.msra.mxu0 %v2244
      %2921 = vmatprep.subr.bf16.mxu0 0
      %2922 = vmatpush1.bf16.msra.mxu0 %v2245
      %2923 = vmatprep.subr.bf16.mxu0 0
      %2924 = vmatpush1.bf16.msra.mxu0 %v2246
      %2925 = vmatprep.subr.bf16.mxu0 0
      %2926 = vmatpush1.bf16.msra.mxu0 %v2247
      %2927 = vmatprep.subr.bf16.mxu0 0
      %2928 = vmatpush1.bf16.msra.mxu0 %v2248
      %2929 = vmatprep.subr.bf16.mxu0 0
      %2930 = vmatpush1.bf16.msra.mxu0 %v2249
      %2931 = vmatprep.subr.bf16.mxu0 0
      %2932 = vmatpush1.bf16.msra.mxu0 %v2250
      %2933 = vmatprep.subr.bf16.mxu0 0
      %2934 = vmatpush1.bf16.msra.mxu0 %v2251
      %2935 = vmatprep.subr.bf16.mxu0 0
      %2936 = vmatpush1.bf16.msra.mxu0 %v2252
      %2937 = vmatprep.subr.bf16.mxu0 0
      %2938 = vmatpush1.bf16.msra.mxu0 %v2253
      %2939 = vmatprep.subr.bf16.mxu0 0
      %2940 = vmatpush1.bf16.msra.mxu0 %v2254
      %2941 = vmatprep.subr.bf16.mxu0 0
      %2942 = vmatpush1.bf16.msra.mxu0 %v2255
      %2943 = vmatprep.subr.bf16.mxu0 0
      %2944 = vmatpush1.bf16.msra.mxu0 %v2256
      %2945 = vmatprep.subr.bf16.mxu0 0
      %2946 = vmatpush1.bf16.msra.mxu0 %v2257
      %2947 = vmatprep.mubr.bf16.mxu0 %v938
      %2948 = vmatmul.mubr.bf16.gmra.mrb[0].mxu0 %v937
      %v2949 = vpop.f32.mrb[0].mxu0
      %v2950 = vadd.f32 %v2909, %v2949
      %v2951 = vpop.f32.mrb[0].mxu0
      %v2952 = vpop.f32.mrb[0].mxu0
      %v2953 = vadd.f32 %v2912, %v2952
      %v2954 = vpop.f32.mrb[0].mxu0
      %2955 = vdwg.mxu0
      %2956 = vmatprep.subr.bf16.mxu0 0
      %2957 = vmatpush1.bf16.msra.mxu0 %v2258
      %2958 = vmatprep.subr.bf16.mxu0 0
      %2959 = vmatpush1.bf16.msra.mxu0 %v2259
      %2960 = vmatprep.subr.bf16.mxu0 0
      %2961 = vmatpush1.bf16.msra.mxu0 %v2260
      %2962 = vmatprep.subr.bf16.mxu0 0
      %2963 = vmatpush1.bf16.msra.mxu0 %v2261
      %2964 = vmatprep.subr.bf16.mxu0 0
      %2965 = vmatpush1.bf16.msra.mxu0 %v2262
      %2966 = vmatprep.subr.bf16.mxu0 0
      %2967 = vmatpush1.bf16.msra.mxu0 %v2263
      %2968 = vmatprep.subr.bf16.mxu0 0
      %2969 = vmatpush1.bf16.msra.mxu0 %v2264
      %2970 = vmatprep.subr.bf16.mxu0 0
      %2971 = vmatpush1.bf16.msra.mxu0 %v2265
      %2972 = vmatprep.subr.bf16.mxu0 0
      %2973 = vmatpush1.bf16.msra.mxu0 %v2266
      %2974 = vmatprep.subr.bf16.mxu0 0
      %2975 = vmatpush1.bf16.msra.mxu0 %v2267
      %2976 = vmatprep.subr.bf16.mxu0 0
      %2977 = vmatpush1.bf16.msra.mxu0 %v2268
      %2978 = vmatprep.subr.bf16.mxu0 0
      %2979 = vmatpush1.bf16.msra.mxu0 %v2269
      %2980 = vmatprep.subr.bf16.mxu0 0
      %2981 = vmatpush1.bf16.msra.mxu0 %v2270
      %2982 = vmatprep.subr.bf16.mxu0 0
      %2983 = vmatpush1.bf16.msra.mxu0 %v2271
      %2984 = vmatprep.subr.bf16.mxu0 0
      %2985 = vmatpush1.bf16.msra.mxu0 %v2272
      %2986 = vmatprep.subr.bf16.mxu0 0
      %2987 = vmatpush1.bf16.msra.mxu0 %v2273
      %2988 = vmatprep.mubr.bf16.mxu0 %v940
      %2989 = vmatmul.mubr.bf16.gmra.mrb[0].mxu0 %v939
      %v2990 = vpop.f32.mrb[0].mxu0
      %v2991 = vadd.f32 %v2950, %v2990
      %v2992 = vpop.f32.mrb[0].mxu0
      %v2993 = vpop.f32.mrb[0].mxu0
      %v2994 = vadd.f32 %v2953, %v2993
      %v2995 = vpop.f32.mrb[0].mxu0
      %2996 = vdwg.mxu0
      %2997 = vmatprep.subr.bf16.mxu0 0
      %2998 = vmatpush1.bf16.msra.mxu0 %v2274
      %2999 = vmatprep.subr.bf16.mxu0 0
      %3000 = vmatpush1.bf16.msra.mxu0 %v2275
      %3001 = vmatprep.subr.bf16.mxu0 0
      %3002 = vmatpush1.bf16.msra.mxu0 %v2276
      %3003 = vmatprep.subr.bf16.mxu0 0
      %3004 = vmatpush1.bf16.msra.mxu0 %v2277
      %3005 = vmatprep.subr.bf16.mxu0 0
      %3006 = vmatpush1.bf16.msra.mxu0 %v2278
      %3007 = vmatprep.subr.bf16.mxu0 0
      %3008 = vmatpush1.bf16.msra.mxu0 %v2279
      %3009 = vmatprep.subr.bf16.mxu0 0
      %3010 = vmatpush1.bf16.msra.mxu0 %v2280
      %3011 = vmatprep.subr.bf16.mxu0 0
      %3012 = vmatpush1.bf16.msra.mxu0 %v2281
      %3013 = vmatprep.subr.bf16.mxu0 0
      %3014 = vmatpush1.bf16.msra.mxu0 %v2282
      %3015 = vmatprep.subr.bf16.mxu0 0
      %3016 = vmatpush1.bf16.msra.mxu0 %v2283
      %3017 = vmatprep.subr.bf16.mxu0 0
      %3018 = vmatpush1.bf16.msra.mxu0 %v2284
      %3019 = vmatprep.subr.bf16.mxu0 0
      %3020 = vmatpush1.bf16.msra.mxu0 %v2285
      %3021 = vmatprep.subr.bf16.mxu0 0
      %3022 = vmatpush1.bf16.msra.mxu0 %v2286
      %3023 = vmatprep.subr.bf16.mxu0 0
      %3024 = vmatpush1.bf16.msra.mxu0 %v2287
      %3025 = vmatprep.subr.bf16.mxu0 0
      %3026 = vmatpush1.bf16.msra.mxu0 %v2288
      %3027 = vmatprep.subr.bf16.mxu0 0
      %3028 = vmatpush1.bf16.msra.mxu0 %v2289
      %3029 = vmatprep.mubr.bf16.mxu0 %v942
      %3030 = vmatmul.mubr.bf16.gmra.mrb[0].mxu0 %v941
      %v3031 = vpop.f32.mrb[0].mxu0
      %v3032 = vadd.f32 %v2991, %v3031
      %v3033 = vpop.f32.mrb[0].mxu0
      %v3034 = vpop.f32.mrb[0].mxu0
      %v3035 = vadd.f32 %v2994, %v3034
      %v3036 = vpop.f32.mrb[0].mxu0
      %3037 = vdwg.mxu0
      %3038 = vmatprep.subr.bf16.mxu0 0
      %3039 = vmatpush1.bf16.msra.mxu0 %v2290
      %3040 = vmatprep.subr.bf16.mxu0 0
      %3041 = vmatpush1.bf16.msra.mxu0 %v2291
      %3042 = vmatprep.subr.bf16.mxu0 0
      %3043 = vmatpush1.bf16.msra.mxu0 %v2292
      %3044 = vmatprep.subr.bf16.mxu0 0
      %3045 = vmatpush1.bf16.msra.mxu0 %v2293
      %3046 = vmatprep.subr.bf16.mxu0 0
      %3047 = vmatpush1.bf16.msra.mxu0 %v2294
      %3048 = vmatprep.subr.bf16.mxu0 0
      %3049 = vmatpush1.bf16.msra.mxu0 %v2295
      %3050 = vmatprep.subr.bf16.mxu0 0
      %3051 = vmatpush1.bf16.msra.mxu0 %v2296
      %3052 = vmatprep.subr.bf16.mxu0 0
      %3053 = vmatpush1.bf16.msra.mxu0 %v2297
      %3054 = vmatprep.subr.bf16.mxu0 0
      %3055 = vmatpush1.bf16.msra.mxu0 %v2298
      %3056 = vmatprep.subr.bf16.mxu0 0
      %3057 = vmatpush1.bf16.msra.mxu0 %v2299
      %3058 = vmatprep.subr.bf16.mxu0 0
      %3059 = vmatpush1.bf16.msra.mxu0 %v2300
      %3060 = vmatprep.subr.bf16.mxu0 0
      %3061 = vmatpush1.bf16.msra.mxu0 %v2301
      %3062 = vmatprep.subr.bf16.mxu0 0
      %3063 = vmatpush1.bf16.msra.mxu0 %v2302
      %3064 = vmatprep.subr.bf16.mxu0 0
      %3065 = vmatpush1.bf16.msra.mxu0 %v2303
      %3066 = vmatprep.subr.bf16.mxu0 0
      %3067 = vmatpush1.bf16.msra.mxu0 %v2304
      %3068 = vmatprep.subr.bf16.mxu0 0
      %3069 = vmatpush1.bf16.msra.mxu0 %v2305
      %3070 = vmatprep.mubr.bf16.mxu0 %v944
      %3071 = vmatmul.mubr.bf16.gmra.mrb[0].mxu0 %v943
      %v3072 = vpop.f32.mrb[0].mxu0
      %v3073 = vadd.f32 %v3032, %v3072
      %v3074 = vpop.f32.mrb[0].mxu0
      %v3075 = vpop.f32.mrb[0].mxu0
      %v3076 = vadd.f32 %v3035, %v3075
      %v3077 = vpop.f32.mrb[0].mxu0
      %3078 = vdwg.mxu0
      %3079 = vmatprep.subr.bf16.mxu0 0
      %3080 = vmatpush1.bf16.msra.mxu0 %v2306
      %3081 = vmatprep.subr.bf16.mxu0 0
      %3082 = vmatpush1.bf16.msra.mxu0 %v2307
      %3083 = vmatprep.subr.bf16.mxu0 0
      %3084 = vmatpush1.bf16.msra.mxu0 %v2308
      %3085 = vmatprep.subr.bf16.mxu0 0
      %3086 = vmatpush1.bf16.msra.mxu0 %v2309
      %3087 = vmatprep.subr.bf16.mxu0 0
      %3088 = vmatpush1.bf16.msra.mxu0 %v2310
      %3089 = vmatprep.subr.bf16.mxu0 0
      %3090 = vmatpush1.bf16.msra.mxu0 %v2311
      %3091 = vmatprep.subr.bf16.mxu0 0
      %3092 = vmatpush1.bf16.msra.mxu0 %v2312
      %3093 = vmatprep.subr.bf16.mxu0 0
      %3094 = vmatpush1.bf16.msra.mxu0 %v2313
      %3095 = vmatprep.subr.bf16.mxu0 0
      %3096 = vmatpush1.bf16.msra.mxu0 %v2314
      %3097 = vmatprep.subr.bf16.mxu0 0
      %3098 = vmatpush1.bf16.msra.mxu0 %v2315
      %3099 = vmatprep.subr.bf16.mxu0 0
      %3100 = vmatpush1.bf16.msra.mxu0 %v2316
      %3101 = vmatprep.subr.bf16.mxu0 0
      %3102 = vmatpush1.bf16.msra.mxu0 %v2317
      %3103 = vmatprep.subr.bf16.mxu0 0
      %3104 = vmatpush1.bf16.msra.mxu0 %v2318
      %3105 = vmatprep.subr.bf16.mxu0 0
      %3106 = vmatpush1.bf16.msra.mxu0 %v2319
      %3107 = vmatprep.subr.bf16.mxu0 0
      %3108 = vmatpush1.bf16.msra.mxu0 %v2320
      %3109 = vmatprep.subr.bf16.mxu0 0
      %3110 = vmatpush1.bf16.msra.mxu0 %v2321
      %3111 = vmatprep.mubr.bf16.mxu0 %v946
      %3112 = vmatmul.mubr.bf16.gmra.mrb[0].mxu0 %v945
      %v3113 = vpop.f32.mrb[0].mxu0
      %v3114 = vadd.f32 %v3073, %v3113
      %v3115 = vpop.f32.mrb[0].mxu0
      %v3116 = vpop.f32.mrb[0].mxu0
      %v3117 = vadd.f32 %v3076, %v3116
      %v3118 = vpop.f32.mrb[0].mxu0
      %3119 = vdwg.mxu0
      %3120 = vmatprep.subr.bf16.mxu0 0
      %3121 = vmatpush1.bf16.msra.mxu0 %v2322
      %3122 = vmatprep.subr.bf16.mxu0 0
      %3123 = vmatpush1.bf16.msra.mxu0 %v2323
      %3124 = vmatprep.subr.bf16.mxu0 0
      %3125 = vmatpush1.bf16.msra.mxu0 %v2324
      %3126 = vmatprep.subr.bf16.mxu0 0
      %3127 = vmatpush1.bf16.msra.mxu0 %v2325
      %3128 = vmatprep.subr.bf16.mxu0 0
      %3129 = vmatpush1.bf16.msra.mxu0 %v2326
      %3130 = vmatprep.subr.bf16.mxu0 0
      %3131 = vmatpush1.bf16.msra.mxu0 %v2327
      %3132 = vmatprep.subr.bf16.mxu0 0
      %3133 = vmatpush1.bf16.msra.mxu0 %v2328
      %3134 = vmatprep.subr.bf16.mxu0 0
      %3135 = vmatpush1.bf16.msra.mxu0 %v2329
      %3136 = vmatprep.subr.bf16.mxu0 0
      %3137 = vmatpush1.bf16.msra.mxu0 %v2330
      %3138 = vmatprep.subr.bf16.mxu0 0
      %3139 = vmatpush1.bf16.msra.mxu0 %v2331
      %3140 = vmatprep.subr.bf16.mxu0 0
      %3141 = vmatpush1.bf16.msra.mxu0 %v2332
      %3142 = vmatprep.subr.bf16.mxu0 0
      %3143 = vmatpush1.bf16.msra.mxu0 %v2333
      %3144 = vmatprep.subr.bf16.mxu0 0
      %3145 = vmatpush1.bf16.msra.mxu0 %v2334
      %3146 = vmatprep.subr.bf16.mxu0 0
      %3147 = vmatpush1.bf16.msra.mxu0 %v2335
      %3148 = vmatprep.subr.bf16.mxu0 0
      %3149 = vmatpush1.bf16.msra.mxu0 %v2336
      %3150 = vmatprep.subr.bf16.mxu0 0
      %3151 = vmatpush1.bf16.msra.mxu0 %v2337
      %3152 = vmatprep.mubr.bf16.mxu0 %v948
      %3153 = vmatmul.mubr.bf16.gmra.mrb[0].mxu0 %v947
      %v3154 = vpop.f32.mrb[0].mxu0
      %v3155 = vadd.f32 %v3114, %v3154
      %v3156 = vpop.f32.mrb[0].mxu0
      %v3157 = vpop.f32.mrb[0].mxu0
      %v3158 = vadd.f32 %v3117, %v3157
      %v3159 = vpop.f32.mrb[0].mxu0
      %3160 = vdwg.mxu0
      %3161 = vmatprep.subr.bf16.mxu0 0
      %3162 = vmatpush1.bf16.msra.mxu0 %v2338
      %3163 = vmatprep.subr.bf16.mxu0 0
      %3164 = vmatpush1.bf16.msra.mxu0 %v2339
      %3165 = vmatprep.subr.bf16.mxu0 0
      %3166 = vmatpush1.bf16.msra.mxu0 %v2340
      %3167 = vmatprep.subr.bf16.mxu0 0
      %3168 = vmatpush1.bf16.msra.mxu0 %v2341
      %3169 = vmatprep.subr.bf16.mxu0 0
      %3170 = vmatpush1.bf16.msra.mxu0 %v2342
      %3171 = vmatprep.subr.bf16.mxu0 0
      %3172 = vmatpush1.bf16.msra.mxu0 %v2343
      %3173 = vmatprep.subr.bf16.mxu0 0
      %3174 = vmatpush1.bf16.msra.mxu0 %v2344
      %3175 = vmatprep.subr.bf16.mxu0 0
      %3176 = vmatpush1.bf16.msra.mxu0 %v2345
      %3177 = vmatprep.subr.bf16.mxu0 0
      %3178 = vmatpush1.bf16.msra.mxu0 %v2346
      %3179 = vmatprep.subr.bf16.mxu0 0
      %3180 = vmatpush1.bf16.msra.mxu0 %v2347
      %3181 = vmatprep.subr.bf16.mxu0 0
      %3182 = vmatpush1.bf16.msra.mxu0 %v2348
      %3183 = vmatprep.subr.bf16.mxu0 0
      %3184 = vmatpush1.bf16.msra.mxu0 %v2349
      %3185 = vmatprep.subr.bf16.mxu0 0
      %3186 = vmatpush1.bf16.msra.mxu0 %v2350
      %3187 = vmatprep.subr.bf16.mxu0 0
      %3188 = vmatpush1.bf16.msra.mxu0 %v2351
      %3189 = vmatprep.subr.bf16.mxu0 0
      %3190 = vmatpush1.bf16.msra.mxu0 %v2352
      %3191 = vmatprep.subr.bf16.mxu0 0
      %3192 = vmatpush1.bf16.msra.mxu0 %v2353
      %3193 = vmatprep.mubr.bf16.mxu0 %v950
      %3194 = vmatmul.mubr.bf16.gmra.mrb[0].mxu0 %v949
      %v3195 = vpop.f32.mrb[0].mxu0
      %v3196 = vadd.f32 %v3155, %v3195
      %v3197 = vpop.f32.mrb[0].mxu0
      %v3198 = vpop.f32.mrb[0].mxu0
      %v3199 = vadd.f32 %v3158, %v3198
      %v3200 = vpop.f32.mrb[0].mxu0
      %3201 = vdwg.mxu0
      %3202 = vmatprep.subr.bf16.mxu0 0
      %3203 = vmatpush1.bf16.msra.mxu0 %v2354
      %3204 = vmatprep.subr.bf16.mxu0 0
      %3205 = vmatpush1.bf16.msra.mxu0 %v2355
      %3206 = vmatprep.subr.bf16.mxu0 0
      %3207 = vmatpush1.bf16.msra.mxu0 %v2356
      %3208 = vmatprep.subr.bf16.mxu0 0
      %3209 = vmatpush1.bf16.msra.mxu0 %v2357
      %3210 = vmatprep.subr.bf16.mxu0 0
      %3211 = vmatpush1.bf16.msra.mxu0 %v2358
      %3212 = vmatprep.subr.bf16.mxu0 0
      %3213 = vmatpush1.bf16.msra.mxu0 %v2359
      %3214 = vmatprep.subr.bf16.mxu0 0
      %3215 = vmatpush1.bf16.msra.mxu0 %v2360
      %3216 = vmatprep.subr.bf16.mxu0 0
      %3217 = vmatpush1.bf16.msra.mxu0 %v2361
      %3218 = vmatprep.subr.bf16.mxu0 0
      %3219 = vmatpush1.bf16.msra.mxu0 %v2362
      %3220 = vmatprep.subr.bf16.mxu0 0
      %3221 = vmatpush1.bf16.msra.mxu0 %v2363
      %3222 = vmatprep.subr.bf16.mxu0 0
      %3223 = vmatpush1.bf16.msra.mxu0 %v2364
      %3224 = vmatprep.subr.bf16.mxu0 0
      %3225 = vmatpush1.bf16.msra.mxu0 %v2365
      %3226 = vmatprep.subr.bf16.mxu0 0
      %3227 = vmatpush1.bf16.msra.mxu0 %v2366
      %3228 = vmatprep.subr.bf16.mxu0 0
      %3229 = vmatpush1.bf16.msra.mxu0 %v2367
      %3230 = vmatprep.subr.bf16.mxu0 0
      %3231 = vmatpush1.bf16.msra.mxu0 %v2368
      %3232 = vmatprep.subr.bf16.mxu0 0
      %3233 = vmatpush1.bf16.msra.mxu0 %v2369
      %3234 = vmatprep.mubr.bf16.mxu0 %v952
      %3235 = vmatmul.mubr.bf16.gmra.mrb[0].mxu0 %v951
      %v3236 = vpop.f32.mrb[0].mxu0
      %v3237 = vadd.f32 %v3196, %v3236
      %v3238 = vpop.f32.mrb[0].mxu0
      %v3239 = vpop.f32.mrb[0].mxu0
      %v3240 = vadd.f32 %v3199, %v3239
      %v3241 = vpop.f32.mrb[0].mxu0
      %3242 = vdwg.mxu0
      %3243 = vmatprep.subr.bf16.mxu0 0
      %3244 = vmatpush1.bf16.msra.mxu0 %v2370
      %3245 = vmatprep.subr.bf16.mxu0 0
      %3246 = vmatpush1.bf16.msra.mxu0 %v2371
      %3247 = vmatprep.subr.bf16.mxu0 0
      %3248 = vmatpush1.bf16.msra.mxu0 %v2372
      %3249 = vmatprep.subr.bf16.mxu0 0
      %3250 = vmatpush1.bf16.msra.mxu0 %v2373
      %3251 = vmatprep.subr.bf16.mxu0 0
      %3252 = vmatpush1.bf16.msra.mxu0 %v2374
      %3253 = vmatprep.subr.bf16.mxu0 0
      %3254 = vmatpush1.bf16.msra.mxu0 %v2375
      %3255 = vmatprep.subr.bf16.mxu0 0
      %3256 = vmatpush1.bf16.msra.mxu0 %v2376
      %3257 = vmatprep.subr.bf16.mxu0 0
      %3258 = vmatpush1.bf16.msra.mxu0 %v2377
      %3259 = vmatprep.subr.bf16.mxu0 0
      %3260 = vmatpush1.bf16.msra.mxu0 %v2378
      %3261 = vmatprep.subr.bf16.mxu0 0
      %3262 = vmatpush1.bf16.msra.mxu0 %v2379
      %3263 = vmatprep.subr.bf16.mxu0 0
      %3264 = vmatpush1.bf16.msra.mxu0 %v2380
      %3265 = vmatprep.subr.bf16.mxu0 0
      %3266 = vmatpush1.bf16.msra.mxu0 %v2381
      %3267 = vmatprep.subr.bf16.mxu0 0
      %3268 = vmatpush1.bf16.msra.mxu0 %v2382
      %3269 = vmatprep.subr.bf16.mxu0 0
      %3270 = vmatpush1.bf16.msra.mxu0 %v2383
      %3271 = vmatprep.subr.bf16.mxu0 0
      %3272 = vmatpush1.bf16.msra.mxu0 %v2384
      %3273 = vmatprep.subr.bf16.mxu0 0
      %3274 = vmatpush1.bf16.msra.mxu0 %v2385
      %3275 = vmatprep.mubr.bf16.mxu0 %v954
      %3276 = vmatmul.mubr.bf16.gmra.mrb[0].mxu0 %v953
      %v3277 = vpop.f32.mrb[0].mxu0
      %v3278 = vadd.f32 %v3237, %v3277
      %v3279 = vpop.f32.mrb[0].mxu0
      %v3280 = vpop.f32.mrb[0].mxu0
      %v3281 = vadd.f32 %v3240, %v3280
      %v3282 = vpop.f32.mrb[0].mxu0
      %3283 = vdwg.mxu0
      %3284 = vmatprep.subr.bf16.mxu0 0
      %3285 = vmatpush1.bf16.msra.mxu0 %v2386
      %3286 = vmatprep.subr.bf16.mxu0 0
      %3287 = vmatpush1.bf16.msra.mxu0 %v2387
      %3288 = vmatprep.subr.bf16.mxu0 0
      %3289 = vmatpush1.bf16.msra.mxu0 %v2388
      %3290 = vmatprep.subr.bf16.mxu0 0
      %3291 = vmatpush1.bf16.msra.mxu0 %v2389
      %3292 = vmatprep.subr.bf16.mxu0 0
      %3293 = vmatpush1.bf16.msra.mxu0 %v2390
      %3294 = vmatprep.subr.bf16.mxu0 0
      %3295 = vmatpush1.bf16.msra.mxu0 %v2391
      %3296 = vmatprep.subr.bf16.mxu0 0
      %3297 = vmatpush1.bf16.msra.mxu0 %v2392
      %3298 = vmatprep.subr.bf16.mxu0 0
      %3299 = vmatpush1.bf16.msra.mxu0 %v2393
      %3300 = vmatprep.subr.bf16.mxu0 0
      %3301 = vmatpush1.bf16.msra.mxu0 %v2394
      %3302 = vmatprep.subr.bf16.mxu0 0
      %3303 = vmatpush1.bf16.msra.mxu0 %v2395
      %3304 = vmatprep.subr.bf16.mxu0 0
      %3305 = vmatpush1.bf16.msra.mxu0 %v2396
      %3306 = vmatprep.subr.bf16.mxu0 0
      %3307 = vmatpush1.bf16.msra.mxu0 %v2397
      %3308 = vmatprep.subr.bf16.mxu0 0
      %3309 = vmatpush1.bf16.msra.mxu0 %v2398
      %3310 = vmatprep.subr.bf16.mxu0 0
      %3311 = vmatpush1.bf16.msra.mxu0 %v2399
      %3312 = vmatprep.subr.bf16.mxu0 0
      %3313 = vmatpush1.bf16.msra.mxu0 %v2400
      %3314 = vmatprep.subr.bf16.mxu0 0
      %3315 = vmatpush1.bf16.msra.mxu0 %v2401
      %3316 = vmatprep.mubr.bf16.mxu0 %v956
      %3317 = vmatmul.mubr.bf16.gmra.mrb[0].mxu0 %v955
      %v3318 = vpop.f32.mrb[0].mxu0
      %v3319 = vadd.f32 %v3278, %v3318
      %v3320 = vpop.f32.mrb[0].mxu0
      %v3321 = vpop.f32.mrb[0].mxu0
      %v3322 = vadd.f32 %v3281, %v3321
      %v3323 = vpop.f32.mrb[0].mxu0
      %3324 = vdwg.mxu0
      %3325 = vmatprep.subr.bf16.mxu0 0
      %3326 = vmatpush1.bf16.msra.mxu0 %v2402
      %3327 = vmatprep.subr.bf16.mxu0 0
      %3328 = vmatpush1.bf16.msra.mxu0 %v2403
      %3329 = vmatprep.subr.bf16.mxu0 0
      %3330 = vmatpush1.bf16.msra.mxu0 %v2404
      %3331 = vmatprep.subr.bf16.mxu0 0
      %3332 = vmatpush1.bf16.msra.mxu0 %v2405
      %3333 = vmatprep.subr.bf16.mxu0 0
      %3334 = vmatpush1.bf16.msra.mxu0 %v2406
      %3335 = vmatprep.subr.bf16.mxu0 0
      %3336 = vmatpush1.bf16.msra.mxu0 %v2407
      %3337 = vmatprep.subr.bf16.mxu0 0
      %3338 = vmatpush1.bf16.msra.mxu0 %v2408
      %3339 = vmatprep.subr.bf16.mxu0 0
      %3340 = vmatpush1.bf16.msra.mxu0 %v2409
      %3341 = vmatprep.subr.bf16.mxu0 0
      %3342 = vmatpush1.bf16.msra.mxu0 %v2410
      %3343 = vmatprep.subr.bf16.mxu0 0
      %3344 = vmatpush1.bf16.msra.mxu0 %v2411
      %3345 = vmatprep.subr.bf16.mxu0 0
      %3346 = vmatpush1.bf16.msra.mxu0 %v2412
      %3347 = vmatprep.subr.bf16.mxu0 0
      %3348 = vmatpush1.bf16.msra.mxu0 %v2413
      %3349 = vmatprep.subr.bf16.mxu0 0
      %3350 = vmatpush1.bf16.msra.mxu0 %v2414
      %3351 = vmatprep.subr.bf16.mxu0 0
      %3352 = vmatpush1.bf16.msra.mxu0 %v2415
      %3353 = vmatprep.subr.bf16.mxu0 0
      %3354 = vmatpush1.bf16.msra.mxu0 %v2416
      %3355 = vmatprep.subr.bf16.mxu0 0
      %3356 = vmatpush1.bf16.msra.mxu0 %v2417
      %3357 = vmatprep.mubr.bf16.mxu0 %v958
      %3358 = vmatmul.mubr.bf16.gmra.mrb[0].mxu0 %v957
      %v3359 = vpop.f32.mrb[0].mxu0
      %v3360 = vadd.f32 %v3319, %v3359
      %v3361 = vpop.f32.mrb[0].mxu0
      %v3362 = vpop.f32.mrb[0].mxu0
      %v3363 = vadd.f32 %v3322, %v3362
      %v3364 = vpop.f32.mrb[0].mxu0
      %3365 = vdwg.mxu0
      %3366 = vmatprep.subr.bf16.mxu0 0
      %3367 = vmatpush1.bf16.msra.mxu0 %v2418
      %3368 = vmatprep.subr.bf16.mxu0 0
      %3369 = vmatpush1.bf16.msra.mxu0 %v2419
      %3370 = vmatprep.subr.bf16.mxu0 0
      %3371 = vmatpush1.bf16.msra.mxu0 %v2420
      %3372 = vmatprep.subr.bf16.mxu0 0
      %3373 = vmatpush1.bf16.msra.mxu0 %v2421
      %3374 = vmatprep.subr.bf16.mxu0 0
      %3375 = vmatpush1.bf16.msra.mxu0 %v2422
      %3376 = vmatprep.subr.bf16.mxu0 0
      %3377 = vmatpush1.bf16.msra.mxu0 %v2423
      %3378 = vmatprep.subr.bf16.mxu0 0
      %3379 = vmatpush1.bf16.msra.mxu0 %v2424
      %3380 = vmatprep.subr.bf16.mxu0 0
      %3381 = vmatpush1.bf16.msra.mxu0 %v2425
      %3382 = vmatprep.subr.bf16.mxu0 0
      %3383 = vmatpush1.bf16.msra.mxu0 %v2426
      %3384 = vmatprep.subr.bf16.mxu0 0
      %3385 = vmatpush1.bf16.msra.mxu0 %v2427
      %3386 = vmatprep.subr.bf16.mxu0 0
      %3387 = vmatpush1.bf16.msra.mxu0 %v2428
      %3388 = vmatprep.subr.bf16.mxu0 0
      %3389 = vmatpush1.bf16.msra.mxu0 %v2429
      %3390 = vmatprep.subr.bf16.mxu0 0
      %3391 = vmatpush1.bf16.msra.mxu0 %v2430
      %3392 = vmatprep.subr.bf16.mxu0 0
      %3393 = vmatpush1.bf16.msra.mxu0 %v2431
      %3394 = vmatprep.subr.bf16.mxu0 0
      %3395 = vmatpush1.bf16.msra.mxu0 %v2432
      %3396 = vmatprep.subr.bf16.mxu0 0
      %3397 = vmatpush1.bf16.msra.mxu0 %v2433
      %3398 = vmatprep.mubr.bf16.mxu0 %v960
      %3399 = vmatmul.mubr.bf16.gmra.mrb[0].mxu0 %v959
      %v3400 = vpop.f32.mrb[0].mxu0
      %v3401 = vadd.f32 %v3360, %v3400
      %v3402 = vpop.f32.mrb[0].mxu0
      %v3403 = vpop.f32.mrb[0].mxu0
      %v3404 = vadd.f32 %v3363, %v3403
      %v3405 = vpop.f32.mrb[0].mxu0
      %3406 = vdwg.mxu0
      %3407 = vmatprep.subr.bf16.mxu0 0
      %3408 = vmatpush1.bf16.msra.mxu0 %v2434
      %3409 = vmatprep.subr.bf16.mxu0 0
      %3410 = vmatpush1.bf16.msra.mxu0 %v2435
      %3411 = vmatprep.subr.bf16.mxu0 0
      %3412 = vmatpush1.bf16.msra.mxu0 %v2436
      %3413 = vmatprep.subr.bf16.mxu0 0
      %3414 = vmatpush1.bf16.msra.mxu0 %v2437
      %3415 = vmatprep.subr.bf16.mxu0 0
      %3416 = vmatpush1.bf16.msra.mxu0 %v2438
      %3417 = vmatprep.subr.bf16.mxu0 0
      %3418 = vmatpush1.bf16.msra.mxu0 %v2439
      %3419 = vmatprep.subr.bf16.mxu0 0
      %3420 = vmatpush1.bf16.msra.mxu0 %v2440
      %3421 = vmatprep.subr.bf16.mxu0 0
      %3422 = vmatpush1.bf16.msra.mxu0 %v2441
      %3423 = vmatprep.subr.bf16.mxu0 0
      %3424 = vmatpush1.bf16.msra.mxu0 %v2442
      %3425 = vmatprep.subr.bf16.mxu0 0
      %3426 = vmatpush1.bf16.msra.mxu0 %v2443
      %3427 = vmatprep.subr.bf16.mxu0 0
      %3428 = vmatpush1.bf16.msra.mxu0 %v2444
      %3429 = vmatprep.subr.bf16.mxu0 0
      %3430 = vmatpush1.bf16.msra.mxu0 %v2445
      %3431 = vmatprep.subr.bf16.mxu0 0
      %3432 = vmatpush1.bf16.msra.mxu0 %v2446
      %3433 = vmatprep.subr.bf16.mxu0 0
      %3434 = vmatpush1.bf16.msra.mxu0 %v2447
      %3435 = vmatprep.subr.bf16.mxu0 0
      %3436 = vmatpush1.bf16.msra.mxu0 %v2448
      %3437 = vmatprep.subr.bf16.mxu0 0
      %3438 = vmatpush1.bf16.msra.mxu0 %v2449
      %3439 = vmatprep.mubr.bf16.mxu0 %v962
      %3440 = vmatmul.mubr.bf16.gmra.mrb[0].mxu0 %v961
      %v3441 = vpop.f32.mrb[0].mxu0
      %v3442 = vadd.f32 %v3401, %v3441
      %v3443 = vpop.f32.mrb[0].mxu0
      %v3444 = vpop.f32.mrb[0].mxu0
      %v3445 = vadd.f32 %v3404, %v3444
      %v3446 = vpop.f32.mrb[0].mxu0
      %3447 = vdwg.mxu0
      %3448 = vmatprep.subr.bf16.mxu0 0
      %3449 = vmatpush1.bf16.msra.mxu0 %v2450
      %3450 = vmatprep.subr.bf16.mxu0 0
      %3451 = vmatpush1.bf16.msra.mxu0 %v2451
      %3452 = vmatprep.subr.bf16.mxu0 0
      %3453 = vmatpush1.bf16.msra.mxu0 %v2452
      %3454 = vmatprep.subr.bf16.mxu0 0
      %3455 = vmatpush1.bf16.msra.mxu0 %v2453
      %3456 = vmatprep.subr.bf16.mxu0 0
      %3457 = vmatpush1.bf16.msra.mxu0 %v2454
      %3458 = vmatprep.subr.bf16.mxu0 0
      %3459 = vmatpush1.bf16.msra.mxu0 %v2455
      %3460 = vmatprep.subr.bf16.mxu0 0
      %3461 = vmatpush1.bf16.msra.mxu0 %v2456
      %3462 = vmatprep.subr.bf16.mxu0 0
      %3463 = vmatpush1.bf16.msra.mxu0 %v2457
      %3464 = vmatprep.subr.bf16.mxu0 0
      %3465 = vmatpush1.bf16.msra.mxu0 %v2458
      %3466 = vmatprep.subr.bf16.mxu0 0
      %3467 = vmatpush1.bf16.msra.mxu0 %v2459
      %3468 = vmatprep.subr.bf16.mxu0 0
      %3469 = vmatpush1.bf16.msra.mxu0 %v2460
      %3470 = vmatprep.subr.bf16.mxu0 0
      %3471 = vmatpush1.bf16.msra.mxu0 %v2461
      %3472 = vmatprep.subr.bf16.mxu0 0
      %3473 = vmatpush1.bf16.msra.mxu0 %v2462
      %3474 = vmatprep.subr.bf16.mxu0 0
      %3475 = vmatpush1.bf16.msra.mxu0 %v2463
      %3476 = vmatprep.subr.bf16.mxu0 0
      %3477 = vmatpush1.bf16.msra.mxu0 %v2464
      %3478 = vmatprep.subr.bf16.mxu0 0
      %3479 = vmatpush1.bf16.msra.mxu0 %v2465
      %3480 = vmatprep.mubr.bf16.mxu0 %v964
      %3481 = vmatmul.mubr.bf16.gmra.mrb[0].mxu0 %v963
      %v3482 = vpop.f32.mrb[0].mxu0
      %v3483 = vadd.f32 %v3442, %v3482
      %v3484 = vpop.f32.mrb[0].mxu0
      %v3485 = vpop.f32.mrb[0].mxu0
      %v3486 = vadd.f32 %v3445, %v3485
      %v3487 = vpop.f32.mrb[0].mxu0
      %3488 = vdwg.mxu0
      %3489 = vmatprep.subr.bf16.mxu0 0
      %3490 = vmatpush1.bf16.msra.mxu0 %v2466
      %3491 = vmatprep.subr.bf16.mxu0 0
      %3492 = vmatpush1.bf16.msra.mxu0 %v2467
      %3493 = vmatprep.subr.bf16.mxu0 0
      %3494 = vmatpush1.bf16.msra.mxu0 %v2468
      %3495 = vmatprep.subr.bf16.mxu0 0
      %3496 = vmatpush1.bf16.msra.mxu0 %v2469
      %3497 = vmatprep.subr.bf16.mxu0 0
      %3498 = vmatpush1.bf16.msra.mxu0 %v2470
      %3499 = vmatprep.subr.bf16.mxu0 0
      %3500 = vmatpush1.bf16.msra.mxu0 %v2471
      %3501 = vmatprep.subr.bf16.mxu0 0
      %3502 = vmatpush1.bf16.msra.mxu0 %v2472
      %3503 = vmatprep.subr.bf16.mxu0 0
      %3504 = vmatpush1.bf16.msra.mxu0 %v2473
      %3505 = vmatprep.subr.bf16.mxu0 0
      %3506 = vmatpush1.bf16.msra.mxu0 %v2474
      %3507 = vmatprep.subr.bf16.mxu0 0
      %3508 = vmatpush1.bf16.msra.mxu0 %v2475
      %3509 = vmatprep.subr.bf16.mxu0 0
      %3510 = vmatpush1.bf16.msra.mxu0 %v2476
      %3511 = vmatprep.subr.bf16.mxu0 0
      %3512 = vmatpush1.bf16.msra.mxu0 %v2477
      %3513 = vmatprep.subr.bf16.mxu0 0
      %3514 = vmatpush1.bf16.msra.mxu0 %v2478
      %3515 = vmatprep.subr.bf16.mxu0 0
      %3516 = vmatpush1.bf16.msra.mxu0 %v2479
      %3517 = vmatprep.subr.bf16.mxu0 0
      %3518 = vmatpush1.bf16.msra.mxu0 %v2480
      %3519 = vmatprep.subr.bf16.mxu0 0
      %3520 = vmatpush1.bf16.msra.mxu0 %v2481
      %3521 = vmatprep.mubr.bf16.mxu0 %v966
      %3522 = vmatmul.mubr.bf16.gmra.mrb[0].mxu0 %v965
      %v3523 = vpop.f32.mrb[0].mxu0
      %v3524 = vadd.f32 %v3483, %v3523
      %v3525 = vpop.f32.mrb[0].mxu0
      %v3526 = vpop.f32.mrb[0].mxu0
      %v3527 = vadd.f32 %v3486, %v3526
      %v3528 = vpop.f32.mrb[0].mxu0
      %3529 = vdwg.mxu0
      %3530 = vmatprep.subr.bf16.mxu0 0
      %3531 = vmatpush1.bf16.msra.mxu0 %v2482
      %3532 = vmatprep.subr.bf16.mxu0 0
      %3533 = vmatpush1.bf16.msra.mxu0 %v2483
      %3534 = vmatprep.subr.bf16.mxu0 0
      %3535 = vmatpush1.bf16.msra.mxu0 %v2484
      %3536 = vmatprep.subr.bf16.mxu0 0
      %3537 = vmatpush1.bf16.msra.mxu0 %v2485
      %3538 = vmatprep.subr.bf16.mxu0 0
      %3539 = vmatpush1.bf16.msra.mxu0 %v2486
      %3540 = vmatprep.subr.bf16.mxu0 0
      %3541 = vmatpush1.bf16.msra.mxu0 %v2487
      %3542 = vmatprep.subr.bf16.mxu0 0
      %3543 = vmatpush1.bf16.msra.mxu0 %v2488
      %3544 = vmatprep.subr.bf16.mxu0 0
      %3545 = vmatpush1.bf16.msra.mxu0 %v2489
      %3546 = vmatprep.subr.bf16.mxu0 0
      %3547 = vmatpush1.bf16.msra.mxu0 %v2490
      %3548 = vmatprep.subr.bf16.mxu0 0
      %3549 = vmatpush1.bf16.msra.mxu0 0
      %3550 = vmatprep.subr.bf16.mxu0 0
      %3551 = vmatpush1.bf16.msra.mxu0 0
      %3552 = vmatprep.subr.bf16.mxu0 0
      %3553 = vmatpush1.bf16.msra.mxu0 0
      %3554 = vmatprep.subr.bf16.mxu0 0
      %3555 = vmatpush1.bf16.msra.mxu0 0
      %3556 = vmatprep.subr.bf16.mxu0 0
      %3557 = vmatpush1.bf16.msra.mxu0 0
      %3558 = vmatprep.subr.bf16.mxu0 0
      %3559 = vmatpush1.bf16.msra.mxu0 0
      %3560 = vmatprep.subr.bf16.mxu0 0
      %3561 = vmatpush1.bf16.msra.mxu0 0
      %3562 = vmatprep.mubr.bf16.mxu0 %v2790
      %3563 = vmatmul.mubr.bf16.gmra.mrb[0].mxu0 %v967
      %v3564 = vpop.f32.mrb[0].mxu0
      %v3565 = vadd.f32 %v3524, %v3564
      %v3566 = vpop.f32.mrb[0].mxu0
      %v3567 = vpop.f32.mrb[0].mxu0
      %v3568 = vadd.f32 %v3527, %v3567
      %v3569 = vpop.f32.mrb[0].mxu0
      %3570 = vdwg.mxu0
      %v3571 = vmax.f32 %v3565, 0.0
      %v3572 = vmax.f32 %v3568, 0.0
      %vm3573 = vcmask 261120
      %3574 = vst.msk [vmem:[%s175] sm:$0xff] %vm3573, %v3571
      %3575 = vst.msk [vmem:[%s175 + $0x8] sm:$0xff] %vm3573, %v3572
      %s3576 = smul.u32 2, %s14
      %p3577 = scmp.lt.s32.totalorder %s3576, 3
      %s3578 = scalar_select %p3577, %s3576, 3
      %s3579 = smul.addr %s3578, 8
      %s3580 = scalar_lea.vmem %s3, %s3579
      // Predicated region
      $region33: #{octave_3d_cnn_forward.7} parent=31 // pred_check
        %p3581 = pneg %p100
      $region34: #{octave_3d_cnn_forward.7} parent=31 // pred_check_branch
        %3583 = sbr.rel (%p3581) target = $region36
      $region35: #{octave_3d_cnn_forward.7} parent=31 // pred_region
        %s3584 = smul.u32 2, %s14
      $region36: #{octave_3d_cnn_forward.7} parent=31 // pred_fallthru
        _
    $region32: #{octave_3d_cnn_forward.7} parent=5 // pred_fallthru
      _
    %p3585 = scmp.le.s32.totalorder 2, %s9
    // Predicated region
    $region37: #{octave_3d_cnn_forward.7} parent=5 // pred_check
      %p3586 = pneg %p3585
    $region38: #{octave_3d_cnn_forward.7} parent=5 // pred_check_branch
      %3588 = sbr.rel (%p3586) target = $region40
    $region39: #{octave_3d_cnn_forward.7} parent=5 // pred_region
      %s3589 = ssub.s32 %s9, 2
      // Predicated region
      $region41: #{octave_3d_cnn_forward.7} parent=39 // pred_check
        %p3590 = pneg %p106
      $region42: #{octave_3d_cnn_forward.7} parent=39 // pred_check_branch
        %3592 = sbr.rel (%p3590) target = $region44
      $region43: #{octave_3d_cnn_forward.7} parent=39 // pred_region
        %s3593 = smul.u32 2, %s15
        %p3594 = scmp.lt.s32.totalorder %s3593, 3
        %s3595 = scalar_select %p3594, %s3593, 3
        %s3596 = smul.addr %s3595, 8
        %s3597 = scalar_lea.vmem %s3, %s3596
      $region44: #{octave_3d_cnn_forward.7} parent=39 // pred_fallthru
        _
    $region40: #{octave_3d_cnn_forward.7} parent=5 // pred_fallthru
      _
  $region6: #{octave_3d_cnn_forward.7} parent=0 // loop_footer
    %s13 = sadd.s32 1, %s9
  $region7: #{octave_3d_cnn_forward.7} parent=0 // loop_footer_branch
    %8 = sbr.rel target = $region3
  $region8: #{octave_3d_cnn_forward.7} parent=0 // loop_exit
    _

</llo_original>
